<compile_context>
chip_gen: v6e
topology: v6e:2x2x1
jax: 0.10.0
libtpu: 0.0.40
codegen_flags: <defaults>
</compile_context>

<pallas_src>
import functools

import jax
import jax.numpy as jnp
from jax.experimental import pallas as pl
from jax.experimental.pallas import tpu as pltpu


def _round_up(x, m):
    return ((x + m - 1) // m) * m


# ----------------------------------------------------------------------------
# Fused Pallas kernel: AE + GBP-GNN + softmax + Student-t soft assignment
# ----------------------------------------------------------------------------
def _rwsl_fused_kernel(
    x_ref, w0_ref, wsmall_ref, wdec_last_ref, bias_ref, ct_ref,
    xbar_ref, slab_ref,
    *, d0, n_enc, n_dec, n_z, n_clusters, slab_pad,
    enc_w_loc, dec_w_loc, gnn_w_loc, b0_off, enc_b_loc, dec_b_loc,
    sigma, v, mxu_dtype,
):
    K = n_clusters

    def wsmall(loc):                       # static slice out of the packed bf16 weight slab
        off, din, dout = loc
        return wsmall_ref[off:off + din, :dout]

    def bias(loc):                         # static slice out of the packed f32 bias slab
        off, dout = loc
        return bias_ref[:, off:off + dout]

    def mm(a_f32, w_bf16):                 # bf16 MXU feed, f32 accumulation
        return jnp.dot(a_f32.astype(mxu_dtype), w_bf16,
                       preferred_element_type=jnp.float32)

    # --- fused first matmul: x @ [enc_w0 | gnn_w0]  (single MXU pass, N = 2*d0) ---
    x = x_ref[...]                                        # (tm, n_input) bf16
    a0 = jnp.dot(x, w0_ref[...], preferred_element_type=jnp.float32)
    a0 = jnp.maximum(a0 + bias_ref[:, b0_off:b0_off + 2 * d0], 0.0)
    h = a0[:, :d0]                                        # enc_tran[0]  (f32)
    g = a0[:, d0:]                                        # GNN layer-0 output (f32)

    # --- interleaved encoder ReLU layers and middle GNN layers (sigma mixing) ---
    # TODO(synk): training-mode dropout between GNN layers omitted (eval => identity).
    # TODO(synk): BatchNorm1d path of GBP_GNNLayer not implemented (config batchnorm=False).
    # TODO(synk): on v6e/v7x the post-ReLU activations could stay bf16; kept f32 for v5e parity.
    for i in range(1, n_enc):                             # middle GNN layers use enc_tran[i-1]
        g = jnp.maximum(mm((1.0 - sigma) * g + sigma * h, wsmall(gnn_w_loc[i - 1])), 0.0)
        if i <= n_enc - 2:
            h = jnp.maximum(mm(h, wsmall(enc_w_loc[i - 1])) + bias(enc_b_loc[i - 1]), 0.0)

    # latent z (linear encoder head)
    z = mm(h, wsmall(enc_w_loc[n_enc - 2])) + bias(enc_b_loc[n_enc - 2])   # (tm, n_z)

    # --- final GNN layer (no activation) + row softmax -> predict ---
    logits = mm((1.0 - sigma) * g + sigma * z, wsmall(gnn_w_loc[n_enc - 1]))   # (tm, K)
    m = jnp.max(logits, axis=-1, keepdims=True)
    e = jnp.exp(logits - m)
    predict = e / jnp.sum(e, axis=-1, keepdims=True)      # exact divide (KL-target safe)

    # --- decoder: ReLU layers, linear reconstruction x_bar ---
    hdec = z
    for i in range(n_dec - 1):
        hdec = jnp.maximum(mm(hdec, wsmall(dec_w_loc[i])) + bias(dec_b_loc[i]), 0.0)
    x_bar = mm(hdec, wdec_last_ref[...]) + bias(dec_b_loc[n_dec - 1])
    xbar_ref[...] = x_bar.astype(xbar_ref.dtype)

    # --- Student-t soft assignment q (MXU distance form, f32) ---
    ct = ct_ref[...]                                      # (n_z, K) f32, pre-transposed
    zc = jnp.dot(z, ct, preferred_element_type=jnp.float32)       # (tm, K)
    z2 = jnp.sum(z * z, axis=-1, keepdims=True)                   # (tm, 1)
    c2 = jnp.sum(ct * ct, axis=0, keepdims=True)                  # (1, K)
    d2 = jnp.maximum(z2 + c2 - 2.0 * zc, 0.0)
    q = 1.0 / (1.0 + d2 / v)
    exponent = (v + 1.0) / 2.0
    if exponent != 1.0:                                   # torch pow(1.0) is identity
        q = q ** exponent
    q = q / jnp.sum(q, axis=-1, keepdims=True)            # exact divide

    # --- packed lane-dense output slab: [ q | predict | z | zero pad ]  (tm, 128·k) ---
    slab_ref[:, 0:K] = q.astype(slab_ref.dtype)
    slab_ref[:, K:2 * K] = predict.astype(slab_ref.dtype)
    slab_ref[:, 2 * K:2 * K + n_z] = z.astype(slab_ref.dtype)
    if slab_pad > 0:
        slab_ref[:, 2 * K + n_z:] = jnp.zeros((slab_ref.shape[0], slab_pad), slab_ref.dtype)


# ----------------------------------------------------------------------------
# Wrapper
# ----------------------------------------------------------------------------
def _pick_row_tile(n_rows, max_tile=512):
    """Largest power-of-two tile <= max_tile keeping >=2 grid steps when possible; floor 16."""
    if n_rows >= 2 * max_tile:
        return max_tile
    half = pl.cdiv(n_rows, 2)
    tile = 16
    while tile * 2 <= half:
        tile *= 2
    return min(tile, max_tile)


def rwsl_forward(x, params, *, sigma, v, max_tile=512,
                 mxu_dtype=jnp.bfloat16, xbar_dtype=jnp.float32):
    enc_w, enc_b = params["enc_w"], params["enc_b"]
    dec_w, dec_b = params["dec_w"], params["dec_b"]
    gnn_w = params["gnn_w"]
    clusters = params["cluster"]

    n_enc, n_dec, n_gnn = len(enc_w), len(dec_w), len(gnn_w)
    assert n_gnn == n_enc + 1 and n_enc >= 2 and n_dec >= 1
    n, n_input = x.shape
    n_z = enc_w[-1].shape[1]
    K = clusters.shape[0]
    d0 = enc_w[0].shape[1]
    assert gnn_w[0].shape == (n_input, d0)

    # --- row tile & grid (even step count so both v7x TensorCores get work) ---
    tm = _pick_row_tile(n, max_tile)
    steps = pl.cdiv(n, tm)
    if steps > 1 and steps % 2 == 1:
        steps += 1
    n_pad = steps * tm
    xp = x.astype(mxu_dtype)                                   # bf16 x: halves HBM read + VMEM
    if n_pad != n:
        xp = jnp.pad(xp, ((0, n_pad - n), (0, 0)))

    # --- fused first-layer weight: [enc_w[0] | gnn_w[0]] -> one N = 2*d0 MXU pass ---
    w0_cat = jnp.concatenate([enc_w[0], gnn_w[0]], axis=1).astype(mxu_dtype)

    # --- pack remaining small weights into one bf16 slab (fewer DMAs / VMEM allocations) ---
    small = list(enc_w[1:]) + list(dec_w[:-1]) + list(gnn_w[1:])
    row_offs, row = [], 0
    for w in small:
        row_offs.append(row)
        row += _round_up(w.shape[0], 16)                       # bf16-friendly row alignment
    wpad = _round_up(max(w.shape[1] for w in small), 128)
    wsmall = jnp.zeros((_round_up(row, 16), wpad), mxu_dtype)
    for off, w in zip(row_offs, small):
        wsmall = wsmall.at[off:off + w.shape[0], :w.shape[1]].set(w.astype(mxu_dtype))
    locs = [(off, w.shape[0], w.shape[1]) for off, w in zip(row_offs, small)]
    enc_w_loc = tuple(locs[:n_enc - 1])
    dec_w_loc = tuple(locs[n_enc - 1:n_enc - 1 + n_dec - 1])
    gnn_w_loc = tuple(locs[n_enc - 1 + n_dec - 1:])

    wdec_last = dec_w[-1].astype(mxu_dtype)                    # (d0, n_input), stays separate

    # --- pack biases (f32) into one lane-aligned slab; slot widths rounded to 128 ---
    b0_cat = jnp.concatenate([enc_b[0], jnp.zeros((d0,), enc_b[0].dtype)])   # gnn layer 0: no bias
    bias_list = [b0_cat] + list(enc_b[1:]) + list(dec_b)
    b_offs, col = [], 0
    for b in bias_list:
        b_offs.append(col)
        col += _round_up(b.shape[0], 128)
    bias_packed = jnp.zeros((1, col), jnp.float32)
    for off, b in zip(b_offs, bias_list):
        bias_packed = bias_packed.at[0, off:off + b.shape[0]].set(b.astype(jnp.float32))
    b0_off = b_offs[0]
    enc_b_loc = tuple((b_offs[1 + i], enc_b[1 + i].shape[0]) for i in range(n_enc - 1))
    dec_b_loc = tuple((b_offs[n_enc + i], dec_b[i].shape[0]) for i in range(n_dec))

    clusters_t = clusters.T.astype(jnp.float32)                # (n_z, K): no in-kernel transpose

    # --- packed lane-dense output slab geometry ---
    slab_w = _round_up(2 * K + n_z, 128)
    slab_pad = slab_w - (2 * K + n_z)

    out_shape = (
        jax.ShapeDtypeStruct((n_pad, n_input), xbar_dtype),    # x_bar (set xbar_dtype=bf16 to halve writeback)
        jax.ShapeDtypeStruct((n_pad, slab_w), jnp.float32),    # [q | predict | z | 0]
    )

    def row_spec(width):
        return pl.BlockSpec((tm, width), lambda i: (i, 0))

    def const_specs(shapes, single_buffer):
        if single_buffer:
            # constant index_map => never re-fetched; second buffer is pure VMEM waste
            return [pl.BlockSpec(s, lambda i: (0, 0), pipeline_mode=pl.Buffered(1))
                    for s in shapes]
        return [pl.BlockSpec(s, lambda i: (0, 0)) for s in shapes]

    # --- explicit VMEM budget (keeps larger tiles legal; capped at v7x's 64 MiB physical) ---
    def nbytes(a):
        return int(a.size) * a.dtype.itemsize
    const_bytes = sum(nbytes(a) for a in (w0_cat, wsmall, wdec_last, bias_packed, clusters_t))
    tile_io = (tm * n_input * xp.dtype.itemsize
               + tm * n_input * jnp.dtype(xbar_dtype).itemsize
               + tm * slab_w * 4)
    act_bytes = tm * (2 * d0 + sum(w.shape[1] for w in small) + n_input) * 4
    vmem_budget = 2 * const_bytes + 2 * tile_io + 2 * act_bytes + (4 << 20)
    vmem_limit = int(min(max(vmem_budget, 32 << 20), 64 << 20))

    # --- advisory cost estimate for the XLA scheduler ---
    mm_flops = (n_input * 2 * d0
                + sum(din * dout for (_, din, dout) in locs)
                + wdec_last.shape[0] * wdec_last.shape[1]
                + n_z * K)
    cost = pl.CostEstimate(
        flops=2 * n_pad * mm_flops,
        transcendentals=n_pad * 4 * K,
        bytes_accessed=nbytes(xp) + const_bytes
        + n_pad * n_input * jnp.dtype(xbar_dtype).itemsize + n_pad * slab_w * 4,
    )

    kernel = functools.partial(
        _rwsl_fused_kernel,
        d0=d0, n_enc=n_enc, n_dec=n_dec, n_z=n_z, n_clusters=K, slab_pad=slab_pad,
        enc_w_loc=enc_w_loc, dec_w_loc=dec_w_loc, gnn_w_loc=gnn_w_loc,
        b0_off=b0_off, enc_b_loc=enc_b_loc, dec_b_loc=dec_b_loc,
        sigma=float(sigma), v=float(v), mxu_dtype=mxu_dtype,
    )

    const_shapes = [w0_cat.shape, wsmall.shape, wdec_last.shape,
                    bias_packed.shape, clusters_t.shape]

    def build_call(single_buffer_consts):
        return pl.pallas_call(
            kernel,
            out_shape=out_shape,
            grid=(steps,),
            in_specs=[row_spec(n_input)] + const_specs(const_shapes, single_buffer_consts),
            out_specs=(row_spec(n_input), row_spec(slab_w)),
            compiler_params=pltpu.CompilerParams(
                dimension_semantics=("parallel",),
                vmem_limit_bytes=vmem_limit),
            cost_estimate=cost,
        )

    args = (xp, w0_cat, wsmall, wdec_last, bias_packed, clusters_t)
    try:
        x_bar, slab = build_call(True)(*args)
    except Exception:
        # pl.Buffered(1) single-buffering not supported on this JAX/libtpu -> default specs
        x_bar, slab = build_call(False)(*args)

    q = slab[:n, 0:K]
    predict = slab[:n, K:2 * K]
    z = slab[:n, 2 * K:2 * K + n_z]
    x_bar = x_bar[:n].astype(jnp.float32)
    return x_bar, q, predict, z


# ----------------------------------------------------------------------------
# Model setup (plain JAX)
# ----------------------------------------------------------------------------
def set_dims_rwsl(config):
    arch = [int(val) for val in config["arch"].split("-")]
    enc_dims = [(config["n_input"], arch[0])]
    enc_dims += [(arch[i], arch[i + 1]) for i in range(len(arch) - 1)]
    dec_dims = [(right, left) for left, right in reversed(enc_dims)]
    return enc_dims, dec_dims, arch[-1]


def init_params(key, enc_dims, dec_dims, n_z, n_clusters):
    def glorot(k, shape):
        fan_in, fan_out = shape
        std = jnp.sqrt(2.0 / (fan_in + fan_out))
        return (std * jax.random.normal(k, shape, jnp.float32)).astype(jnp.float32)

    keys = iter(jax.random.split(key, 64))
    params = {"enc_w": [], "enc_b": [], "dec_w": [], "dec_b": [], "gnn_w": []}
    for din, dout in enc_dims:
        params["enc_w"].append(glorot(next(keys), (din, dout)))
        params["enc_b"].append(0.01 * jax.random.normal(next(keys), (dout,), jnp.float32))
    for din, dout in dec_dims:
        params["dec_w"].append(glorot(next(keys), (din, dout)))
        params["dec_b"].append(0.01 * jax.random.normal(next(keys), (dout,), jnp.float32))
    for din, dout in list(enc_dims) + [(n_z, n_clusters)]:
        params["gnn_w"].append(glorot(next(keys), (din, dout)))
    # cluster_layer: Parameter(n_clusters, n_z) with xavier_normal_ init
    params["cluster"] = glorot(next(keys), (n_clusters, n_z))
    return params


if __name__ == "__main__":
    config = {
        "arch": "64-32-16",
        "n_input": 32,
        "sigma": 0.5,
        "dropout_rate": 0.0,
        "batchnorm": False,
    }
    n_clusters = 4
    v = 1.0
    num_nodes = 500  # deliberately NOT a multiple of the row tile -> exercises padding + even grid

    enc_dims, dec_dims, n_z = set_dims_rwsl(config)

    key = jax.random.PRNGKey(0)
    k_param, k_x = jax.random.split(key)
    params = init_params(k_param, enc_dims, dec_dims, n_z, n_clusters)
    x = jax.random.normal(k_x, (num_nodes, config["n_input"]), jnp.float32)

    x_bar, q, predict, z = rwsl_forward(x, params, sigma=config["sigma"], v=v)
    jax.block_until_ready((x_bar, q, predict, z))

    assert x_bar.shape == (num_nodes, config["n_input"])
    assert q.shape == (num_nodes, n_clusters)
    assert predict.shape == (num_nodes, n_clusters)
    assert z.shape == (num_nodes, n_z)
    for arr in (x_bar, q, predict, z):
        assert bool(jnp.all(jnp.isfinite(arr)))
    # softmax / Student-t rows use exact divides -> tight normalization check
    assert bool(jnp.all(jnp.abs(jnp.sum(predict, axis=1) - 1.0) < 1e-3))
    assert bool(jnp.all(jnp.abs(jnp.sum(q, axis=1) - 1.0) < 1e-3))

    print("KERNEL_OK")
</pallas_src>

<mosaic_0001>
module attributes {stable_mosaic.version = 11 : i64} {
  func.func @_rwsl_fused_kernel(%arg0: i32, %arg1: memref<128x32xbf16, #tpu.memory_space<vmem>>, %arg2: memref<32x128xbf16, #tpu.memory_space<vmem>>, %arg3: memref<256x128xbf16, #tpu.memory_space<vmem>>, %arg4: memref<64x32xbf16, #tpu.memory_space<vmem>>, %arg5: memref<1x768xf32, #tpu.memory_space<vmem>>, %arg6: memref<16x4xf32, #tpu.memory_space<vmem>>, %arg7: memref<128x32xf32, #tpu.memory_space<vmem>>, %arg8: memref<128x128xf32, #tpu.memory_space<vmem>>) attributes {dimension_semantics = [#tpu.dimension_semantics<parallel>], iteration_bounds = array<i64: 4>, scalar_prefetch = 0 : i64, scratch_operands = 0 : i64, tpu.core_type = #tpu.core_type<tc>, window_params = [{transform_indices = @transform_0, window_bounds = array<i64: 128, 32>}, {pipeline_mode = #tpu.pipeline_mode<synchronous>, transform_indices = @transform_1, window_bounds = array<i64: 32, 128>}, {pipeline_mode = #tpu.pipeline_mode<synchronous>, transform_indices = @transform_2, window_bounds = array<i64: 256, 128>}, {pipeline_mode = #tpu.pipeline_mode<synchronous>, transform_indices = @transform_3, window_bounds = array<i64: 64, 32>}, {pipeline_mode = #tpu.pipeline_mode<synchronous>, transform_indices = @transform_4, window_bounds = array<i64: 1, 768>}, {pipeline_mode = #tpu.pipeline_mode<synchronous>, transform_indices = @transform_5, window_bounds = array<i64: 16, 4>}, {transform_indices = @transform_6, window_bounds = array<i64: 128, 32>}, {transform_indices = @transform_7, window_bounds = array<i64: 128, 128>}]} {
    %c0 = arith.constant 0 : index
    %c0_0 = arith.constant 0 : index
    %0 = vector.load %arg1[%c0, %c0_0] : memref<128x32xbf16, #tpu.memory_space<vmem>>, vector<128x32xbf16>
    %c0_1 = arith.constant 0 : index
    %c0_2 = arith.constant 0 : index
    %1 = vector.load %arg2[%c0_1, %c0_2] : memref<32x128xbf16, #tpu.memory_space<vmem>>, vector<32x128xbf16>
    %cst = arith.constant dense<0.000000e+00> : vector<128x128xf32>
    %2 = tpu.matmul %0, %1, %cst {dimension_numbers = #tpu.dot_dimension_numbers<[1], [0], [0], [1], [0, 0, 1, 1], [], []>} : vector<128x32xbf16>, vector<32x128xbf16>, vector<128x128xf32> -> vector<128x128xf32>
    %c0_3 = arith.constant 0 : index
    %c0_4 = arith.constant 0 : index
    %3 = vector.load %arg5[%c0_3, %c0_4] : memref<1x768xf32, #tpu.memory_space<vmem>>, vector<1x128xf32>
    %4 = vector.broadcast %3 : vector<1x128xf32> to vector<128x128xf32>
    %5 = arith.addf %2, %4 : vector<128x128xf32>
    %cst_5 = arith.constant 0.000000e+00 : f32
    %6 = vector.broadcast %cst_5 : f32 to vector<128x128xf32>
    %7 = arith.maximumf %5, %6 : vector<128x128xf32>
    %8 = vector.extract_strided_slice %7 {offsets = [0, 0], sizes = [128, 64], strides = [1, 1]} : vector<128x128xf32> to vector<128x64xf32>
    %9 = vector.extract_strided_slice %7 {offsets = [0, 64], sizes = [128, 64], strides = [1, 1]} : vector<128x128xf32> to vector<128x64xf32>
    %cst_6 = arith.constant 5.000000e-01 : f32
    %10 = vector.broadcast %cst_6 : f32 to vector<128x64xf32>
    %11 = arith.mulf %10, %9 : vector<128x64xf32>
    %cst_7 = arith.constant 5.000000e-01 : f32
    %12 = vector.broadcast %cst_7 : f32 to vector<128x64xf32>
    %13 = arith.mulf %12, %8 : vector<128x64xf32>
    %14 = arith.addf %11, %13 : vector<128x64xf32>
    %c144 = arith.constant 144 : index
    %c0_8 = arith.constant 0 : index
    %15 = vector.load %arg3[%c144, %c0_8] : memref<256x128xbf16, #tpu.memory_space<vmem>>, vector<64x32xbf16>
    %16 = arith.truncf %14 : vector<128x64xf32> to vector<128x64xbf16>
    %cst_9 = arith.constant dense<0.000000e+00> : vector<128x32xf32>
    %17 = tpu.matmul %16, %15, %cst_9 {dimension_numbers = #tpu.dot_dimension_numbers<[1], [0], [0], [1], [0, 0, 1, 1], [], []>} : vector<128x64xbf16>, vector<64x32xbf16>, vector<128x32xf32> -> vector<128x32xf32>
    %cst_10 = arith.constant 0.000000e+00 : f32
    %18 = vector.broadcast %cst_10 : f32 to vector<128x32xf32>
    %19 = arith.maximumf %17, %18 : vector<128x32xf32>
    %c0_11 = arith.constant 0 : index
    %c0_12 = arith.constant 0 : index
    %20 = vector.load %arg3[%c0_11, %c0_12] : memref<256x128xbf16, #tpu.memory_space<vmem>>, vector<64x32xbf16>
    %21 = arith.truncf %8 : vector<128x64xf32> to vector<128x64xbf16>
    %cst_13 = arith.constant dense<0.000000e+00> : vector<128x32xf32>
    %22 = tpu.matmul %21, %20, %cst_13 {dimension_numbers = #tpu.dot_dimension_numbers<[1], [0], [0], [1], [0, 0, 1, 1], [], []>} : vector<128x64xbf16>, vector<64x32xbf16>, vector<128x32xf32> -> vector<128x32xf32>
    %c0_14 = arith.constant 0 : index
    %c128 = arith.constant 128 : index
    %23 = vector.load %arg5[%c0_14, %c128] : memref<1x768xf32, #tpu.memory_space<vmem>>, vector<1x32xf32>
    %24 = vector.broadcast %23 : vector<1x32xf32> to vector<128x32xf32>
    %25 = arith.addf %22, %24 : vector<128x32xf32>
    %cst_15 = arith.constant 0.000000e+00 : f32
    %26 = vector.broadcast %cst_15 : f32 to vector<128x32xf32>
    %27 = arith.maximumf %25, %26 : vector<128x32xf32>
    %cst_16 = arith.constant 5.000000e-01 : f32
    %28 = vector.broadcast %cst_16 : f32 to vector<128x32xf32>
    %29 = arith.mulf %28, %19 : vector<128x32xf32>
    %cst_17 = arith.constant 5.000000e-01 : f32
    %30 = vector.broadcast %cst_17 : f32 to vector<128x32xf32>
    %31 = arith.mulf %30, %27 : vector<128x32xf32>
    %32 = arith.addf %29, %31 : vector<128x32xf32>
    %c208 = arith.constant 208 : index
    %c0_18 = arith.constant 0 : index
    %33 = vector.load %arg3[%c208, %c0_18] : memref<256x128xbf16, #tpu.memory_space<vmem>>, vector<32x16xbf16>
    %34 = arith.truncf %32 : vector<128x32xf32> to vector<128x32xbf16>
    %cst_19 = arith.constant dense<0.000000e+00> : vector<128x16xf32>
    %35 = tpu.matmul %34, %33, %cst_19 {dimension_numbers = #tpu.dot_dimension_numbers<[1], [0], [0], [1], [0, 0, 1, 1], [], []>} : vector<128x32xbf16>, vector<32x16xbf16>, vector<128x16xf32> -> vector<128x16xf32>
    %cst_20 = arith.constant 0.000000e+00 : f32
    %36 = vector.broadcast %cst_20 : f32 to vector<128x16xf32>
    %37 = arith.maximumf %35, %36 : vector<128x16xf32>
    %c64 = arith.constant 64 : index
    %c0_21 = arith.constant 0 : index
    %38 = vector.load %arg3[%c64, %c0_21] : memref<256x128xbf16, #tpu.memory_space<vmem>>, vector<32x16xbf16>
    %39 = arith.truncf %27 : vector<128x32xf32> to vector<128x32xbf16>
    %cst_22 = arith.constant dense<0.000000e+00> : vector<128x16xf32>
    %40 = tpu.matmul %39, %38, %cst_22 {dimension_numbers = #tpu.dot_dimension_numbers<[1], [0], [0], [1], [0, 0, 1, 1], [], []>} : vector<128x32xbf16>, vector<32x16xbf16>, vector<128x16xf32> -> vector<128x16xf32>
    %c0_23 = arith.constant 0 : index
    %c256 = arith.constant 256 : index
    %41 = vector.load %arg5[%c0_23, %c256] : memref<1x768xf32, #tpu.memory_space<vmem>>, vector<1x16xf32>
    %42 = vector.broadcast %41 : vector<1x16xf32> to vector<128x16xf32>
    %43 = arith.addf %40, %42 : vector<128x16xf32>
    %cst_24 = arith.constant 5.000000e-01 : f32
    %44 = vector.broadcast %cst_24 : f32 to vector<128x16xf32>
    %45 = arith.mulf %44, %37 : vector<128x16xf32>
    %cst_25 = arith.constant 5.000000e-01 : f32
    %46 = vector.broadcast %cst_25 : f32 to vector<128x16xf32>
    %47 = arith.mulf %46, %43 : vector<128x16xf32>
    %48 = arith.addf %45, %47 : vector<128x16xf32>
    %c240 = arith.constant 240 : index
    %c0_26 = arith.constant 0 : index
    %49 = vector.load %arg3[%c240, %c0_26] : memref<256x128xbf16, #tpu.memory_space<vmem>>, vector<16x4xbf16>
    %50 = arith.truncf %48 : vector<128x16xf32> to vector<128x16xbf16>
    %cst_27 = arith.constant dense<0.000000e+00> : vector<128x4xf32>
    %51 = tpu.matmul %50, %49, %cst_27 {dimension_numbers = #tpu.dot_dimension_numbers<[1], [0], [0], [1], [0, 0, 1, 1], [], []>} : vector<128x16xbf16>, vector<16x4xbf16>, vector<128x4xf32> -> vector<128x4xf32>
    %cst_28 = arith.constant dense<0xFF800000> : vector<128xf32>
    %52 = vector.multi_reduction <maximumf>, %51, %cst_28 [1] : vector<128x4xf32> to vector<128xf32>
    %53 = vector.shape_cast %52 : vector<128xf32> to vector<128x1xf32>
    %54 = vector.broadcast %53 : vector<128x1xf32> to vector<128x4xf32>
    %55 = arith.subf %51, %54 : vector<128x4xf32>
    %56 = math.exp %55 : vector<128x4xf32>
    %cst_29 = arith.constant dense<0.000000e+00> : vector<128xf32>
    %57 = vector.multi_reduction <add>, %56, %cst_29 [1] : vector<128x4xf32> to vector<128xf32>
    %58 = vector.shape_cast %57 : vector<128xf32> to vector<128x1xf32>
    %59 = vector.broadcast %58 : vector<128x1xf32> to vector<128x4xf32>
    %60 = arith.divf %56, %59 : vector<128x4xf32>
    %c96 = arith.constant 96 : index
    %c0_30 = arith.constant 0 : index
    %61 = vector.load %arg3[%c96, %c0_30] : memref<256x128xbf16, #tpu.memory_space<vmem>>, vector<16x32xbf16>
    %62 = arith.truncf %43 : vector<128x16xf32> to vector<128x16xbf16>
    %cst_31 = arith.constant dense<0.000000e+00> : vector<128x32xf32>
    %63 = tpu.matmul %62, %61, %cst_31 {dimension_numbers = #tpu.dot_dimension_numbers<[1], [0], [0], [1], [0, 0, 1, 1], [], []>} : vector<128x16xbf16>, vector<16x32xbf16>, vector<128x32xf32> -> vector<128x32xf32>
    %c0_32 = arith.constant 0 : index
    %c384 = arith.constant 384 : index
    %64 = vector.load %arg5[%c0_32, %c384] : memref<1x768xf32, #tpu.memory_space<vmem>>, vector<1x32xf32>
    %65 = vector.broadcast %64 : vector<1x32xf32> to vector<128x32xf32>
    %66 = arith.addf %63, %65 : vector<128x32xf32>
    %cst_33 = arith.constant 0.000000e+00 : f32
    %67 = vector.broadcast %cst_33 : f32 to vector<128x32xf32>
    %68 = arith.maximumf %66, %67 : vector<128x32xf32>
    %c112 = arith.constant 112 : index
    %c0_34 = arith.constant 0 : index
    %69 = vector.load %arg3[%c112, %c0_34] : memref<256x128xbf16, #tpu.memory_space<vmem>>, vector<32x64xbf16>
    %70 = arith.truncf %68 : vector<128x32xf32> to vector<128x32xbf16>
    %cst_35 = arith.constant dense<0.000000e+00> : vector<128x64xf32>
    %71 = tpu.matmul %70, %69, %cst_35 {dimension_numbers = #tpu.dot_dimension_numbers<[1], [0], [0], [1], [0, 0, 1, 1], [], []>} : vector<128x32xbf16>, vector<32x64xbf16>, vector<128x64xf32> -> vector<128x64xf32>
    %c0_36 = arith.constant 0 : index
    %c512 = arith.constant 512 : index
    %72 = vector.load %arg5[%c0_36, %c512] : memref<1x768xf32, #tpu.memory_space<vmem>>, vector<1x64xf32>
    %73 = vector.broadcast %72 : vector<1x64xf32> to vector<128x64xf32>
    %74 = arith.addf %71, %73 : vector<128x64xf32>
    %cst_37 = arith.constant 0.000000e+00 : f32
    %75 = vector.broadcast %cst_37 : f32 to vector<128x64xf32>
    %76 = arith.maximumf %74, %75 : vector<128x64xf32>
    %c0_38 = arith.constant 0 : index
    %c0_39 = arith.constant 0 : index
    %77 = vector.load %arg4[%c0_38, %c0_39] : memref<64x32xbf16, #tpu.memory_space<vmem>>, vector<64x32xbf16>
    %78 = arith.truncf %76 : vector<128x64xf32> to vector<128x64xbf16>
    %cst_40 = arith.constant dense<0.000000e+00> : vector<128x32xf32>
    %79 = tpu.matmul %78, %77, %cst_40 {dimension_numbers = #tpu.dot_dimension_numbers<[1], [0], [0], [1], [0, 0, 1, 1], [], []>} : vector<128x64xbf16>, vector<64x32xbf16>, vector<128x32xf32> -> vector<128x32xf32>
    %c0_41 = arith.constant 0 : index
    %c640 = arith.constant 640 : index
    %80 = vector.load %arg5[%c0_41, %c640] : memref<1x768xf32, #tpu.memory_space<vmem>>, vector<1x32xf32>
    %81 = vector.broadcast %80 : vector<1x32xf32> to vector<128x32xf32>
    %82 = arith.addf %79, %81 : vector<128x32xf32>
    %c0_42 = arith.constant 0 : index
    %c0_43 = arith.constant 0 : index
    %83 = vector.load %arg7[%c0_42, %c0_43] : memref<128x32xf32, #tpu.memory_space<vmem>>, vector<128x32xf32>
    tpu.vector_store %arg7[%c0_42, %c0_43], %82 {strides = array<i32>} : memref<128x32xf32, #tpu.memory_space<vmem>>, vector<128x32xf32>,
    %c0_44 = arith.constant 0 : index
    %c0_45 = arith.constant 0 : index
    %84 = vector.load %arg6[%c0_44, %c0_45] : memref<16x4xf32, #tpu.memory_space<vmem>>, vector<16x4xf32>
    %cst_46 = arith.constant dense<0.000000e+00> : vector<128x4xf32>
    %85 = tpu.matmul %43, %84, %cst_46 {dimension_numbers = #tpu.dot_dimension_numbers<[1], [0], [0], [1], [0, 0, 1, 1], [], []>} : vector<128x16xf32>, vector<16x4xf32>, vector<128x4xf32> -> vector<128x4xf32>
    %86 = arith.mulf %43, %43 : vector<128x16xf32>
    %cst_47 = arith.constant dense<0.000000e+00> : vector<128xf32>
    %87 = vector.multi_reduction <add>, %86, %cst_47 [1] : vector<128x16xf32> to vector<128xf32>
    %88 = vector.shape_cast %87 : vector<128xf32> to vector<128x1xf32>
    %89 = arith.mulf %84, %84 : vector<16x4xf32>
    %cst_48 = arith.constant dense<0.000000e+00> : vector<4xf32>
    %90 = vector.multi_reduction <add>, %89, %cst_48 [0] : vector<16x4xf32> to vector<4xf32>
    %91 = vector.shape_cast %90 : vector<4xf32> to vector<1x4xf32>
    %92 = vector.broadcast %88 : vector<128x1xf32> to vector<128x4xf32>
    %93 = vector.broadcast %91 : vector<1x4xf32> to vector<128x4xf32>
    %94 = arith.addf %92, %93 : vector<128x4xf32>
    %cst_49 = arith.constant 2.000000e+00 : f32
    %95 = vector.broadcast %cst_49 : f32 to vector<128x4xf32>
    %96 = arith.mulf %95, %85 : vector<128x4xf32>
    %97 = arith.subf %94, %96 : vector<128x4xf32>
    %cst_50 = arith.constant 0.000000e+00 : f32
    %98 = vector.broadcast %cst_50 : f32 to vector<128x4xf32>
    %99 = arith.maximumf %97, %98 : vector<128x4xf32>
    %cst_51 = arith.constant 1.000000e+00 : f32
    %100 = vector.broadcast %cst_51 : f32 to vector<128x4xf32>
    %101 = arith.divf %99, %100 : vector<128x4xf32>
    %cst_52 = arith.constant 1.000000e+00 : f32
    %102 = vector.broadcast %cst_52 : f32 to vector<128x4xf32>
    %103 = arith.addf %102, %101 : vector<128x4xf32>
    %cst_53 = arith.constant 1.000000e+00 : f32
    %104 = vector.broadcast %cst_53 : f32 to vector<128x4xf32>
    %105 = arith.divf %104, %103 : vector<128x4xf32>
    %cst_54 = arith.constant dense<0.000000e+00> : vector<128xf32>
    %106 = vector.multi_reduction <add>, %105, %cst_54 [1] : vector<128x4xf32> to vector<128xf32>
    %107 = vector.shape_cast %106 : vector<128xf32> to vector<128x1xf32>
    %108 = vector.broadcast %107 : vector<128x1xf32> to vector<128x4xf32>
    %109 = arith.divf %105, %108 : vector<128x4xf32>
    %c0_55 = arith.constant 0 : index
    %c0_56 = arith.constant 0 : index
    %110 = vector.load %arg8[%c0_55, %c0_56] : memref<128x128xf32, #tpu.memory_space<vmem>>, vector<128x4xf32>
    tpu.vector_store %arg8[%c0_55, %c0_56], %109 {strides = array<i32>} : memref<128x128xf32, #tpu.memory_space<vmem>>, vector<128x4xf32>,
    %c0_57 = arith.constant 0 : index
    %c4 = arith.constant 4 : index
    %111 = vector.load %arg8[%c0_57, %c4] : memref<128x128xf32, #tpu.memory_space<vmem>>, vector<128x4xf32>
    tpu.vector_store %arg8[%c0_57, %c4], %60 {strides = array<i32>} : memref<128x128xf32, #tpu.memory_space<vmem>>, vector<128x4xf32>,
    %c0_58 = arith.constant 0 : index
    %c8 = arith.constant 8 : index
    %112 = vector.load %arg8[%c0_58, %c8] : memref<128x128xf32, #tpu.memory_space<vmem>>, vector<128x16xf32>
    tpu.vector_store %arg8[%c0_58, %c8], %43 {strides = array<i32>} : memref<128x128xf32, #tpu.memory_space<vmem>>, vector<128x16xf32>,
    %cst_59 = arith.constant 0.000000e+00 : f32
    %113 = vector.broadcast %cst_59 : f32 to vector<128x104xf32>
    %c0_60 = arith.constant 0 : index
    %c24 = arith.constant 24 : index
    %114 = vector.load %arg8[%c0_60, %c24] : memref<128x128xf32, #tpu.memory_space<vmem>>, vector<128x104xf32>
    tpu.vector_store %arg8[%c0_60, %c24], %113 {strides = array<i32>} : memref<128x128xf32, #tpu.memory_space<vmem>>, vector<128x104xf32>,
    return
  }
  func.func @transform_0(%arg0: i32) -> (i32, i32) {
    %c0_i32 = arith.constant 0 : i32
    %c0_i32_0 = arith.constant 0 : i32
    return %arg0, %c0_i32 : i32, i32
  }
  func.func @transform_1(%arg0: i32) -> (i32, i32) {
    %c0_i32 = arith.constant 0 : i32
    %c0_i32_0 = arith.constant 0 : i32
    %c0_i32_1 = arith.constant 0 : i32
    return %c0_i32, %c0_i32_0 : i32, i32
  }
  func.func @transform_2(%arg0: i32) -> (i32, i32) {
    %c0_i32 = arith.constant 0 : i32
    %c0_i32_0 = arith.constant 0 : i32
    %c0_i32_1 = arith.constant 0 : i32
    return %c0_i32, %c0_i32_0 : i32, i32
  }
  func.func @transform_3(%arg0: i32) -> (i32, i32) {
    %c0_i32 = arith.constant 0 : i32
    %c0_i32_0 = arith.constant 0 : i32
    %c0_i32_1 = arith.constant 0 : i32
    return %c0_i32, %c0_i32_0 : i32, i32
  }
  func.func @transform_4(%arg0: i32) -> (i32, i32) {
    %c0_i32 = arith.constant 0 : i32
    %c0_i32_0 = arith.constant 0 : i32
    %c0_i32_1 = arith.constant 0 : i32
    return %c0_i32, %c0_i32_0 : i32, i32
  }
  func.func @transform_5(%arg0: i32) -> (i32, i32) {
    %c0_i32 = arith.constant 0 : i32
    %c0_i32_0 = arith.constant 0 : i32
    %c0_i32_1 = arith.constant 0 : i32
    return %c0_i32, %c0_i32_0 : i32, i32
  }
  func.func @transform_6(%arg0: i32) -> (i32, i32) {
    %c0_i32 = arith.constant 0 : i32
    %c0_i32_0 = arith.constant 0 : i32
    return %arg0, %c0_i32 : i32, i32
  }
  func.func @transform_7(%arg0: i32) -> (i32, i32) {
    %c0_i32 = arith.constant 0 : i32
    %c0_i32_0 = arith.constant 0 : i32
    return %arg0, %c0_i32 : i32, i32
  }
}

module attributes {stable_mosaic.version = 11 : i64} {
  func.func @_rwsl_fused_kernel(%arg0: i32, %arg1: memref<128x32xbf16, #tpu.memory_space<vmem>>, %arg2: memref<32x128xbf16, #tpu.memory_space<vmem>>, %arg3: memref<256x128xbf16, #tpu.memory_space<vmem>>, %arg4: memref<64x32xbf16, #tpu.memory_space<vmem>>, %arg5: memref<1x768xf32, #tpu.memory_space<vmem>>, %arg6: memref<16x4xf32, #tpu.memory_space<vmem>>, %arg7: memref<128x32xf32, #tpu.memory_space<vmem>>, %arg8: memref<128x128xf32, #tpu.memory_space<vmem>>) attributes {dimension_semantics = [#tpu.dimension_semantics<parallel>], iteration_bounds = array<i64: 4>, scalar_prefetch = 0 : i64, scratch_operands = 0 : i64, tpu.core_type = #tpu.core_type<tc>, window_params = [{transform_indices = @transform_0, window_bounds = array<i64: 128, 32>}, {pipeline_mode = #tpu.pipeline_mode<synchronous>, transform_indices = @transform_1, window_bounds = array<i64: 32, 128>}, {pipeline_mode = #tpu.pipeline_mode<synchronous>, transform_indices = @transform_2, window_bounds = array<i64: 256, 128>}, {pipeline_mode = #tpu.pipeline_mode<synchronous>, transform_indices = @transform_3, window_bounds = array<i64: 64, 32>}, {pipeline_mode = #tpu.pipeline_mode<synchronous>, transform_indices = @transform_4, window_bounds = array<i64: 1, 768>}, {pipeline_mode = #tpu.pipeline_mode<synchronous>, transform_indices = @transform_5, window_bounds = array<i64: 16, 4>}, {transform_indices = @transform_6, window_bounds = array<i64: 128, 32>}, {transform_indices = @transform_7, window_bounds = array<i64: 128, 128>}]} {
    %c0 = arith.constant 0 : index
    %c0_0 = arith.constant 0 : index
    %0 = vector.load %arg1[%c0, %c0_0] : memref<128x32xbf16, #tpu.memory_space<vmem>>, vector<128x32xbf16>
    %c0_1 = arith.constant 0 : index
    %c0_2 = arith.constant 0 : index
    %1 = vector.load %arg2[%c0_1, %c0_2] : memref<32x128xbf16, #tpu.memory_space<vmem>>, vector<32x128xbf16>
    %cst = arith.constant dense<0.000000e+00> : vector<128x128xf32>
    %2 = tpu.matmul %0, %1, %cst {dimension_numbers = #tpu.dot_dimension_numbers<[1], [0], [0], [1], [0, 0, 1, 1], [], []>} : vector<128x32xbf16>, vector<32x128xbf16>, vector<128x128xf32> -> vector<128x128xf32>
    %c0_3 = arith.constant 0 : index
    %c0_4 = arith.constant 0 : index
    %3 = vector.load %arg5[%c0_3, %c0_4] : memref<1x768xf32, #tpu.memory_space<vmem>>, vector<1x128xf32>
    %4 = vector.broadcast %3 : vector<1x128xf32> to vector<128x128xf32>
    %5 = arith.addf %2, %4 : vector<128x128xf32>
    %cst_5 = arith.constant 0.000000e+00 : f32
    %6 = vector.broadcast %cst_5 : f32 to vector<128x128xf32>
    %7 = arith.maximumf %5, %6 : vector<128x128xf32>
    %8 = vector.extract_strided_slice %7 {offsets = [0, 0], sizes = [128, 64], strides = [1, 1]} : vector<128x128xf32> to vector<128x64xf32>
    %9 = vector.extract_strided_slice %7 {offsets = [0, 64], sizes = [128, 64], strides = [1, 1]} : vector<128x128xf32> to vector<128x64xf32>
    %cst_6 = arith.constant 5.000000e-01 : f32
    %10 = vector.broadcast %cst_6 : f32 to vector<128x64xf32>
    %11 = arith.mulf %10, %9 : vector<128x64xf32>
    %cst_7 = arith.constant 5.000000e-01 : f32
    %12 = vector.broadcast %cst_7 : f32 to vector<128x64xf32>
    %13 = arith.mulf %12, %8 : vector<128x64xf32>
    %14 = arith.addf %11, %13 : vector<128x64xf32>
    %c144 = arith.constant 144 : index
    %c0_8 = arith.constant 0 : index
    %15 = vector.load %arg3[%c144, %c0_8] : memref<256x128xbf16, #tpu.memory_space<vmem>>, vector<64x32xbf16>
    %16 = arith.truncf %14 : vector<128x64xf32> to vector<128x64xbf16>
    %cst_9 = arith.constant dense<0.000000e+00> : vector<128x32xf32>
    %17 = tpu.matmul %16, %15, %cst_9 {dimension_numbers = #tpu.dot_dimension_numbers<[1], [0], [0], [1], [0, 0, 1, 1], [], []>} : vector<128x64xbf16>, vector<64x32xbf16>, vector<128x32xf32> -> vector<128x32xf32>
    %cst_10 = arith.constant 0.000000e+00 : f32
    %18 = vector.broadcast %cst_10 : f32 to vector<128x32xf32>
    %19 = arith.maximumf %17, %18 : vector<128x32xf32>
    %c0_11 = arith.constant 0 : index
    %c0_12 = arith.constant 0 : index
    %20 = vector.load %arg3[%c0_11, %c0_12] : memref<256x128xbf16, #tpu.memory_space<vmem>>, vector<64x32xbf16>
    %21 = arith.truncf %8 : vector<128x64xf32> to vector<128x64xbf16>
    %cst_13 = arith.constant dense<0.000000e+00> : vector<128x32xf32>
    %22 = tpu.matmul %21, %20, %cst_13 {dimension_numbers = #tpu.dot_dimension_numbers<[1], [0], [0], [1], [0, 0, 1, 1], [], []>} : vector<128x64xbf16>, vector<64x32xbf16>, vector<128x32xf32> -> vector<128x32xf32>
    %c0_14 = arith.constant 0 : index
    %c128 = arith.constant 128 : index
    %23 = vector.load %arg5[%c0_14, %c128] : memref<1x768xf32, #tpu.memory_space<vmem>>, vector<1x32xf32>
    %24 = vector.broadcast %23 : vector<1x32xf32> to vector<128x32xf32>
    %25 = arith.addf %22, %24 : vector<128x32xf32>
    %cst_15 = arith.constant 0.000000e+00 : f32
    %26 = vector.broadcast %cst_15 : f32 to vector<128x32xf32>
    %27 = arith.maximumf %25, %26 : vector<128x32xf32>
    %cst_16 = arith.constant 5.000000e-01 : f32
    %28 = vector.broadcast %cst_16 : f32 to vector<128x32xf32>
    %29 = arith.mulf %28, %19 : vector<128x32xf32>
    %cst_17 = arith.constant 5.000000e-01 : f32
    %30 = vector.broadcast %cst_17 : f32 to vector<128x32xf32>
    %31 = arith.mulf %30, %27 : vector<128x32xf32>
    %32 = arith.addf %29, %31 : vector<128x32xf32>
    %c208 = arith.constant 208 : index
    %c0_18 = arith.constant 0 : index
    %33 = vector.load %arg3[%c208, %c0_18] : memref<256x128xbf16, #tpu.memory_space<vmem>>, vector<32x16xbf16>
    %34 = arith.truncf %32 : vector<128x32xf32> to vector<128x32xbf16>
    %cst_19 = arith.constant dense<0.000000e+00> : vector<128x16xf32>
    %35 = tpu.matmul %34, %33, %cst_19 {dimension_numbers = #tpu.dot_dimension_numbers<[1], [0], [0], [1], [0, 0, 1, 1], [], []>} : vector<128x32xbf16>, vector<32x16xbf16>, vector<128x16xf32> -> vector<128x16xf32>
    %cst_20 = arith.constant 0.000000e+00 : f32
    %36 = vector.broadcast %cst_20 : f32 to vector<128x16xf32>
    %37 = arith.maximumf %35, %36 : vector<128x16xf32>
    %c64 = arith.constant 64 : index
    %c0_21 = arith.constant 0 : index
    %38 = vector.load %arg3[%c64, %c0_21] : memref<256x128xbf16, #tpu.memory_space<vmem>>, vector<32x16xbf16>
    %39 = arith.truncf %27 : vector<128x32xf32> to vector<128x32xbf16>
    %cst_22 = arith.constant dense<0.000000e+00> : vector<128x16xf32>
    %40 = tpu.matmul %39, %38, %cst_22 {dimension_numbers = #tpu.dot_dimension_numbers<[1], [0], [0], [1], [0, 0, 1, 1], [], []>} : vector<128x32xbf16>, vector<32x16xbf16>, vector<128x16xf32> -> vector<128x16xf32>
    %c0_23 = arith.constant 0 : index
    %c256 = arith.constant 256 : index
    %41 = vector.load %arg5[%c0_23, %c256] : memref<1x768xf32, #tpu.memory_space<vmem>>, vector<1x16xf32>
    %42 = vector.broadcast %41 : vector<1x16xf32> to vector<128x16xf32>
    %43 = arith.addf %40, %42 : vector<128x16xf32>
    %cst_24 = arith.constant 5.000000e-01 : f32
    %44 = vector.broadcast %cst_24 : f32 to vector<128x16xf32>
    %45 = arith.mulf %44, %37 : vector<128x16xf32>
    %cst_25 = arith.constant 5.000000e-01 : f32
    %46 = vector.broadcast %cst_25 : f32 to vector<128x16xf32>
    %47 = arith.mulf %46, %43 : vector<128x16xf32>
    %48 = arith.addf %45, %47 : vector<128x16xf32>
    %c240 = arith.constant 240 : index
    %c0_26 = arith.constant 0 : index
    %49 = vector.load %arg3[%c240, %c0_26] : memref<256x128xbf16, #tpu.memory_space<vmem>>, vector<16x4xbf16>
    %50 = arith.truncf %48 : vector<128x16xf32> to vector<128x16xbf16>
    %cst_27 = arith.constant dense<0.000000e+00> : vector<128x4xf32>
    %51 = tpu.matmul %50, %49, %cst_27 {dimension_numbers = #tpu.dot_dimension_numbers<[1], [0], [0], [1], [0, 0, 1, 1], [], []>} : vector<128x16xbf16>, vector<16x4xbf16>, vector<128x4xf32> -> vector<128x4xf32>
    %cst_28 = arith.constant dense<0xFF800000> : vector<128xf32>
    %52 = vector.multi_reduction <maximumf>, %51, %cst_28 [1] : vector<128x4xf32> to vector<128xf32>
    %53 = vector.shape_cast %52 : vector<128xf32> to vector<128x1xf32>
    %54 = vector.broadcast %53 : vector<128x1xf32> to vector<128x4xf32>
    %55 = arith.subf %51, %54 : vector<128x4xf32>
    %56 = math.exp %55 : vector<128x4xf32>
    %cst_29 = arith.constant dense<0.000000e+00> : vector<128xf32>
    %57 = vector.multi_reduction <add>, %56, %cst_29 [1] : vector<128x4xf32> to vector<128xf32>
    %58 = vector.shape_cast %57 : vector<128xf32> to vector<128x1xf32>
    %59 = vector.broadcast %58 : vector<128x1xf32> to vector<128x4xf32>
    %60 = arith.divf %56, %59 : vector<128x4xf32>
    %c96 = arith.constant 96 : index
    %c0_30 = arith.constant 0 : index
    %61 = vector.load %arg3[%c96, %c0_30] : memref<256x128xbf16, #tpu.memory_space<vmem>>, vector<16x32xbf16>
    %62 = arith.truncf %43 : vector<128x16xf32> to vector<128x16xbf16>
    %cst_31 = arith.constant dense<0.000000e+00> : vector<128x32xf32>
    %63 = tpu.matmul %62, %61, %cst_31 {dimension_numbers = #tpu.dot_dimension_numbers<[1], [0], [0], [1], [0, 0, 1, 1], [], []>} : vector<128x16xbf16>, vector<16x32xbf16>, vector<128x32xf32> -> vector<128x32xf32>
    %c0_32 = arith.constant 0 : index
    %c384 = arith.constant 384 : index
    %64 = vector.load %arg5[%c0_32, %c384] : memref<1x768xf32, #tpu.memory_space<vmem>>, vector<1x32xf32>
    %65 = vector.broadcast %64 : vector<1x32xf32> to vector<128x32xf32>
    %66 = arith.addf %63, %65 : vector<128x32xf32>
    %cst_33 = arith.constant 0.000000e+00 : f32
    %67 = vector.broadcast %cst_33 : f32 to vector<128x32xf32>
    %68 = arith.maximumf %66, %67 : vector<128x32xf32>
    %c112 = arith.constant 112 : index
    %c0_34 = arith.constant 0 : index
    %69 = vector.load %arg3[%c112, %c0_34] : memref<256x128xbf16, #tpu.memory_space<vmem>>, vector<32x64xbf16>
    %70 = arith.truncf %68 : vector<128x32xf32> to vector<128x32xbf16>
    %cst_35 = arith.constant dense<0.000000e+00> : vector<128x64xf32>
    %71 = tpu.matmul %70, %69, %cst_35 {dimension_numbers = #tpu.dot_dimension_numbers<[1], [0], [0], [1], [0, 0, 1, 1], [], []>} : vector<128x32xbf16>, vector<32x64xbf16>, vector<128x64xf32> -> vector<128x64xf32>
    %c0_36 = arith.constant 0 : index
    %c512 = arith.constant 512 : index
    %72 = vector.load %arg5[%c0_36, %c512] : memref<1x768xf32, #tpu.memory_space<vmem>>, vector<1x64xf32>
    %73 = vector.broadcast %72 : vector<1x64xf32> to vector<128x64xf32>
    %74 = arith.addf %71, %73 : vector<128x64xf32>
    %cst_37 = arith.constant 0.000000e+00 : f32
    %75 = vector.broadcast %cst_37 : f32 to vector<128x64xf32>
    %76 = arith.maximumf %74, %75 : vector<128x64xf32>
    %c0_38 = arith.constant 0 : index
    %c0_39 = arith.constant 0 : index
    %77 = vector.load %arg4[%c0_38, %c0_39] : memref<64x32xbf16, #tpu.memory_space<vmem>>, vector<64x32xbf16>
    %78 = arith.truncf %76 : vector<128x64xf32> to vector<128x64xbf16>
    %cst_40 = arith.constant dense<0.000000e+00> : vector<128x32xf32>
    %79 = tpu.matmul %78, %77, %cst_40 {dimension_numbers = #tpu.dot_dimension_numbers<[1], [0], [0], [1], [0, 0, 1, 1], [], []>} : vector<128x64xbf16>, vector<64x32xbf16>, vector<128x32xf32> -> vector<128x32xf32>
    %c0_41 = arith.constant 0 : index
    %c640 = arith.constant 640 : index
    %80 = vector.load %arg5[%c0_41, %c640] : memref<1x768xf32, #tpu.memory_space<vmem>>, vector<1x32xf32>
    %81 = vector.broadcast %80 : vector<1x32xf32> to vector<128x32xf32>
    %82 = arith.addf %79, %81 : vector<128x32xf32>
    %c0_42 = arith.constant 0 : index
    %c0_43 = arith.constant 0 : index
    %83 = vector.load %arg7[%c0_42, %c0_43] : memref<128x32xf32, #tpu.memory_space<vmem>>, vector<128x32xf32>
    tpu.vector_store %arg7[%c0_42, %c0_43], %82 {strides = array<i32>} : memref<128x32xf32, #tpu.memory_space<vmem>>, vector<128x32xf32>,
    %c0_44 = arith.constant 0 : index
    %c0_45 = arith.constant 0 : index
    %84 = vector.load %arg6[%c0_44, %c0_45] : memref<16x4xf32, #tpu.memory_space<vmem>>, vector<16x4xf32>
    %cst_46 = arith.constant dense<0.000000e+00> : vector<128x4xf32>
    %85 = tpu.matmul %43, %84, %cst_46 {dimension_numbers = #tpu.dot_dimension_numbers<[1], [0], [0], [1], [0, 0, 1, 1], [], []>} : vector<128x16xf32>, vector<16x4xf32>, vector<128x4xf32> -> vector<128x4xf32>
    %86 = arith.mulf %43, %43 : vector<128x16xf32>
    %cst_47 = arith.constant dense<0.000000e+00> : vector<128xf32>
    %87 = vector.multi_reduction <add>, %86, %cst_47 [1] : vector<128x16xf32> to vector<128xf32>
    %88 = vector.shape_cast %87 : vector<128xf32> to vector<128x1xf32>
    %89 = arith.mulf %84, %84 : vector<16x4xf32>
    %cst_48 = arith.constant dense<0.000000e+00> : vector<4xf32>
    %90 = vector.multi_reduction <add>, %89, %cst_48 [0] : vector<16x4xf32> to vector<4xf32>
    %91 = vector.shape_cast %90 : vector<4xf32> to vector<1x4xf32>
    %92 = vector.broadcast %88 : vector<128x1xf32> to vector<128x4xf32>
    %93 = vector.broadcast %91 : vector<1x4xf32> to vector<128x4xf32>
    %94 = arith.addf %92, %93 : vector<128x4xf32>
    %cst_49 = arith.constant 2.000000e+00 : f32
    %95 = vector.broadcast %cst_49 : f32 to vector<128x4xf32>
    %96 = arith.mulf %95, %85 : vector<128x4xf32>
    %97 = arith.subf %94, %96 : vector<128x4xf32>
    %cst_50 = arith.constant 0.000000e+00 : f32
    %98 = vector.broadcast %cst_50 : f32 to vector<128x4xf32>
    %99 = arith.maximumf %97, %98 : vector<128x4xf32>
    %cst_51 = arith.constant 1.000000e+00 : f32
    %100 = vector.broadcast %cst_51 : f32 to vector<128x4xf32>
    %101 = arith.divf %99, %100 : vector<128x4xf32>
    %cst_52 = arith.constant 1.000000e+00 : f32
    %102 = vector.broadcast %cst_52 : f32 to vector<128x4xf32>
    %103 = arith.addf %102, %101 : vector<128x4xf32>
    %cst_53 = arith.constant 1.000000e+00 : f32
    %104 = vector.broadcast %cst_53 : f32 to vector<128x4xf32>
    %105 = arith.divf %104, %103 : vector<128x4xf32>
    %cst_54 = arith.constant dense<0.000000e+00> : vector<128xf32>
    %106 = vector.multi_reduction <add>, %105, %cst_54 [1] : vector<128x4xf32> to vector<128xf32>
    %107 = vector.shape_cast %106 : vector<128xf32> to vector<128x1xf32>
    %108 = vector.broadcast %107 : vector<128x1xf32> to vector<128x4xf32>
    %109 = arith.divf %105, %108 : vector<128x4xf32>
    %c0_55 = arith.constant 0 : index
    %c0_56 = arith.constant 0 : index
    %110 = vector.load %arg8[%c0_55, %c0_56] : memref<128x128xf32, #tpu.memory_space<vmem>>, vector<128x4xf32>
    tpu.vector_store %arg8[%c0_55, %c0_56], %109 {strides = array<i32>} : memref<128x128xf32, #tpu.memory_space<vmem>>, vector<128x4xf32>,
    %c0_57 = arith.constant 0 : index
    %c4 = arith.constant 4 : index
    %111 = vector.load %arg8[%c0_57, %c4] : memref<128x128xf32, #tpu.memory_space<vmem>>, vector<128x4xf32>
    tpu.vector_store %arg8[%c0_57, %c4], %60 {strides = array<i32>} : memref<128x128xf32, #tpu.memory_space<vmem>>, vector<128x4xf32>,
    %c0_58 = arith.constant 0 : index
    %c8 = arith.constant 8 : index
    %112 = vector.load %arg8[%c0_58, %c8] : memref<128x128xf32, #tpu.memory_space<vmem>>, vector<128x16xf32>
    tpu.vector_store %arg8[%c0_58, %c8], %43 {strides = array<i32>} : memref<128x128xf32, #tpu.memory_space<vmem>>, vector<128x16xf32>,
    %cst_59 = arith.constant 0.000000e+00 : f32
    %113 = vector.broadcast %cst_59 : f32 to vector<128x104xf32>
    %c0_60 = arith.constant 0 : index
    %c24 = arith.constant 24 : index
    %114 = vector.load %arg8[%c0_60, %c24] : memref<128x128xf32, #tpu.memory_space<vmem>>, vector<128x104xf32>
    tpu.vector_store %arg8[%c0_60, %c24], %113 {strides = array<i32>} : memref<128x128xf32, #tpu.memory_space<vmem>>, vector<128x104xf32>,
    return
  }
  func.func @transform_0(%arg0: i32) -> (i32, i32) {
    %c0_i32 = arith.constant 0 : i32
    %c0_i32_0 = arith.constant 0 : i32
    return %arg0, %c0_i32 : i32, i32
  }
  func.func @transform_1(%arg0: i32) -> (i32, i32) {
    %c0_i32 = arith.constant 0 : i32
    %c0_i32_0 = arith.constant 0 : i32
    %c0_i32_1 = arith.constant 0 : i32
    return %c0_i32, %c0_i32_0 : i32, i32
  }
  func.func @transform_2(%arg0: i32) -> (i32, i32) {
    %c0_i32 = arith.constant 0 : i32
    %c0_i32_0 = arith.constant 0 : i32
    %c0_i32_1 = arith.constant 0 : i32
    return %c0_i32, %c0_i32_0 : i32, i32
  }
  func.func @transform_3(%arg0: i32) -> (i32, i32) {
    %c0_i32 = arith.constant 0 : i32
    %c0_i32_0 = arith.constant 0 : i32
    %c0_i32_1 = arith.constant 0 : i32
    return %c0_i32, %c0_i32_0 : i32, i32
  }
  func.func @transform_4(%arg0: i32) -> (i32, i32) {
    %c0_i32 = arith.constant 0 : i32
    %c0_i32_0 = arith.constant 0 : i32
    %c0_i32_1 = arith.constant 0 : i32
    return %c0_i32, %c0_i32_0 : i32, i32
  }
  func.func @transform_5(%arg0: i32) -> (i32, i32) {
    %c0_i32 = arith.constant 0 : i32
    %c0_i32_0 = arith.constant 0 : i32
    %c0_i32_1 = arith.constant 0 : i32
    return %c0_i32, %c0_i32_0 : i32, i32
  }
  func.func @transform_6(%arg0: i32) -> (i32, i32) {
    %c0_i32 = arith.constant 0 : i32
    %c0_i32_0 = arith.constant 0 : i32
    return %arg0, %c0_i32 : i32, i32
  }
  func.func @transform_7(%arg0: i32) -> (i32, i32) {
    %c0_i32 = arith.constant 0 : i32
    %c0_i32_0 = arith.constant 0 : i32
    return %arg0, %c0_i32 : i32, i32
  }
}

</mosaic_0001>

<llo_original>
// kernel: tpu_custom_call.1
$region0: #{tpu_custom_call.1}
  #allocation0 [shape = 'u32[]', space=smem, size = 0x4, offset = 0x4, fixed_abs, tag = 'smem constant byte address 0x4 - core index']
  #allocation1 [shape = 'u32[144,128]{1,0:T(1,128)}', space=vmem, size = 0x12000, scoped, tag = 'internal scratch']
  %s0 = inlined_call_operand.vmem [shape: bf16[512,32], index: 0, kind: input, shape index: {}]
  %s1 = inlined_call_operand.vmem [shape: bf16[32,128], index: 1, kind: input, shape index: {}]
  %s2 = inlined_call_operand.vmem [shape: bf16[256,128], index: 2, kind: input, shape index: {}]
  %s3 = inlined_call_operand.vmem [shape: bf16[64,32], index: 3, kind: input, shape index: {}]
  %s4 = inlined_call_operand.vmem [shape: f32[1,768], index: 4, kind: input, shape index: {}]
  %s5 = inlined_call_operand.vmem [shape: f32[16,4], index: 5, kind: input, shape index: {}]
  %s6 = inlined_call_operand.vmem [shape: f32[512,32], index: 6, kind: output, shape index: {0}]
  %s7 = inlined_call_operand.hbm [shape: f32[512,128], index: 7, kind: output, shape index: {1}]
  %8 = xla_tuple %s6, %s7
  %s9 = sld [smem:[#allocation0]]
  $region65: #{tpu_custom_call.1} parent=0
    _
  %s11 = ssub.s32 1, %s9
  %s12 = scalar_select 0, %s11, %s9
  $region1: #{tpu_custom_call.1} parent=0
    #allocation2 [shape = 'u8[131072]{0}', space=vmem, size = 0x20000, scoped, tag = 'output window, operand 1']
    #allocation3 [shape = 's32[2]{0}', space=sflag, size = 0x8, scoped, tag = 'scoped memory for tpu_custom_call.1']
    %13 = vsyncpa [#allocation3], 0
    %s14 = scalar_lea.sflag [#allocation3], 1
    %15 = vsyncpa %s14, 0
    loop: start=0, step=1, limit=6
    $region2: #{tpu_custom_call.1} parent=1 // loop_pre_header
      _
    $region3: #{tpu_custom_call.1} parent=1 // loop_header
      %s17 = sphi 0, %s21
      %p18 = scmp.ge.s32.totalorder %s17, 6
      %s27 = sphi 0, %s29
      %s30 = sphi 0, %s27
      %s31 = sphi 0, %s30
      %s47 = sphi 0, %s31
      %s51 = sphi 0, %s51
      %s53 = sphi 0, %s51
      %s54 = sphi 0, %s53
      %s68 = sphi 0, %s54
      %s72 = sphi 0, %s72
      %s74 = sphi 0, %s72
      %s75 = sphi 0, %s74
      %s89 = sphi 0, %s75
      %s93 = sphi 0, %s93
      %s95 = sphi 0, %s93
      %s96 = sphi 0, %s95
      %s110 = sphi 0, %s96
      %s114 = sphi 0, %s114
      %s116 = sphi 0, %s114
      %s117 = sphi 0, %s116
      %s131 = sphi 0, %s117
      %s135 = sphi 0, %s135
      %s137 = sphi 0, %s135
      %s138 = sphi 0, %s137
      %s152 = sphi 0, %s138
      %s158 = sphi 0, %s160
      %s161 = sphi 0, %s158
      %s162 = sphi 0, %s161
      %s178 = sphi 0, %s162
      %s184 = sphi 0, %s186
      %s187 = sphi 0, %s184
      %s188 = sphi 0, %s187
      %s204 = sphi 0, %s188
    $region4: #{tpu_custom_call.1} parent=1 // loop_header_branch
      %20 = sbr.rel (%p18) target = $region8
    $region5: #{tpu_custom_call.1} parent=1 // loop_body
      %s22 = ssub.s32 %s17, 1
      %s23 = ssub.s32 %s17, 2
      %s24 = sadd.s32 %s17, 1
      %s25 = ssub.s32 %s17, %s24
      %p26 = scmp.eq.s32.totalorder %s25, 0
      %s28 = sadd.s32 %s27, 1
      %s29 = scalar_select %p26, %s27, %s28
      %p32 = pneg %p26
      %p33 = scmp.eq.s32.totalorder %s17, 3
      %p34 = por %p32, %p33
      %p35 = scmp.ne.s32.totalorder %s27, %s30
      %p36 = scmp.eq.s32.totalorder %s17, 0
      %p37 = por %p35, %p36
      %p38 = scmp.ne.s32.totalorder %s27, %s30
      %p39 = scmp.eq.s32.totalorder %s22, 3
      %p40 = por %p38, %p39
      %p41 = scmp.ne.s32.totalorder %s30, %s31
      %p42 = scmp.eq.s32.totalorder %s22, 0
      %p43 = por %p41, %p42
      %p44 = scmp.ne.s32.totalorder %s30, %s31
      %p45 = scmp.eq.s32.totalorder %s23, 3
      %p46 = por %p44, %p45
      %p48 = scmp.ne.s32.totalorder %s31, %s47
      %p49 = scmp.eq.s32.totalorder %s23, 0
      %p50 = por %p48, %p49
      %s52 = sadd.s32 %s51, 1
      %p55 = scmp.eq.s32.totalorder %s17, 3
      %p56 = scmp.ne.s32.totalorder %s51, %s53
      %p57 = scmp.eq.s32.totalorder %s17, 0
      %p58 = por %p56, %p57
      %p59 = scmp.ne.s32.totalorder %s51, %s53
      %p60 = scmp.eq.s32.totalorder %s22, 3
      %p61 = por %p59, %p60
      %p62 = scmp.ne.s32.totalorder %s53, %s54
      %p63 = scmp.eq.s32.totalorder %s22, 0
      %p64 = por %p62, %p63
      %p65 = scmp.ne.s32.totalorder %s53, %s54
      %p66 = scmp.eq.s32.totalorder %s23, 3
      %p67 = por %p65, %p66
      %p69 = scmp.ne.s32.totalorder %s54, %s68
      %p70 = scmp.eq.s32.totalorder %s23, 0
      %p71 = por %p69, %p70
      %s73 = sadd.s32 %s72, 1
      %p76 = scmp.eq.s32.totalorder %s17, 3
      %p77 = scmp.ne.s32.totalorder %s72, %s74
      %p78 = scmp.eq.s32.totalorder %s17, 0
      %p79 = por %p77, %p78
      %p80 = scmp.ne.s32.totalorder %s72, %s74
      %p81 = scmp.eq.s32.totalorder %s22, 3
      %p82 = por %p80, %p81
      %p83 = scmp.ne.s32.totalorder %s74, %s75
      %p84 = scmp.eq.s32.totalorder %s22, 0
      %p85 = por %p83, %p84
      %p86 = scmp.ne.s32.totalorder %s74, %s75
      %p87 = scmp.eq.s32.totalorder %s23, 3
      %p88 = por %p86, %p87
      %p90 = scmp.ne.s32.totalorder %s75, %s89
      %p91 = scmp.eq.s32.totalorder %s23, 0
      %p92 = por %p90, %p91
      %s94 = sadd.s32 %s93, 1
      %p97 = scmp.eq.s32.totalorder %s17, 3
      %p98 = scmp.ne.s32.totalorder %s93, %s95
      %p99 = scmp.eq.s32.totalorder %s17, 0
      %p100 = por %p98, %p99
      %p101 = scmp.ne.s32.totalorder %s93, %s95
      %p102 = scmp.eq.s32.totalorder %s22, 3
      %p103 = por %p101, %p102
      %p104 = scmp.ne.s32.totalorder %s95, %s96
      %p105 = scmp.eq.s32.totalorder %s22, 0
      %p106 = por %p104, %p105
      %p107 = scmp.ne.s32.totalorder %s95, %s96
      %p108 = scmp.eq.s32.totalorder %s23, 3
      %p109 = por %p107, %p108
      %p111 = scmp.ne.s32.totalorder %s96, %s110
      %p112 = scmp.eq.s32.totalorder %s23, 0
      %p113 = por %p111, %p112
      %s115 = sadd.s32 %s114, 1
      %p118 = scmp.eq.s32.totalorder %s17, 3
      %p119 = scmp.ne.s32.totalorder %s114, %s116
      %p120 = scmp.eq.s32.totalorder %s17, 0
      %p121 = por %p119, %p120
      %p122 = scmp.ne.s32.totalorder %s114, %s116
      %p123 = scmp.eq.s32.totalorder %s22, 3
      %p124 = por %p122, %p123
      %p125 = scmp.ne.s32.totalorder %s116, %s117
      %p126 = scmp.eq.s32.totalorder %s22, 0
      %p127 = por %p125, %p126
      %p128 = scmp.ne.s32.totalorder %s116, %s117
      %p129 = scmp.eq.s32.totalorder %s23, 3
      %p130 = por %p128, %p129
      %p132 = scmp.ne.s32.totalorder %s117, %s131
      %p133 = scmp.eq.s32.totalorder %s23, 0
      %p134 = por %p132, %p133
      %s136 = sadd.s32 %s135, 1
      %p139 = scmp.eq.s32.totalorder %s17, 3
      %p140 = scmp.ne.s32.totalorder %s135, %s137
      %p141 = scmp.eq.s32.totalorder %s17, 0
      %p142 = por %p140, %p141
      %p143 = scmp.ne.s32.totalorder %s135, %s137
      %p144 = scmp.eq.s32.totalorder %s22, 3
      %p145 = por %p143, %p144
      %p146 = scmp.ne.s32.totalorder %s137, %s138
      %p147 = scmp.eq.s32.totalorder %s22, 0
      %p148 = por %p146, %p147
      %p149 = scmp.ne.s32.totalorder %s137, %s138
      %p150 = scmp.eq.s32.totalorder %s23, 3
      %p151 = por %p149, %p150
      %p153 = scmp.ne.s32.totalorder %s138, %s152
      %p154 = scmp.eq.s32.totalorder %s23, 0
      %p155 = por %p153, %p154
      %s156 = ssub.s32 %s17, %s24
      %p157 = scmp.eq.s32.totalorder %s156, 0
      %s159 = sadd.s32 %s158, 1
      %s160 = scalar_select %p157, %s158, %s159
      %p163 = pneg %p157
      %p164 = scmp.eq.s32.totalorder %s17, 3
      %p165 = por %p163, %p164
      %p166 = scmp.ne.s32.totalorder %s158, %s161
      %p167 = scmp.eq.s32.totalorder %s17, 0
      %p168 = por %p166, %p167
      %p169 = scmp.ne.s32.totalorder %s158, %s161
      %p170 = scmp.eq.s32.totalorder %s22, 3
      %p171 = por %p169, %p170
      %p172 = scmp.ne.s32.totalorder %s161, %s162
      %p173 = scmp.eq.s32.totalorder %s22, 0
      %p174 = por %p172, %p173
      %p175 = scmp.ne.s32.totalorder %s161, %s162
      %p176 = scmp.eq.s32.totalorder %s23, 3
      %p177 = por %p175, %p176
      %p179 = scmp.ne.s32.totalorder %s162, %s178
      %p180 = scmp.eq.s32.totalorder %s23, 0
      %p181 = por %p179, %p180
      %s182 = ssub.s32 %s17, %s24
      %p183 = scmp.eq.s32.totalorder %s182, 0
      %s185 = sadd.s32 %s184, 1
      %s186 = scalar_select %p183, %s184, %s185
      %p189 = pneg %p183
      %p190 = scmp.eq.s32.totalorder %s17, 3
      %p191 = por %p189, %p190
      %p192 = scmp.ne.s32.totalorder %s184, %s187
      %p193 = scmp.eq.s32.totalorder %s17, 0
      %p194 = por %p192, %p193
      %p195 = scmp.ne.s32.totalorder %s184, %s187
      %p196 = scmp.eq.s32.totalorder %s22, 3
      %p197 = por %p195, %p196
      %p198 = scmp.ne.s32.totalorder %s187, %s188
      %p199 = scmp.eq.s32.totalorder %s22, 0
      %p200 = por %p198, %p199
      %p201 = scmp.ne.s32.totalorder %s187, %s188
      %p202 = scmp.eq.s32.totalorder %s23, 3
      %p203 = por %p201, %p202
      %p205 = scmp.ne.s32.totalorder %s188, %s204
      %p206 = scmp.eq.s32.totalorder %s23, 0
      %p207 = por %p205, %p206
      %p208 = scmp.le.s32.totalorder 1, %s17
      %p209 = scmp.lt.s32.totalorder %s17, 5
      %p210 = pnand %p208, %p209
      %p211 = pneg %p210
      // Predicated region
      $region9: #{tpu_custom_call.1} parent=5 // pred_check
        _
      $region10: #{tpu_custom_call.1} parent=5 // pred_check_branch
        %213 = sbr.rel (%p210) target = $region12
      $region11: #{tpu_custom_call.1} parent=5 // pred_region
        %s214 = ssub.s32 %s17, 1
        // Predicated region
        $region13: #{tpu_custom_call.1} parent=11 // pred_check
          %p215 = pneg %p64
        $region14: #{tpu_custom_call.1} parent=11 // pred_check_branch
          %217 = sbr.rel (%p215) target = $region16
        $region15: #{tpu_custom_call.1} parent=11 // pred_region
          _
        $region16: #{tpu_custom_call.1} parent=11 // pred_fallthru
          _
        // Predicated region
        $region17: #{tpu_custom_call.1} parent=11 // pred_check
          %p218 = pneg %p85
        $region18: #{tpu_custom_call.1} parent=11 // pred_check_branch
          %220 = sbr.rel (%p218) target = $region20
        $region19: #{tpu_custom_call.1} parent=11 // pred_region
          _
        $region20: #{tpu_custom_call.1} parent=11 // pred_fallthru
          _
        // Predicated region
        $region21: #{tpu_custom_call.1} parent=11 // pred_check
          %p221 = pneg %p106
        $region22: #{tpu_custom_call.1} parent=11 // pred_check_branch
          %223 = sbr.rel (%p221) target = $region24
        $region23: #{tpu_custom_call.1} parent=11 // pred_region
          _
        $region24: #{tpu_custom_call.1} parent=11 // pred_fallthru
          _
        // Predicated region
        $region25: #{tpu_custom_call.1} parent=11 // pred_check
          %p224 = pneg %p127
        $region26: #{tpu_custom_call.1} parent=11 // pred_check_branch
          %226 = sbr.rel (%p224) target = $region28
        $region27: #{tpu_custom_call.1} parent=11 // pred_region
          _
        $region28: #{tpu_custom_call.1} parent=11 // pred_fallthru
          _
        // Predicated region
        $region29: #{tpu_custom_call.1} parent=11 // pred_check
          %p227 = pneg %p148
        $region30: #{tpu_custom_call.1} parent=11 // pred_check_branch
          %229 = sbr.rel (%p227) target = $region32
        $region31: #{tpu_custom_call.1} parent=11 // pred_region
          _
        $region32: #{tpu_custom_call.1} parent=11 // pred_fallthru
          _
      $region12: #{tpu_custom_call.1} parent=5 // pred_fallthru
        _
      %p230 = scmp.lt.s32.totalorder %s17, 4
      // Predicated region
      $region33: #{tpu_custom_call.1} parent=5 // pred_check
        %p231 = pneg %p230
      $region34: #{tpu_custom_call.1} parent=5 // pred_check_branch
        %233 = sbr.rel (%p231) target = $region36
      $region35: #{tpu_custom_call.1} parent=5 // pred_region
        // Predicated region
        $region37: #{tpu_custom_call.1} parent=35 // pred_check
          %p234 = pneg %p37
        $region38: #{tpu_custom_call.1} parent=35 // pred_check_branch
          %236 = sbr.rel (%p234) target = $region40
        $region39: #{tpu_custom_call.1} parent=35 // pred_region
          %s237 = smul.u32 16, %s17
          %p238 = scmp.lt.s32.totalorder %s237, 63
          %s239 = scalar_select %p238, %s237, 63
          %s240 = smul.addr %s239, 4
          %s241 = scalar_lea.vmem %s0, %s240
          %s242 = smul.u32 16, %s17
        $region40: #{tpu_custom_call.1} parent=35 // pred_fallthru
          _
      $region36: #{tpu_custom_call.1} parent=5 // pred_fallthru
        _
      %p243 = scmp.le.s32.totalorder 1, %s17
      %p244 = scmp.lt.s32.totalorder %s17, 5
      %p245 = pnand %p243, %p244
      %p246 = pneg %p245
      // Predicated region
      $region41: #{tpu_custom_call.1} parent=5 // pred_check
        _
      $region42: #{tpu_custom_call.1} parent=5 // pred_check_branch
        %248 = sbr.rel (%p245) target = $region44
      $region43: #{tpu_custom_call.1} parent=5 // pred_region
        %s249 = ssub.s32 %s17, 1
        %s250 = smul.u32 16, %s22
        %p251 = scmp.lt.s32.totalorder %s250, 63
        %s252 = scalar_select %p251, %s250, 63
        %s253 = smul.addr %s252, 4
        %s254 = scalar_lea.vmem %s0, %s253
        %p255 = pneg %p43
        %p256 = pneg %p40
        %p257 = pneg %p64
        %p258 = pneg %p61
        %p259 = pneg %p85
        %p260 = pneg %p82
        %p261 = pneg %p106
        %p262 = pneg %p103
        %p263 = pneg %p127
        %p264 = pneg %p124
        %p265 = pneg %p148
        %p266 = pneg %p145
        %p267 = pneg %p174
        %p268 = pneg %p171
        %s269 = smul.u32 16, %s22
        %p270 = scmp.lt.s32.totalorder %s269, 63
        %s271 = scalar_select %p270, %s269, 63
        %s272 = smul.addr %s271, 8
        %s273 = scalar_lea.vmem %s6, %s272
        %p274 = pneg %p200
        %p275 = pneg %p197
        %s276 = sand.u32 %s187, 1
        %s277 = scalar_lea.sflag [#allocation3], %s276
        %s278 = sand.u32 %s187, 1
        %s279 = smul.addr %s278, 128
        %s280 = scalar_lea.vmem [#allocation2], %s279
        %s281 = smul.u32 16, %s22
        %p282 = scmp.lt.s32.totalorder %s281, 63
        %s283 = scalar_select %p282, %s281, 63
        %s284 = smul.addr %s283, 4
        %s285 = scalar_lea.vmem %s0, %s284
        %s286 = smul.u32 16, %s22
        %s287 = smul.u32 16, %s22
        %p288 = scmp.lt.s32.totalorder %s287, 63
        %s289 = scalar_select %p288, %s287, 63
        %s290 = smul.addr %s289, 8
        %s291 = scalar_lea.vmem %s6, %s290
        %s292 = smul.u32 16, %s22
        %s293 = smul.u32 16, %s22
        %v295 = vld [vmem:[%s285] sm:$0xf]
        %v296 = vld [vmem:[%s285 + $0x4] sm:$0xf]
        %v297 = vld [vmem:[%s285 + $0x8] sm:$0xf]
        %v298 = vld [vmem:[%s285 + $0xc] sm:$0xf]
        %v299 = vld [vmem:[%s285 + $0x10] sm:$0xf]
        %v300 = vld [vmem:[%s285 + $0x14] sm:$0xf]
        %v301 = vld [vmem:[%s285 + $0x18] sm:$0xf]
        %v302 = vld [vmem:[%s285 + $0x1c] sm:$0xf]
        %v303 = vld [vmem:[%s285 + $0x20] sm:$0xf]
        %v304 = vld [vmem:[%s285 + $0x24] sm:$0xf]
        %v305 = vld [vmem:[%s285 + $0x28] sm:$0xf]
        %v306 = vld [vmem:[%s285 + $0x2c] sm:$0xf]
        %v307 = vld [vmem:[%s285 + $0x30] sm:$0xf]
        %v308 = vld [vmem:[%s285 + $0x34] sm:$0xf]
        %v309 = vld [vmem:[%s285 + $0x38] sm:$0xf]
        %v310 = vld [vmem:[%s285 + $0x3c] sm:$0xf]
        %v311 = vld [vmem:[%s1] sm:$0xf]
        %v312 = vld [vmem:[%s1 + $0x4] sm:$0xf]
        %v313 = vld [vmem:[%s1 + $0x8] sm:$0xf]
        %v314 = vld [vmem:[%s1 + $0xc] sm:$0xf]
        %v315 = vld [vmem:[%s4] sm:$0x1]
        %v317 = vlaneseq
        %v318 = vshrl.u32 %v317, 7
        %v319 = vsub.s32 0, %v318
        %v320 = vrot.slane %v315, %v319
        %v338 = vunpack.c.l.b16 %v295
        %v339 = vunpack.c.l.b16 %v296
        %v340 = vunpack.c.l.b16 %v297
        %v341 = vunpack.c.l.b16 %v298
        %v342 = vunpack.c.l.b16 %v299
        %v343 = vunpack.c.l.b16 %v300
        %v344 = vunpack.c.l.b16 %v301
        %v345 = vunpack.c.l.b16 %v302
        %v346 = vunpack.c.l.b16 %v303
        %v347 = vunpack.c.l.b16 %v304
        %v348 = vunpack.c.l.b16 %v305
        %v349 = vunpack.c.l.b16 %v306
        %v350 = vunpack.c.l.b16 %v307
        %v351 = vunpack.c.l.b16 %v308
        %v352 = vunpack.c.l.b16 %v309
        %v353 = vunpack.c.l.b16 %v310
        %v354 = vpack.c.b16 %v339, %v338
        %v355 = vpack.c.b16 %v341, %v340
        %v356 = vpack.c.b16 %v343, %v342
        %v357 = vpack.c.b16 %v345, %v344
        %v358 = vpack.c.b16 %v347, %v346
        %v359 = vpack.c.b16 %v349, %v348
        %v360 = vpack.c.b16 %v351, %v350
        %v361 = vpack.c.b16 %v353, %v352
        %v366 = vunpack.c.l.b16 %v311
        %v367 = vunpack.c.l.b16 %v312
        %v368 = vunpack.c.l.b16 %v313
        %v369 = vunpack.c.l.b16 %v314
        %v370 = vpack.c.b16 %v367, %v366
        %v371 = vpack.c.b16 %v369, %v368
        %vm374 = vcmask 261120
        %v376 = vsel %vm374, %v354, 0
        %v379 = vsel %vm374, %v355, 0
        %v382 = vsel %vm374, %v356, 0
        %v385 = vsel %vm374, %v357, 0
        %v388 = vsel %vm374, %v358, 0
        %v391 = vsel %vm374, %v359, 0
        %v394 = vsel %vm374, %v360, 0
        %v397 = vsel %vm374, %v361, 0
        %399 = vmatprep.subr.bf16.mxu0 0
        %400 = vmatpush1.bf16.msra.mxu0 0
        %401 = vmatprep.subr.bf16.mxu0 0
        %402 = vmatpush1.bf16.msra.mxu0 0
        %403 = vmatprep.subr.bf16.mxu0 0
        %404 = vmatpush1.bf16.msra.mxu0 0
        %405 = vmatprep.subr.bf16.mxu0 0
        %406 = vmatpush1.bf16.msra.mxu0 0
        %407 = vmatprep.subr.bf16.mxu0 0
        %408 = vmatpush1.bf16.msra.mxu0 0
        %409 = vmatprep.subr.bf16.mxu0 0
        %410 = vmatpush1.bf16.msra.mxu0 0
        %411 = vmatprep.subr.bf16.mxu0 0
        %412 = vmatpush1.bf16.msra.mxu0 %v371
        %413 = vmatprep.subr.bf16.mxu0 0
        %414 = vmatpush1.bf16.msra.mxu0 %v370
        %415 = vmatprep.subr.bf16.mxu0 0
        %416 = vmatpush2.bf16.msra.mxu0 0
        %417 = vmatprep.subr.bf16.mxu0 0
        %418 = vmatpush2.bf16.msra.mxu0 0
        %419 = vmatprep.subr.bf16.mxu0 0
        %420 = vmatpush2.bf16.msra.mxu0 0
        %421 = vmatprep.subr.bf16.mxu0 0
        %422 = vmatpush2.bf16.msra.mxu0 0
        %423 = vmatprep.subr.bf16.mxu0 0
        %424 = vmatpush2.bf16.msra.mxu0 0
        %425 = vmatprep.subr.bf16.mxu0 0
        %426 = vmatpush2.bf16.msra.mxu0 0
        %427 = vmatprep.subr.bf16.mxu0 0
        %428 = vmatpush2.bf16.msra.mxu0 0
        %429 = vmatprep.subr.bf16.mxu0 0
        %430 = vmatpush2.bf16.msra.mxu0 0
        %431 = vmatprep.mubr.bf16.mxu0 0
        %432 = vmatmul.mubr.bf16.gmra.mxu0 %v376
        %v433 = vpop.f32.mrf.mxu0
        %v434 = vadd.f32 %v320, %v433
        %v435 = vpop.f32.mrf.mxu0
        %v436 = vpop.f32.mrf.mxu0
        %v437 = vadd.f32 %v320, %v436
        %v438 = vpop.f32.mrf.mxu0
        %439 = vmatprep.mubr.bf16.mxu0 0
        %440 = vmatmul.mubr.bf16.gmra.mxu0 %v379
        %v441 = vpop.f32.mrf.mxu0
        %v442 = vadd.f32 %v320, %v441
        %v443 = vpop.f32.mrf.mxu0
        %v444 = vpop.f32.mrf.mxu0
        %v445 = vadd.f32 %v320, %v444
        %v446 = vpop.f32.mrf.mxu0
        %447 = vmatprep.mubr.bf16.mxu0 0
        %448 = vmatmul.mubr.bf16.gmra.mxu0 %v382
        %v449 = vpop.f32.mrf.mxu0
        %v450 = vadd.f32 %v320, %v449
        %v451 = vpop.f32.mrf.mxu0
        %v452 = vpop.f32.mrf.mxu0
        %v453 = vadd.f32 %v320, %v452
        %v454 = vpop.f32.mrf.mxu0
        %455 = vmatprep.mubr.bf16.mxu0 0
        %456 = vmatmul.mubr.bf16.gmra.mxu0 %v385
        %v457 = vpop.f32.mrf.mxu0
        %v458 = vadd.f32 %v320, %v457
        %v459 = vpop.f32.mrf.mxu0
        %v460 = vpop.f32.mrf.mxu0
        %v461 = vadd.f32 %v320, %v460
        %v462 = vpop.f32.mrf.mxu0
        %463 = vmatprep.mubr.bf16.mxu0 0
        %464 = vmatmul.mubr.bf16.gmra.mxu0 %v388
        %v465 = vpop.f32.mrf.mxu0
        %v466 = vadd.f32 %v320, %v465
        %v467 = vpop.f32.mrf.mxu0
        %v468 = vpop.f32.mrf.mxu0
        %v469 = vadd.f32 %v320, %v468
        %v470 = vpop.f32.mrf.mxu0
        %471 = vmatprep.mubr.bf16.mxu0 0
        %472 = vmatmul.mubr.bf16.gmra.mxu0 %v391
        %v473 = vpop.f32.mrf.mxu0
        %v474 = vadd.f32 %v320, %v473
        %v475 = vpop.f32.mrf.mxu0
        %v476 = vpop.f32.mrf.mxu0
        %v477 = vadd.f32 %v320, %v476
        %v478 = vpop.f32.mrf.mxu0
        %479 = vmatprep.mubr.bf16.mxu0 0
        %480 = vmatmul.mubr.bf16.gmra.mxu0 %v394
        %v481 = vpop.f32.mrf.mxu0
        %v482 = vadd.f32 %v320, %v481
        %v483 = vpop.f32.mrf.mxu0
        %v484 = vpop.f32.mrf.mxu0
        %v485 = vadd.f32 %v320, %v484
        %v486 = vpop.f32.mrf.mxu0
        %487 = vmatprep.mubr.bf16.mxu0 0
        %488 = vmatmul.mubr.bf16.gmra.mxu0 %v397
        %v489 = vpop.f32.mrf.mxu0
        %v490 = vadd.f32 %v320, %v489
        %v491 = vpop.f32.mrf.mxu0
        %v492 = vpop.f32.mrf.mxu0
        %v493 = vadd.f32 %v320, %v492
        %v494 = vpop.f32.mrf.mxu0
        %495 = vdwg.mxu0
        %v496 = vmax.f32 %v434, 0.0
        %v497 = vmax.f32 %v437, 0.0
        %v498 = vmax.f32 %v442, 0.0
        %v499 = vmax.f32 %v445, 0.0
        %v500 = vmax.f32 %v450, 0.0
        %v501 = vmax.f32 %v453, 0.0
        %v502 = vmax.f32 %v458, 0.0
        %v503 = vmax.f32 %v461, 0.0
        %v504 = vmax.f32 %v466, 0.0
        %v505 = vmax.f32 %v469, 0.0
        %v506 = vmax.f32 %v474, 0.0
        %v507 = vmax.f32 %v477, 0.0
        %v508 = vmax.f32 %v482, 0.0
        %v509 = vmax.f32 %v485, 0.0
        %v510 = vmax.f32 %v490, 0.0
        %v511 = vmax.f32 %v493, 0.0
        %v512 = vmul.f32 %v496, 0.5
        %v513 = vmul.f32 %v497, 0.5
        %v514 = vmul.f32 %v498, 0.5
        %v515 = vmul.f32 %v499, 0.5
        %v516 = vmul.f32 %v500, 0.5
        %v517 = vmul.f32 %v501, 0.5
        %v518 = vmul.f32 %v502, 0.5
        %v519 = vmul.f32 %v503, 0.5
        %v520 = vmul.f32 %v504, 0.5
        %v521 = vmul.f32 %v505, 0.5
        %v522 = vmul.f32 %v506, 0.5
        %v523 = vmul.f32 %v507, 0.5
        %v524 = vmul.f32 %v508, 0.5
        %v525 = vmul.f32 %v509, 0.5
        %v526 = vmul.f32 %v510, 0.5
        %v527 = vmul.f32 %v511, 0.5
        %544 = vrot.lane.b32.xlu0 %v512, 64
        %v545 = vpop.permute.xlu0 %544
        %546 = vrot.lane.b32.xlu0 %v513, 64
        %v547 = vpop.permute.xlu0 %546
        %548 = vrot.lane.b32.xlu0 %v514, 64
        %v549 = vpop.permute.xlu0 %548
        %550 = vrot.lane.b32.xlu0 %v515, 64
        %v551 = vpop.permute.xlu0 %550
        %552 = vrot.lane.b32.xlu0 %v516, 64
        %v553 = vpop.permute.xlu0 %552
        %554 = vrot.lane.b32.xlu0 %v517, 64
        %v555 = vpop.permute.xlu0 %554
        %556 = vrot.lane.b32.xlu0 %v518, 64
        %v557 = vpop.permute.xlu0 %556
        %558 = vrot.lane.b32.xlu0 %v519, 64
        %v559 = vpop.permute.xlu0 %558
        %560 = vrot.lane.b32.xlu0 %v520, 64
        %v561 = vpop.permute.xlu0 %560
        %562 = vrot.lane.b32.xlu0 %v521, 64
        %v563 = vpop.permute.xlu0 %562
        %564 = vrot.lane.b32.xlu0 %v522, 64
        %v565 = vpop.permute.xlu0 %564
        %566 = vrot.lane.b32.xlu0 %v523, 64
        %v567 = vpop.permute.xlu0 %566
        %568 = vrot.lane.b32.xlu0 %v524, 64
        %v569 = vpop.permute.xlu0 %568
        %570 = vrot.lane.b32.xlu0 %v525, 64
        %v571 = vpop.permute.xlu0 %570
        %572 = vrot.lane.b32.xlu0 %v526, 64
        %v573 = vpop.permute.xlu0 %572
        %574 = vrot.lane.b32.xlu0 %v527, 64
        %v575 = vpop.permute.xlu0 %574
        %v592 = vadd.f32 %v512, %v545
        %v593 = vadd.f32 %v513, %v547
        %v594 = vadd.f32 %v514, %v549
        %v595 = vadd.f32 %v515, %v551
        %v596 = vadd.f32 %v516, %v553
        %v597 = vadd.f32 %v517, %v555
        %v598 = vadd.f32 %v518, %v557
        %v599 = vadd.f32 %v519, %v559
        %v600 = vadd.f32 %v520, %v561
        %v601 = vadd.f32 %v521, %v563
        %v602 = vadd.f32 %v522, %v565
        %v603 = vadd.f32 %v523, %v567
        %v604 = vadd.f32 %v524, %v569
        %v605 = vadd.f32 %v525, %v571
        %v606 = vadd.f32 %v526, %v573
        %v607 = vadd.f32 %v527, %v575
        %v608 = vld [vmem:[%s2 + $0x48] sm:$0xf]
        %v609 = vld [vmem:[%s2 + $0x4c] sm:$0xf]
        %v610 = vld [vmem:[%s2 + $0x50] sm:$0xf]
        %v611 = vld [vmem:[%s2 + $0x54] sm:$0xf]
        %v612 = vld [vmem:[%s2 + $0x58] sm:$0xf]
        %v613 = vld [vmem:[%s2 + $0x5c] sm:$0xf]
        %v614 = vld [vmem:[%s2 + $0x60] sm:$0xf]
        %v615 = vld [vmem:[%s2 + $0x64] sm:$0xf]
        %v616 = vpack.c.bf16 %v593, %v592
        %v617 = vpack.c.bf16 %v595, %v594
        %v618 = vpack.c.bf16 %v597, %v596
        %v619 = vpack.c.bf16 %v599, %v598
        %v620 = vpack.c.bf16 %v601, %v600
        %v621 = vpack.c.bf16 %v603, %v602
        %v622 = vpack.c.bf16 %v605, %v604
        %v623 = vpack.c.bf16 %v607, %v606
        %632 = vrot.lane.b32.xlu0 %v616, 64
        %v633 = vpop.permute.xlu0 %632
        %634 = vrot.lane.b32.xlu0 %v617, 64
        %v635 = vpop.permute.xlu0 %634
        %636 = vrot.lane.b32.xlu0 %v618, 64
        %v637 = vpop.permute.xlu0 %636
        %638 = vrot.lane.b32.xlu0 %v619, 64
        %v639 = vpop.permute.xlu0 %638
        %640 = vrot.lane.b32.xlu0 %v620, 64
        %v641 = vpop.permute.xlu0 %640
        %642 = vrot.lane.b32.xlu0 %v621, 64
        %v643 = vpop.permute.xlu0 %642
        %644 = vrot.lane.b32.xlu0 %v622, 64
        %v645 = vpop.permute.xlu0 %644
        %646 = vrot.lane.b32.xlu0 %v623, 64
        %v647 = vpop.permute.xlu0 %646
        %v656 = vunpack.c.l.b16 %v608
        %v657 = vunpack.c.l.b16 %v609
        %v658 = vunpack.c.l.b16 %v610
        %v659 = vunpack.c.l.b16 %v611
        %v660 = vunpack.c.l.b16 %v612
        %v661 = vunpack.c.l.b16 %v613
        %v662 = vunpack.c.l.b16 %v614
        %v663 = vunpack.c.l.b16 %v615
        %v664 = vpack.c.b16 %v657, %v656
        %v665 = vpack.c.b16 %v659, %v658
        %v666 = vpack.c.b16 %v661, %v660
        %v667 = vpack.c.b16 %v663, %v662
        %vm672 = vcmask 523264
        %v674 = vsel %vm672, %v633, 0
        %v677 = vsel %vm672, %v635, 0
        %v680 = vsel %vm672, %v637, 0
        %v683 = vsel %vm672, %v639, 0
        %v686 = vsel %vm672, %v641, 0
        %v689 = vsel %vm672, %v643, 0
        %v692 = vsel %vm672, %v645, 0
        %v695 = vsel %vm672, %v647, 0
        %697 = vmatprep.subr.bf16.mxu0 0
        %698 = vmatpush1.bf16.msra.mxu0 0
        %699 = vmatprep.subr.bf16.mxu0 0
        %700 = vmatpush1.bf16.msra.mxu0 0
        %701 = vmatprep.subr.bf16.mxu0 0
        %702 = vmatpush1.bf16.msra.mxu0 0
        %703 = vmatprep.subr.bf16.mxu0 0
        %704 = vmatpush1.bf16.msra.mxu0 0
        %705 = vmatprep.subr.bf16.mxu0 0
        %706 = vmatpush1.bf16.msra.mxu0 %v667
        %707 = vmatprep.subr.bf16.mxu0 0
        %708 = vmatpush1.bf16.msra.mxu0 %v666
        %709 = vmatprep.subr.bf16.mxu0 0
        %710 = vmatpush1.bf16.msra.mxu0 %v665
        %711 = vmatprep.subr.bf16.mxu0 0
        %712 = vmatpush1.bf16.msra.mxu0 %v664
        %713 = vmatprep.subr.bf16.mxu0 0
        %714 = vmatpush2.bf16.msra.mxu0 0
        %715 = vmatprep.subr.bf16.mxu0 0
        %716 = vmatpush2.bf16.msra.mxu0 0
        %717 = vmatprep.subr.bf16.mxu0 0
        %718 = vmatpush2.bf16.msra.mxu0 0
        %719 = vmatprep.subr.bf16.mxu0 0
        %720 = vmatpush2.bf16.msra.mxu0 0
        %721 = vmatprep.subr.bf16.mxu0 0
        %722 = vmatpush2.bf16.msra.mxu0 0
        %723 = vmatprep.subr.bf16.mxu0 0
        %724 = vmatpush2.bf16.msra.mxu0 0
        %725 = vmatprep.subr.bf16.mxu0 0
        %726 = vmatpush2.bf16.msra.mxu0 0
        %727 = vmatprep.subr.bf16.mxu0 0
        %728 = vmatpush2.bf16.msra.mxu0 0
        %729 = vmatprep.mubr.bf16.mxu0 0
        %730 = vmatmul.mubr.bf16.gmra.mxu0 %v674
        %v731 = vpop.f32.mrf.mxu0
        %v732 = vadd.f32 0.0, %v731
        %v733 = vpop.f32.mrf.mxu0
        %v734 = vpop.f32.mrf.mxu0
        %v735 = vadd.f32 0.0, %v734
        %v736 = vpop.f32.mrf.mxu0
        %737 = vmatprep.mubr.bf16.mxu0 0
        %738 = vmatmul.mubr.bf16.gmra.mxu0 %v677
        %v739 = vpop.f32.mrf.mxu0
        %v740 = vadd.f32 0.0, %v739
        %v741 = vpop.f32.mrf.mxu0
        %v742 = vpop.f32.mrf.mxu0
        %v743 = vadd.f32 0.0, %v742
        %v744 = vpop.f32.mrf.mxu0
        %745 = vmatprep.mubr.bf16.mxu0 0
        %746 = vmatmul.mubr.bf16.gmra.mxu0 %v680
        %v747 = vpop.f32.mrf.mxu0
        %v748 = vadd.f32 0.0, %v747
        %v749 = vpop.f32.mrf.mxu0
        %v750 = vpop.f32.mrf.mxu0
        %v751 = vadd.f32 0.0, %v750
        %v752 = vpop.f32.mrf.mxu0
        %753 = vmatprep.mubr.bf16.mxu0 0
        %754 = vmatmul.mubr.bf16.gmra.mxu0 %v683
        %v755 = vpop.f32.mrf.mxu0
        %v756 = vadd.f32 0.0, %v755
        %v757 = vpop.f32.mrf.mxu0
        %v758 = vpop.f32.mrf.mxu0
        %v759 = vadd.f32 0.0, %v758
        %v760 = vpop.f32.mrf.mxu0
        %761 = vmatprep.mubr.bf16.mxu0 0
        %762 = vmatmul.mubr.bf16.gmra.mxu0 %v686
        %v763 = vpop.f32.mrf.mxu0
        %v764 = vadd.f32 0.0, %v763
        %v765 = vpop.f32.mrf.mxu0
        %v766 = vpop.f32.mrf.mxu0
        %v767 = vadd.f32 0.0, %v766
        %v768 = vpop.f32.mrf.mxu0
        %769 = vmatprep.mubr.bf16.mxu0 0
        %770 = vmatmul.mubr.bf16.gmra.mxu0 %v689
        %v771 = vpop.f32.mrf.mxu0
        %v772 = vadd.f32 0.0, %v771
        %v773 = vpop.f32.mrf.mxu0
        %v774 = vpop.f32.mrf.mxu0
        %v775 = vadd.f32 0.0, %v774
        %v776 = vpop.f32.mrf.mxu0
        %777 = vmatprep.mubr.bf16.mxu0 0
        %778 = vmatmul.mubr.bf16.gmra.mxu0 %v692
        %v779 = vpop.f32.mrf.mxu0
        %v780 = vadd.f32 0.0, %v779
        %v781 = vpop.f32.mrf.mxu0
        %v782 = vpop.f32.mrf.mxu0
        %v783 = vadd.f32 0.0, %v782
        %v784 = vpop.f32.mrf.mxu0
        %785 = vmatprep.mubr.bf16.mxu0 0
        %786 = vmatmul.mubr.bf16.gmra.mxu0 %v695
        %v787 = vpop.f32.mrf.mxu0
        %v788 = vadd.f32 0.0, %v787
        %v789 = vpop.f32.mrf.mxu0
        %v790 = vpop.f32.mrf.mxu0
        %v791 = vadd.f32 0.0, %v790
        %v792 = vpop.f32.mrf.mxu0
        %793 = vdwg.mxu0
        %v794 = vmax.f32 %v732, 0.0
        %v795 = vmax.f32 %v735, 0.0
        %v796 = vmax.f32 %v740, 0.0
        %v797 = vmax.f32 %v743, 0.0
        %v798 = vmax.f32 %v748, 0.0
        %v799 = vmax.f32 %v751, 0.0
        %v800 = vmax.f32 %v756, 0.0
        %v801 = vmax.f32 %v759, 0.0
        %v802 = vmax.f32 %v764, 0.0
        %v803 = vmax.f32 %v767, 0.0
        %v804 = vmax.f32 %v772, 0.0
        %v805 = vmax.f32 %v775, 0.0
        %v806 = vmax.f32 %v780, 0.0
        %v807 = vmax.f32 %v783, 0.0
        %v808 = vmax.f32 %v788, 0.0
        %v809 = vmax.f32 %v791, 0.0
        %v810 = vld [vmem:[%s2] sm:$0xf]
        %v811 = vld [vmem:[%s2 + $0x4] sm:$0xf]
        %v812 = vld [vmem:[%s2 + $0x8] sm:$0xf]
        %v813 = vld [vmem:[%s2 + $0xc] sm:$0xf]
        %v814 = vld [vmem:[%s2 + $0x10] sm:$0xf]
        %v815 = vld [vmem:[%s2 + $0x14] sm:$0xf]
        %v816 = vld [vmem:[%s2 + $0x18] sm:$0xf]
        %v817 = vld [vmem:[%s2 + $0x1c] sm:$0xf]
        %v818 = vpack.c.bf16 %v497, %v496
        %v819 = vpack.c.bf16 %v499, %v498
        %v820 = vpack.c.bf16 %v501, %v500
        %v821 = vpack.c.bf16 %v503, %v502
        %v822 = vpack.c.bf16 %v505, %v504
        %v823 = vpack.c.bf16 %v507, %v506
        %v824 = vpack.c.bf16 %v509, %v508
        %v825 = vpack.c.bf16 %v511, %v510
        %v826 = vld [vmem:[%s4 + $0x1] sm:$0x1]
        %v828 = vlaneseq
        %v829 = vshrl.u32 %v828, 7
        %v830 = vsub.s32 0, %v829
        %v831 = vrot.slane %v826, %v830
        %v841 = vunpack.c.l.b16 %v810
        %v842 = vunpack.c.l.b16 %v811
        %v843 = vunpack.c.l.b16 %v812
        %v844 = vunpack.c.l.b16 %v813
        %v845 = vunpack.c.l.b16 %v814
        %v846 = vunpack.c.l.b16 %v815
        %v847 = vunpack.c.l.b16 %v816
        %v848 = vunpack.c.l.b16 %v817
        %v849 = vpack.c.b16 %v842, %v841
        %v850 = vpack.c.b16 %v844, %v843
        %v851 = vpack.c.b16 %v846, %v845
        %v852 = vpack.c.b16 %v848, %v847
        %v858 = vsel %vm672, %v818, 0
        %v861 = vsel %vm672, %v819, 0
        %v864 = vsel %vm672, %v820, 0
        %v867 = vsel %vm672, %v821, 0
        %v870 = vsel %vm672, %v822, 0
        %v873 = vsel %vm672, %v823, 0
        %v876 = vsel %vm672, %v824, 0
        %v879 = vsel %vm672, %v825, 0
        %881 = vmatprep.subr.bf16.mxu0 0
        %882 = vmatpush1.bf16.msra.mxu0 0
        %883 = vmatprep.subr.bf16.mxu0 0
        %884 = vmatpush1.bf16.msra.mxu0 0
        %885 = vmatprep.subr.bf16.mxu0 0
        %886 = vmatpush1.bf16.msra.mxu0 0
        %887 = vmatprep.subr.bf16.mxu0 0
        %888 = vmatpush1.bf16.msra.mxu0 0
        %889 = vmatprep.subr.bf16.mxu0 0
        %890 = vmatpush1.bf16.msra.mxu0 %v852
        %891 = vmatprep.subr.bf16.mxu0 0
        %892 = vmatpush1.bf16.msra.mxu0 %v851
        %893 = vmatprep.subr.bf16.mxu0 0
        %894 = vmatpush1.bf16.msra.mxu0 %v850
        %895 = vmatprep.subr.bf16.mxu0 0
        %896 = vmatpush1.bf16.msra.mxu0 %v849
        %897 = vmatprep.subr.bf16.mxu0 0
        %898 = vmatpush2.bf16.msra.mxu0 0
        %899 = vmatprep.subr.bf16.mxu0 0
        %900 = vmatpush2.bf16.msra.mxu0 0
        %901 = vmatprep.subr.bf16.mxu0 0
        %902 = vmatpush2.bf16.msra.mxu0 0
        %903 = vmatprep.subr.bf16.mxu0 0
        %904 = vmatpush2.bf16.msra.mxu0 0
        %905 = vmatprep.subr.bf16.mxu0 0
        %906 = vmatpush2.bf16.msra.mxu0 0
        %907 = vmatprep.subr.bf16.mxu0 0
        %908 = vmatpush2.bf16.msra.mxu0 0
        %909 = vmatprep.subr.bf16.mxu0 0
        %910 = vmatpush2.bf16.msra.mxu0 0
        %911 = vmatprep.subr.bf16.mxu0 0
        %912 = vmatpush2.bf16.msra.mxu0 0
        %913 = vmatprep.mubr.bf16.mxu0 0
        %914 = vmatmul.mubr.bf16.gmra.mxu0 %v858
        %v915 = vpop.f32.mrf.mxu0
        %v916 = vadd.f32 %v831, %v915
        %v917 = vpop.f32.mrf.mxu0
        %v918 = vpop.f32.mrf.mxu0
        %v919 = vadd.f32 %v831, %v918
        %v920 = vpop.f32.mrf.mxu0
        %921 = vmatprep.mubr.bf16.mxu0 0
        %922 = vmatmul.mubr.bf16.gmra.mxu0 %v861
        %v923 = vpop.f32.mrf.mxu0
        %v924 = vadd.f32 %v831, %v923
        %v925 = vpop.f32.mrf.mxu0
        %v926 = vpop.f32.mrf.mxu0
        %v927 = vadd.f32 %v831, %v926
        %v928 = vpop.f32.mrf.mxu0
        %929 = vmatprep.mubr.bf16.mxu0 0
        %930 = vmatmul.mubr.bf16.gmra.mxu0 %v864
        %v931 = vpop.f32.mrf.mxu0
        %v932 = vadd.f32 %v831, %v931
        %v933 = vpop.f32.mrf.mxu0
        %v934 = vpop.f32.mrf.mxu0
        %v935 = vadd.f32 %v831, %v934
        %v936 = vpop.f32.mrf.mxu0
        %937 = vmatprep.mubr.bf16.mxu0 0
        %938 = vmatmul.mubr.bf16.gmra.mxu0 %v867
        %v939 = vpop.f32.mrf.mxu0
        %v940 = vadd.f32 %v831, %v939
        %v941 = vpop.f32.mrf.mxu0
        %v942 = vpop.f32.mrf.mxu0
        %v943 = vadd.f32 %v831, %v942
        %v944 = vpop.f32.mrf.mxu0
        %945 = vmatprep.mubr.bf16.mxu0 0
        %946 = vmatmul.mubr.bf16.gmra.mxu0 %v870
        %v947 = vpop.f32.mrf.mxu0
        %v948 = vadd.f32 %v831, %v947
        %v949 = vpop.f32.mrf.mxu0
        %v950 = vpop.f32.mrf.mxu0
        %v951 = vadd.f32 %v831, %v950
        %v952 = vpop.f32.mrf.mxu0
        %953 = vmatprep.mubr.bf16.mxu0 0
        %954 = vmatmul.mubr.bf16.gmra.mxu0 %v873
        %v955 = vpop.f32.mrf.mxu0
        %v956 = vadd.f32 %v831, %v955
        %v957 = vpop.f32.mrf.mxu0
        %v958 = vpop.f32.mrf.mxu0
        %v959 = vadd.f32 %v831, %v958
        %v960 = vpop.f32.mrf.mxu0
        %961 = vmatprep.mubr.bf16.mxu0 0
        %962 = vmatmul.mubr.bf16.gmra.mxu0 %v876
        %v963 = vpop.f32.mrf.mxu0
        %v964 = vadd.f32 %v831, %v963
        %v965 = vpop.f32.mrf.mxu0
        %v966 = vpop.f32.mrf.mxu0
        %v967 = vadd.f32 %v831, %v966
        %v968 = vpop.f32.mrf.mxu0
        %969 = vmatprep.mubr.bf16.mxu0 0
        %970 = vmatmul.mubr.bf16.gmra.mxu0 %v879
        %v971 = vpop.f32.mrf.mxu0
        %v972 = vadd.f32 %v831, %v971
        %v973 = vpop.f32.mrf.mxu0
        %v974 = vpop.f32.mrf.mxu0
        %v975 = vadd.f32 %v831, %v974
        %v976 = vpop.f32.mrf.mxu0
        %977 = vdwg.mxu0
        %v978 = vmax.f32 %v916, 0.0
        %v979 = vmax.f32 %v919, 0.0
        %v980 = vmax.f32 %v924, 0.0
        %v981 = vmax.f32 %v927, 0.0
        %v982 = vmax.f32 %v932, 0.0
        %v983 = vmax.f32 %v935, 0.0
        %v984 = vmax.f32 %v940, 0.0
        %v985 = vmax.f32 %v943, 0.0
        %v986 = vmax.f32 %v948, 0.0
        %v987 = vmax.f32 %v951, 0.0
        %v988 = vmax.f32 %v956, 0.0
        %v989 = vmax.f32 %v959, 0.0
        %v990 = vmax.f32 %v964, 0.0
        %v991 = vmax.f32 %v967, 0.0
        %v992 = vmax.f32 %v972, 0.0
        %v993 = vmax.f32 %v975, 0.0
        %v994 = vmul.f32 %v794, 0.5
        %v995 = vmul.f32 %v795, 0.5
        %v996 = vmul.f32 %v796, 0.5
        %v997 = vmul.f32 %v797, 0.5
        %v998 = vmul.f32 %v798, 0.5
        %v999 = vmul.f32 %v799, 0.5
        %v1000 = vmul.f32 %v800, 0.5
        %v1001 = vmul.f32 %v801, 0.5
        %v1002 = vmul.f32 %v802, 0.5
        %v1003 = vmul.f32 %v803, 0.5
        %v1004 = vmul.f32 %v804, 0.5
        %v1005 = vmul.f32 %v805, 0.5
        %v1006 = vmul.f32 %v806, 0.5
        %v1007 = vmul.f32 %v807, 0.5
        %v1008 = vmul.f32 %v808, 0.5
        %v1009 = vmul.f32 %v809, 0.5
        %v1010 = vmul.f32 %v978, 0.5
        %v1011 = vmul.f32 %v979, 0.5
        %v1012 = vmul.f32 %v980, 0.5
        %v1013 = vmul.f32 %v981, 0.5
        %v1014 = vmul.f32 %v982, 0.5
        %v1015 = vmul.f32 %v983, 0.5
        %v1016 = vmul.f32 %v984, 0.5
        %v1017 = vmul.f32 %v985, 0.5
        %v1018 = vmul.f32 %v986, 0.5
        %v1019 = vmul.f32 %v987, 0.5
        %v1020 = vmul.f32 %v988, 0.5
        %v1021 = vmul.f32 %v989, 0.5
        %v1022 = vmul.f32 %v990, 0.5
        %v1023 = vmul.f32 %v991, 0.5
        %v1024 = vmul.f32 %v992, 0.5
        %v1025 = vmul.f32 %v993, 0.5
        %v1026 = vadd.f32 %v994, %v1010
        %v1027 = vadd.f32 %v995, %v1011
        %v1028 = vadd.f32 %v996, %v1012
        %v1029 = vadd.f32 %v997, %v1013
        %v1030 = vadd.f32 %v998, %v1014
        %v1031 = vadd.f32 %v999, %v1015
        %v1032 = vadd.f32 %v1000, %v1016
        %v1033 = vadd.f32 %v1001, %v1017
        %v1034 = vadd.f32 %v1002, %v1018
        %v1035 = vadd.f32 %v1003, %v1019
        %v1036 = vadd.f32 %v1004, %v1020
        %v1037 = vadd.f32 %v1005, %v1021
        %v1038 = vadd.f32 %v1006, %v1022
        %v1039 = vadd.f32 %v1007, %v1023
        %v1040 = vadd.f32 %v1008, %v1024
        %v1041 = vadd.f32 %v1009, %v1025
        %v1042 = vld [vmem:[%s2 + $0x68] sm:$0xf]
        %v1043 = vld [vmem:[%s2 + $0x6c] sm:$0xf]
        %v1044 = vld [vmem:[%s2 + $0x70] sm:$0xf]
        %v1045 = vld [vmem:[%s2 + $0x74] sm:$0xf]
        %v1046 = vpack.c.bf16 %v1027, %v1026
        %v1047 = vpack.c.bf16 %v1029, %v1028
        %v1048 = vpack.c.bf16 %v1031, %v1030
        %v1049 = vpack.c.bf16 %v1033, %v1032
        %v1050 = vpack.c.bf16 %v1035, %v1034
        %v1051 = vpack.c.bf16 %v1037, %v1036
        %v1052 = vpack.c.bf16 %v1039, %v1038
        %v1053 = vpack.c.bf16 %v1041, %v1040
        %v1058 = vunpack.c.l.b16 %v1042
        %v1059 = vunpack.c.l.b16 %v1043
        %v1060 = vunpack.c.l.b16 %v1044
        %v1061 = vunpack.c.l.b16 %v1045
        %v1062 = vpack.c.b16 %v1059, %v1058
        %v1063 = vpack.c.b16 %v1061, %v1060
        %v1067 = vsel %vm374, %v1046, 0
        %v1070 = vsel %vm374, %v1047, 0
        %v1073 = vsel %vm374, %v1048, 0
        %v1076 = vsel %vm374, %v1049, 0
        %v1079 = vsel %vm374, %v1050, 0
        %v1082 = vsel %vm374, %v1051, 0
        %v1085 = vsel %vm374, %v1052, 0
        %v1088 = vsel %vm374, %v1053, 0
        %1090 = vmatprep.subr.bf16.mxu0 0
        %1091 = vmatpush1.bf16.msra.mxu0 0
        %1092 = vmatprep.subr.bf16.mxu0 0
        %1093 = vmatpush1.bf16.msra.mxu0 0
        %1094 = vmatprep.subr.bf16.mxu0 0
        %1095 = vmatpush1.bf16.msra.mxu0 0
        %1096 = vmatprep.subr.bf16.mxu0 0
        %1097 = vmatpush1.bf16.msra.mxu0 0
        %1098 = vmatprep.subr.bf16.mxu0 0
        %1099 = vmatpush1.bf16.msra.mxu0 0
        %1100 = vmatprep.subr.bf16.mxu0 0
        %1101 = vmatpush1.bf16.msra.mxu0 0
        %1102 = vmatprep.subr.bf16.mxu0 0
        %1103 = vmatpush1.bf16.msra.mxu0 %v1063
        %1104 = vmatprep.subr.bf16.mxu0 0
        %1105 = vmatpush1.bf16.msra.mxu0 %v1062
        %1106 = vmatprep.subr.bf16.mxu0 0
        %1107 = vmatpush2.bf16.msra.mxu0 0
        %1108 = vmatprep.subr.bf16.mxu0 0
        %1109 = vmatpush2.bf16.msra.mxu0 0
        %1110 = vmatprep.subr.bf16.mxu0 0
        %1111 = vmatpush2.bf16.msra.mxu0 0
        %1112 = vmatprep.subr.bf16.mxu0 0
        %1113 = vmatpush2.bf16.msra.mxu0 0
        %1114 = vmatprep.subr.bf16.mxu0 0
        %1115 = vmatpush2.bf16.msra.mxu0 0
        %1116 = vmatprep.subr.bf16.mxu0 0
        %1117 = vmatpush2.bf16.msra.mxu0 0
        %1118 = vmatprep.subr.bf16.mxu0 0
        %1119 = vmatpush2.bf16.msra.mxu0 0
        %1120 = vmatprep.subr.bf16.mxu0 0
        %1121 = vmatpush2.bf16.msra.mxu0 0
        %1122 = vmatprep.mubr.bf16.mxu0 0
        %1123 = vmatmul.mubr.bf16.gmra.mxu0 %v1067
        %v1124 = vpop.f32.mrf.mxu0
        %v1125 = vadd.f32 0.0, %v1124
        %v1126 = vpop.f32.mrf.mxu0
        %v1127 = vpop.f32.mrf.mxu0
        %v1128 = vadd.f32 0.0, %v1127
        %v1129 = vpop.f32.mrf.mxu0
        %1130 = vmatprep.mubr.bf16.mxu0 0
        %1131 = vmatmul.mubr.bf16.gmra.mxu0 %v1070
        %v1132 = vpop.f32.mrf.mxu0
        %v1133 = vadd.f32 0.0, %v1132
        %v1134 = vpop.f32.mrf.mxu0
        %v1135 = vpop.f32.mrf.mxu0
        %v1136 = vadd.f32 0.0, %v1135
        %v1137 = vpop.f32.mrf.mxu0
        %1138 = vmatprep.mubr.bf16.mxu0 0
        %1139 = vmatmul.mubr.bf16.gmra.mxu0 %v1073
        %v1140 = vpop.f32.mrf.mxu0
        %v1141 = vadd.f32 0.0, %v1140
        %v1142 = vpop.f32.mrf.mxu0
        %v1143 = vpop.f32.mrf.mxu0
        %v1144 = vadd.f32 0.0, %v1143
        %v1145 = vpop.f32.mrf.mxu0
        %1146 = vmatprep.mubr.bf16.mxu0 0
        %1147 = vmatmul.mubr.bf16.gmra.mxu0 %v1076
        %v1148 = vpop.f32.mrf.mxu0
        %v1149 = vadd.f32 0.0, %v1148
        %v1150 = vpop.f32.mrf.mxu0
        %v1151 = vpop.f32.mrf.mxu0
        %v1152 = vadd.f32 0.0, %v1151
        %v1153 = vpop.f32.mrf.mxu0
        %1154 = vmatprep.mubr.bf16.mxu0 0
        %1155 = vmatmul.mubr.bf16.gmra.mxu0 %v1079
        %v1156 = vpop.f32.mrf.mxu0
        %v1157 = vadd.f32 0.0, %v1156
        %v1158 = vpop.f32.mrf.mxu0
        %v1159 = vpop.f32.mrf.mxu0
        %v1160 = vadd.f32 0.0, %v1159
        %v1161 = vpop.f32.mrf.mxu0
        %1162 = vmatprep.mubr.bf16.mxu0 0
        %1163 = vmatmul.mubr.bf16.gmra.mxu0 %v1082
        %v1164 = vpop.f32.mrf.mxu0
        %v1165 = vadd.f32 0.0, %v1164
        %v1166 = vpop.f32.mrf.mxu0
        %v1167 = vpop.f32.mrf.mxu0
        %v1168 = vadd.f32 0.0, %v1167
        %v1169 = vpop.f32.mrf.mxu0
        %1170 = vmatprep.mubr.bf16.mxu0 0
        %1171 = vmatmul.mubr.bf16.gmra.mxu0 %v1085
        %v1172 = vpop.f32.mrf.mxu0
        %v1173 = vadd.f32 0.0, %v1172
        %v1174 = vpop.f32.mrf.mxu0
        %v1175 = vpop.f32.mrf.mxu0
        %v1176 = vadd.f32 0.0, %v1175
        %v1177 = vpop.f32.mrf.mxu0
        %1178 = vmatprep.mubr.bf16.mxu0 0
        %1179 = vmatmul.mubr.bf16.gmra.mxu0 %v1088
        %v1180 = vpop.f32.mrf.mxu0
        %v1181 = vadd.f32 0.0, %v1180
        %v1182 = vpop.f32.mrf.mxu0
        %v1183 = vpop.f32.mrf.mxu0
        %v1184 = vadd.f32 0.0, %v1183
        %v1185 = vpop.f32.mrf.mxu0
        %1186 = vdwg.mxu0
        %v1187 = vmax.f32 %v1125, 0.0
        %v1188 = vmax.f32 %v1128, 0.0
        %v1189 = vmax.f32 %v1133, 0.0
        %v1190 = vmax.f32 %v1136, 0.0
        %v1191 = vmax.f32 %v1141, 0.0
        %v1192 = vmax.f32 %v1144, 0.0
        %v1193 = vmax.f32 %v1149, 0.0
        %v1194 = vmax.f32 %v1152, 0.0
        %v1195 = vmax.f32 %v1157, 0.0
        %v1196 = vmax.f32 %v1160, 0.0
        %v1197 = vmax.f32 %v1165, 0.0
        %v1198 = vmax.f32 %v1168, 0.0
        %v1199 = vmax.f32 %v1173, 0.0
        %v1200 = vmax.f32 %v1176, 0.0
        %v1201 = vmax.f32 %v1181, 0.0
        %v1202 = vmax.f32 %v1184, 0.0
        %v1203 = vld [vmem:[%s2 + $0x20] sm:$0xf]
        %v1204 = vld [vmem:[%s2 + $0x24] sm:$0xf]
        %v1205 = vld [vmem:[%s2 + $0x28] sm:$0xf]
        %v1206 = vld [vmem:[%s2 + $0x2c] sm:$0xf]
        %v1207 = vpack.c.bf16 %v979, %v978
        %v1208 = vpack.c.bf16 %v981, %v980
        %v1209 = vpack.c.bf16 %v983, %v982
        %v1210 = vpack.c.bf16 %v985, %v984
        %v1211 = vpack.c.bf16 %v987, %v986
        %v1212 = vpack.c.bf16 %v989, %v988
        %v1213 = vpack.c.bf16 %v991, %v990
        %v1214 = vpack.c.bf16 %v993, %v992
        %v1215 = vld [vmem:[%s4 + $0x2] sm:$0x1]
        %v1217 = vlaneseq
        %v1218 = vshrl.u32 %v1217, 7
        %v1219 = vsub.s32 0, %v1218
        %v1220 = vrot.slane %v1215, %v1219
        %v1226 = vunpack.c.l.b16 %v1203
        %v1227 = vunpack.c.l.b16 %v1204
        %v1228 = vunpack.c.l.b16 %v1205
        %v1229 = vunpack.c.l.b16 %v1206
        %v1230 = vpack.c.b16 %v1227, %v1226
        %v1231 = vpack.c.b16 %v1229, %v1228
        %v1235 = vsel %vm374, %v1207, 0
        %v1238 = vsel %vm374, %v1208, 0
        %v1241 = vsel %vm374, %v1209, 0
        %v1244 = vsel %vm374, %v1210, 0
        %v1247 = vsel %vm374, %v1211, 0
        %v1250 = vsel %vm374, %v1212, 0
        %v1253 = vsel %vm374, %v1213, 0
        %v1256 = vsel %vm374, %v1214, 0
        %1258 = vmatprep.subr.bf16.mxu0 0
        %1259 = vmatpush1.bf16.msra.mxu0 0
        %1260 = vmatprep.subr.bf16.mxu0 0
        %1261 = vmatpush1.bf16.msra.mxu0 0
        %1262 = vmatprep.subr.bf16.mxu0 0
        %1263 = vmatpush1.bf16.msra.mxu0 0
        %1264 = vmatprep.subr.bf16.mxu0 0
        %1265 = vmatpush1.bf16.msra.mxu0 0
        %1266 = vmatprep.subr.bf16.mxu0 0
        %1267 = vmatpush1.bf16.msra.mxu0 0
        %1268 = vmatprep.subr.bf16.mxu0 0
        %1269 = vmatpush1.bf16.msra.mxu0 0
        %1270 = vmatprep.subr.bf16.mxu0 0
        %1271 = vmatpush1.bf16.msra.mxu0 %v1231
        %1272 = vmatprep.subr.bf16.mxu0 0
        %1273 = vmatpush1.bf16.msra.mxu0 %v1230
        %1274 = vmatprep.subr.bf16.mxu0 0
        %1275 = vmatpush2.bf16.msra.mxu0 0
        %1276 = vmatprep.subr.bf16.mxu0 0
        %1277 = vmatpush2.bf16.msra.mxu0 0
        %1278 = vmatprep.subr.bf16.mxu0 0
        %1279 = vmatpush2.bf16.msra.mxu0 0
        %1280 = vmatprep.subr.bf16.mxu0 0
        %1281 = vmatpush2.bf16.msra.mxu0 0
        %1282 = vmatprep.subr.bf16.mxu0 0
        %1283 = vmatpush2.bf16.msra.mxu0 0
        %1284 = vmatprep.subr.bf16.mxu0 0
        %1285 = vmatpush2.bf16.msra.mxu0 0
        %1286 = vmatprep.subr.bf16.mxu0 0
        %1287 = vmatpush2.bf16.msra.mxu0 0
        %1288 = vmatprep.subr.bf16.mxu0 0
        %1289 = vmatpush2.bf16.msra.mxu0 0
        %1290 = vmatprep.mubr.bf16.mxu0 0
        %1291 = vmatmul.mubr.bf16.gmra.mxu0 %v1235
        %v1292 = vpop.f32.mrf.mxu0
        %v1293 = vadd.f32 %v1220, %v1292
        %v1294 = vpop.f32.mrf.mxu0
        %v1295 = vpop.f32.mrf.mxu0
        %v1296 = vadd.f32 %v1220, %v1295
        %v1297 = vpop.f32.mrf.mxu0
        %1298 = vmatprep.mubr.bf16.mxu0 0
        %1299 = vmatmul.mubr.bf16.gmra.mxu0 %v1238
        %v1300 = vpop.f32.mrf.mxu0
        %v1301 = vadd.f32 %v1220, %v1300
        %v1302 = vpop.f32.mrf.mxu0
        %v1303 = vpop.f32.mrf.mxu0
        %v1304 = vadd.f32 %v1220, %v1303
        %v1305 = vpop.f32.mrf.mxu0
        %1306 = vmatprep.mubr.bf16.mxu0 0
        %1307 = vmatmul.mubr.bf16.gmra.mxu0 %v1241
        %v1308 = vpop.f32.mrf.mxu0
        %v1309 = vadd.f32 %v1220, %v1308
        %v1310 = vpop.f32.mrf.mxu0
        %v1311 = vpop.f32.mrf.mxu0
        %v1312 = vadd.f32 %v1220, %v1311
        %v1313 = vpop.f32.mrf.mxu0
        %1314 = vmatprep.mubr.bf16.mxu0 0
        %1315 = vmatmul.mubr.bf16.gmra.mxu0 %v1244
        %v1316 = vpop.f32.mrf.mxu0
        %v1317 = vadd.f32 %v1220, %v1316
        %v1318 = vpop.f32.mrf.mxu0
        %v1319 = vpop.f32.mrf.mxu0
        %v1320 = vadd.f32 %v1220, %v1319
        %v1321 = vpop.f32.mrf.mxu0
        %1322 = vmatprep.mubr.bf16.mxu0 0
        %1323 = vmatmul.mubr.bf16.gmra.mxu0 %v1247
        %v1324 = vpop.f32.mrf.mxu0
        %v1325 = vadd.f32 %v1220, %v1324
        %v1326 = vpop.f32.mrf.mxu0
        %v1327 = vpop.f32.mrf.mxu0
        %v1328 = vadd.f32 %v1220, %v1327
        %v1329 = vpop.f32.mrf.mxu0
        %1330 = vmatprep.mubr.bf16.mxu0 0
        %1331 = vmatmul.mubr.bf16.gmra.mxu0 %v1250
        %v1332 = vpop.f32.mrf.mxu0
        %v1333 = vadd.f32 %v1220, %v1332
        %v1334 = vpop.f32.mrf.mxu0
        %v1335 = vpop.f32.mrf.mxu0
        %v1336 = vadd.f32 %v1220, %v1335
        %v1337 = vpop.f32.mrf.mxu0
        %1338 = vmatprep.mubr.bf16.mxu0 0
        %1339 = vmatmul.mubr.bf16.gmra.mxu0 %v1253
        %v1340 = vpop.f32.mrf.mxu0
        %v1341 = vadd.f32 %v1220, %v1340
        %v1342 = vpop.f32.mrf.mxu0
        %v1343 = vpop.f32.mrf.mxu0
        %v1344 = vadd.f32 %v1220, %v1343
        %v1345 = vpop.f32.mrf.mxu0
        %1346 = vmatprep.mubr.bf16.mxu0 0
        %1347 = vmatmul.mubr.bf16.gmra.mxu0 %v1256
        %v1348 = vpop.f32.mrf.mxu0
        %v1349 = vadd.f32 %v1220, %v1348
        %v1350 = vpop.f32.mrf.mxu0
        %v1351 = vpop.f32.mrf.mxu0
        %v1352 = vadd.f32 %v1220, %v1351
        %v1353 = vpop.f32.mrf.mxu0
        %1354 = vdwg.mxu0
        %v1355 = vmul.f32 %v1187, 0.5
        %v1356 = vmul.f32 %v1188, 0.5
        %v1357 = vmul.f32 %v1189, 0.5
        %v1358 = vmul.f32 %v1190, 0.5
        %v1359 = vmul.f32 %v1191, 0.5
        %v1360 = vmul.f32 %v1192, 0.5
        %v1361 = vmul.f32 %v1193, 0.5
        %v1362 = vmul.f32 %v1194, 0.5
        %v1363 = vmul.f32 %v1195, 0.5
        %v1364 = vmul.f32 %v1196, 0.5
        %v1365 = vmul.f32 %v1197, 0.5
        %v1366 = vmul.f32 %v1198, 0.5
        %v1367 = vmul.f32 %v1199, 0.5
        %v1368 = vmul.f32 %v1200, 0.5
        %v1369 = vmul.f32 %v1201, 0.5
        %v1370 = vmul.f32 %v1202, 0.5
        %v1371 = vmul.f32 %v1293, 0.5
        %v1372 = vmul.f32 %v1296, 0.5
        %v1373 = vmul.f32 %v1301, 0.5
        %v1374 = vmul.f32 %v1304, 0.5
        %v1375 = vmul.f32 %v1309, 0.5
        %v1376 = vmul.f32 %v1312, 0.5
        %v1377 = vmul.f32 %v1317, 0.5
        %v1378 = vmul.f32 %v1320, 0.5
        %v1379 = vmul.f32 %v1325, 0.5
        %v1380 = vmul.f32 %v1328, 0.5
        %v1381 = vmul.f32 %v1333, 0.5
        %v1382 = vmul.f32 %v1336, 0.5
        %v1383 = vmul.f32 %v1341, 0.5
        %v1384 = vmul.f32 %v1344, 0.5
        %v1385 = vmul.f32 %v1349, 0.5
        %v1386 = vmul.f32 %v1352, 0.5
        %v1387 = vadd.f32 %v1355, %v1371
        %v1388 = vadd.f32 %v1356, %v1372
        %v1389 = vadd.f32 %v1357, %v1373
        %v1390 = vadd.f32 %v1358, %v1374
        %v1391 = vadd.f32 %v1359, %v1375
        %v1392 = vadd.f32 %v1360, %v1376
        %v1393 = vadd.f32 %v1361, %v1377
        %v1394 = vadd.f32 %v1362, %v1378
        %v1395 = vadd.f32 %v1363, %v1379
        %v1396 = vadd.f32 %v1364, %v1380
        %v1397 = vadd.f32 %v1365, %v1381
        %v1398 = vadd.f32 %v1366, %v1382
        %v1399 = vadd.f32 %v1367, %v1383
        %v1400 = vadd.f32 %v1368, %v1384
        %v1401 = vadd.f32 %v1369, %v1385
        %v1402 = vadd.f32 %v1370, %v1386
        %v1403 = vld [vmem:[%s2 + $0x78] sm:$0xf]
        %v1404 = vld [vmem:[%s2 + $0x7c] sm:$0xf]
        %v1405 = vpack.c.bf16 %v1388, %v1387
        %v1406 = vpack.c.bf16 %v1390, %v1389
        %v1407 = vpack.c.bf16 %v1392, %v1391
        %v1408 = vpack.c.bf16 %v1394, %v1393
        %v1409 = vpack.c.bf16 %v1396, %v1395
        %v1410 = vpack.c.bf16 %v1398, %v1397
        %v1411 = vpack.c.bf16 %v1400, %v1399
        %v1412 = vpack.c.bf16 %v1402, %v1401
        %v1415 = vunpack.c.l.b16 %v1403
        %v1416 = vunpack.c.l.b16 %v1404
        %v1417 = vpack.c.b16 %v1416, %v1415
        %vm1419 = vcmask 130048
        %v1421 = vsel %vm1419, %v1405, 0
        %v1424 = vsel %vm1419, %v1406, 0
        %v1427 = vsel %vm1419, %v1407, 0
        %v1430 = vsel %vm1419, %v1408, 0
        %v1433 = vsel %vm1419, %v1409, 0
        %v1436 = vsel %vm1419, %v1410, 0
        %v1439 = vsel %vm1419, %v1411, 0
        %v1442 = vsel %vm1419, %v1412, 0
        %1444 = vmatprep.subr.bf16.mxu0 0
        %1445 = vmatpush1.bf16.msra.mxu0 0
        %1446 = vmatprep.subr.bf16.mxu0 0
        %1447 = vmatpush1.bf16.msra.mxu0 0
        %1448 = vmatprep.subr.bf16.mxu0 0
        %1449 = vmatpush1.bf16.msra.mxu0 0
        %1450 = vmatprep.subr.bf16.mxu0 0
        %1451 = vmatpush1.bf16.msra.mxu0 0
        %1452 = vmatprep.subr.bf16.mxu0 0
        %1453 = vmatpush1.bf16.msra.mxu0 0
        %1454 = vmatprep.subr.bf16.mxu0 0
        %1455 = vmatpush1.bf16.msra.mxu0 0
        %1456 = vmatprep.subr.bf16.mxu0 0
        %1457 = vmatpush1.bf16.msra.mxu0 0
        %1458 = vmatprep.subr.bf16.mxu0 0
        %1459 = vmatpush1.bf16.msra.mxu0 %v1417
        %1460 = vmatprep.subr.bf16.mxu0 0
        %1461 = vmatpush2.bf16.msra.mxu0 0
        %1462 = vmatprep.subr.bf16.mxu0 0
        %1463 = vmatpush2.bf16.msra.mxu0 0
        %1464 = vmatprep.subr.bf16.mxu0 0
        %1465 = vmatpush2.bf16.msra.mxu0 0
        %1466 = vmatprep.subr.bf16.mxu0 0
        %1467 = vmatpush2.bf16.msra.mxu0 0
        %1468 = vmatprep.subr.bf16.mxu0 0
        %1469 = vmatpush2.bf16.msra.mxu0 0
        %1470 = vmatprep.subr.bf16.mxu0 0
        %1471 = vmatpush2.bf16.msra.mxu0 0
        %1472 = vmatprep.subr.bf16.mxu0 0
        %1473 = vmatpush2.bf16.msra.mxu0 0
        %1474 = vmatprep.subr.bf16.mxu0 0
        %1475 = vmatpush2.bf16.msra.mxu0 0
        %1476 = vmatprep.mubr.bf16.mxu0 0
        %1477 = vmatmul.mubr.bf16.gmra.mxu0 %v1421
        %v1478 = vpop.f32.mrf.mxu0
        %v1479 = vadd.f32 0.0, %v1478
        %v1480 = vpop.f32.mrf.mxu0
        %v1481 = vpop.f32.mrf.mxu0
        %v1482 = vadd.f32 0.0, %v1481
        %v1483 = vpop.f32.mrf.mxu0
        %1484 = vmatprep.mubr.bf16.mxu0 0
        %1485 = vmatmul.mubr.bf16.gmra.mxu0 %v1424
        %v1486 = vpop.f32.mrf.mxu0
        %v1487 = vadd.f32 0.0, %v1486
        %v1488 = vpop.f32.mrf.mxu0
        %v1489 = vpop.f32.mrf.mxu0
        %v1490 = vadd.f32 0.0, %v1489
        %v1491 = vpop.f32.mrf.mxu0
        %1492 = vmatprep.mubr.bf16.mxu0 0
        %1493 = vmatmul.mubr.bf16.gmra.mxu0 %v1427
        %v1494 = vpop.f32.mrf.mxu0
        %v1495 = vadd.f32 0.0, %v1494
        %v1496 = vpop.f32.mrf.mxu0
        %v1497 = vpop.f32.mrf.mxu0
        %v1498 = vadd.f32 0.0, %v1497
        %v1499 = vpop.f32.mrf.mxu0
        %1500 = vmatprep.mubr.bf16.mxu0 0
        %1501 = vmatmul.mubr.bf16.gmra.mxu0 %v1430
        %v1502 = vpop.f32.mrf.mxu0
        %v1503 = vadd.f32 0.0, %v1502
        %v1504 = vpop.f32.mrf.mxu0
        %v1505 = vpop.f32.mrf.mxu0
        %v1506 = vadd.f32 0.0, %v1505
        %v1507 = vpop.f32.mrf.mxu0
        %1508 = vmatprep.mubr.bf16.mxu0 0
        %1509 = vmatmul.mubr.bf16.gmra.mxu0 %v1433
        %v1510 = vpop.f32.mrf.mxu0
        %v1511 = vadd.f32 0.0, %v1510
        %v1512 = vpop.f32.mrf.mxu0
        %v1513 = vpop.f32.mrf.mxu0
        %v1514 = vadd.f32 0.0, %v1513
        %v1515 = vpop.f32.mrf.mxu0
        %1516 = vmatprep.mubr.bf16.mxu0 0
        %1517 = vmatmul.mubr.bf16.gmra.mxu0 %v1436
        %v1518 = vpop.f32.mrf.mxu0
        %v1519 = vadd.f32 0.0, %v1518
        %v1520 = vpop.f32.mrf.mxu0
        %v1521 = vpop.f32.mrf.mxu0
        %v1522 = vadd.f32 0.0, %v1521
        %v1523 = vpop.f32.mrf.mxu0
        %1524 = vmatprep.mubr.bf16.mxu0 0
        %1525 = vmatmul.mubr.bf16.gmra.mxu0 %v1439
        %v1526 = vpop.f32.mrf.mxu0
        %v1527 = vadd.f32 0.0, %v1526
        %v1528 = vpop.f32.mrf.mxu0
        %v1529 = vpop.f32.mrf.mxu0
        %v1530 = vadd.f32 0.0, %v1529
        %v1531 = vpop.f32.mrf.mxu0
        %1532 = vmatprep.mubr.bf16.mxu0 0
        %1533 = vmatmul.mubr.bf16.gmra.mxu0 %v1442
        %v1534 = vpop.f32.mrf.mxu0
        %v1535 = vadd.f32 0.0, %v1534
        %v1536 = vpop.f32.mrf.mxu0
        %v1537 = vpop.f32.mrf.mxu0
        %v1538 = vadd.f32 0.0, %v1537
        %v1539 = vpop.f32.mrf.mxu0
        %1540 = vdwg.mxu0
        %vm1541 = vcmask 31744
        %v1542 = vsel %vm1541, %v1479, -inf
        %1543 = vmax.xlane.f32.xlu0 %v1542
        %v1544 = vpop.xlane.xlu0 %1543
        %v1545 = vsel %vm1541, %v1482, -inf
        %1546 = vmax.xlane.f32.xlu0 %v1545
        %v1547 = vpop.xlane.xlu0 %1546
        %v1548 = vsel %vm1541, %v1487, -inf
        %1549 = vmax.xlane.f32.xlu0 %v1548
        %v1550 = vpop.xlane.xlu0 %1549
        %v1551 = vsel %vm1541, %v1490, -inf
        %1552 = vmax.xlane.f32.xlu0 %v1551
        %v1553 = vpop.xlane.xlu0 %1552
        %v1554 = vsel %vm1541, %v1495, -inf
        %1555 = vmax.xlane.f32.xlu0 %v1554
        %v1556 = vpop.xlane.xlu0 %1555
        %v1557 = vsel %vm1541, %v1498, -inf
        %1558 = vmax.xlane.f32.xlu0 %v1557
        %v1559 = vpop.xlane.xlu0 %1558
        %v1560 = vsel %vm1541, %v1503, -inf
        %1561 = vmax.xlane.f32.xlu0 %v1560
        %v1562 = vpop.xlane.xlu0 %1561
        %v1563 = vsel %vm1541, %v1506, -inf
        %1564 = vmax.xlane.f32.xlu0 %v1563
        %v1565 = vpop.xlane.xlu0 %1564
        %v1566 = vsel %vm1541, %v1511, -inf
        %1567 = vmax.xlane.f32.xlu0 %v1566
        %v1568 = vpop.xlane.xlu0 %1567
        %v1569 = vsel %vm1541, %v1514, -inf
        %1570 = vmax.xlane.f32.xlu0 %v1569
        %v1571 = vpop.xlane.xlu0 %1570
        %v1572 = vsel %vm1541, %v1519, -inf
        %1573 = vmax.xlane.f32.xlu0 %v1572
        %v1574 = vpop.xlane.xlu0 %1573
        %v1575 = vsel %vm1541, %v1522, -inf
        %1576 = vmax.xlane.f32.xlu0 %v1575
        %v1577 = vpop.xlane.xlu0 %1576
        %v1578 = vsel %vm1541, %v1527, -inf
        %1579 = vmax.xlane.f32.xlu0 %v1578
        %v1580 = vpop.xlane.xlu0 %1579
        %v1581 = vsel %vm1541, %v1530, -inf
        %1582 = vmax.xlane.f32.xlu0 %v1581
        %v1583 = vpop.xlane.xlu0 %1582
        %v1584 = vsel %vm1541, %v1535, -inf
        %1585 = vmax.xlane.f32.xlu0 %v1584
        %v1586 = vpop.xlane.xlu0 %1585
        %v1587 = vsel %vm1541, %v1538, -inf
        %1588 = vmax.xlane.f32.xlu0 %v1587
        %v1589 = vpop.xlane.xlu0 %1588
        %v1590 = vsub.f32 %v1479, %v1544
        %v1591 = vsub.f32 %v1482, %v1547
        %v1592 = vsub.f32 %v1487, %v1550
        %v1593 = vsub.f32 %v1490, %v1553
        %v1594 = vsub.f32 %v1495, %v1556
        %v1595 = vsub.f32 %v1498, %v1559
        %v1596 = vsub.f32 %v1503, %v1562
        %v1597 = vsub.f32 %v1506, %v1565
        %v1598 = vsub.f32 %v1511, %v1568
        %v1599 = vsub.f32 %v1514, %v1571
        %v1600 = vsub.f32 %v1519, %v1574
        %v1601 = vsub.f32 %v1522, %v1577
        %v1602 = vsub.f32 %v1527, %v1580
        %v1603 = vsub.f32 %v1530, %v1583
        %v1604 = vsub.f32 %v1535, %v1586
        %v1605 = vsub.f32 %v1538, %v1589
        %v1606 = vmul.f32 %v1590, 1.442695
        %v1607 = vpow.pop %v1606
        %v1608 = vmul.f32 %v1591, 1.442695
        %v1609 = vpow.pop %v1608
        %v1610 = vmul.f32 %v1592, 1.442695
        %v1611 = vpow.pop %v1610
        %v1612 = vmul.f32 %v1593, 1.442695
        %v1613 = vpow.pop %v1612
        %v1614 = vmul.f32 %v1594, 1.442695
        %v1615 = vpow.pop %v1614
        %v1616 = vmul.f32 %v1595, 1.442695
        %v1617 = vpow.pop %v1616
        %v1618 = vmul.f32 %v1596, 1.442695
        %v1619 = vpow.pop %v1618
        %v1620 = vmul.f32 %v1597, 1.442695
        %v1621 = vpow.pop %v1620
        %v1622 = vmul.f32 %v1598, 1.442695
        %v1623 = vpow.pop %v1622
        %v1624 = vmul.f32 %v1599, 1.442695
        %v1625 = vpow.pop %v1624
        %v1626 = vmul.f32 %v1600, 1.442695
        %v1627 = vpow.pop %v1626
        %v1628 = vmul.f32 %v1601, 1.442695
        %v1629 = vpow.pop %v1628
        %v1630 = vmul.f32 %v1602, 1.442695
        %v1631 = vpow.pop %v1630
        %v1632 = vmul.f32 %v1603, 1.442695
        %v1633 = vpow.pop %v1632
        %v1634 = vmul.f32 %v1604, 1.442695
        %v1635 = vpow.pop %v1634
        %v1636 = vmul.f32 %v1605, 1.442695
        %v1637 = vpow.pop %v1636
        %v1638 = vsel %vm1541, %v1607, 0.0
        %1639 = vadd.xlane.f32.xlu0 %v1638
        %v1640 = vpop.xlane.xlu0 %1639
        %v1641 = vsel %vm1541, %v1609, 0.0
        %1642 = vadd.xlane.f32.xlu0 %v1641
        %v1643 = vpop.xlane.xlu0 %1642
        %v1644 = vsel %vm1541, %v1611, 0.0
        %1645 = vadd.xlane.f32.xlu0 %v1644
        %v1646 = vpop.xlane.xlu0 %1645
        %v1647 = vsel %vm1541, %v1613, 0.0
        %1648 = vadd.xlane.f32.xlu0 %v1647
        %v1649 = vpop.xlane.xlu0 %1648
        %v1650 = vsel %vm1541, %v1615, 0.0
        %1651 = vadd.xlane.f32.xlu0 %v1650
        %v1652 = vpop.xlane.xlu0 %1651
        %v1653 = vsel %vm1541, %v1617, 0.0
        %1654 = vadd.xlane.f32.xlu0 %v1653
        %v1655 = vpop.xlane.xlu0 %1654
        %v1656 = vsel %vm1541, %v1619, 0.0
        %1657 = vadd.xlane.f32.xlu0 %v1656
        %v1658 = vpop.xlane.xlu0 %1657
        %v1659 = vsel %vm1541, %v1621, 0.0
        %1660 = vadd.xlane.f32.xlu0 %v1659
        %v1661 = vpop.xlane.xlu0 %1660
        %v1662 = vsel %vm1541, %v1623, 0.0
        %1663 = vadd.xlane.f32.xlu0 %v1662
        %v1664 = vpop.xlane.xlu0 %1663
        %v1665 = vsel %vm1541, %v1625, 0.0
        %1666 = vadd.xlane.f32.xlu0 %v1665
        %v1667 = vpop.xlane.xlu0 %1666
        %v1668 = vsel %vm1541, %v1627, 0.0
        %1669 = vadd.xlane.f32.xlu0 %v1668
        %v1670 = vpop.xlane.xlu0 %1669
        %v1671 = vsel %vm1541, %v1629, 0.0
        %1672 = vadd.xlane.f32.xlu0 %v1671
        %v1673 = vpop.xlane.xlu0 %1672
        %v1674 = vsel %vm1541, %v1631, 0.0
        %1675 = vadd.xlane.f32.xlu0 %v1674
        %v1676 = vpop.xlane.xlu0 %1675
        %v1677 = vsel %vm1541, %v1633, 0.0
        %1678 = vadd.xlane.f32.xlu0 %v1677
        %v1679 = vpop.xlane.xlu0 %1678
        %v1680 = vsel %vm1541, %v1635, 0.0
        %1681 = vadd.xlane.f32.xlu0 %v1680
        %v1682 = vpop.xlane.xlu0 %1681
        %v1683 = vsel %vm1541, %v1637, 0.0
        %1684 = vadd.xlane.f32.xlu0 %v1683
        %v1685 = vpop.xlane.xlu0 %1684
        %v1686 = vrcp.pop %v1640
        %v1687 = vmul.f32 %v1607, %v1686
        %v1688 = vrcp.pop %v1643
        %v1689 = vmul.f32 %v1609, %v1688
        %v1690 = vrcp.pop %v1646
        %v1691 = vmul.f32 %v1611, %v1690
        %v1692 = vrcp.pop %v1649
        %v1693 = vmul.f32 %v1613, %v1692
        %v1694 = vrcp.pop %v1652
        %v1695 = vmul.f32 %v1615, %v1694
        %v1696 = vrcp.pop %v1655
        %v1697 = vmul.f32 %v1617, %v1696
        %v1698 = vrcp.pop %v1658
        %v1699 = vmul.f32 %v1619, %v1698
        %v1700 = vrcp.pop %v1661
        %v1701 = vmul.f32 %v1621, %v1700
        %v1702 = vrcp.pop %v1664
        %v1703 = vmul.f32 %v1623, %v1702
        %v1704 = vrcp.pop %v1667
        %v1705 = vmul.f32 %v1625, %v1704
        %v1706 = vrcp.pop %v1670
        %v1707 = vmul.f32 %v1627, %v1706
        %v1708 = vrcp.pop %v1673
        %v1709 = vmul.f32 %v1629, %v1708
        %v1710 = vrcp.pop %v1676
        %v1711 = vmul.f32 %v1631, %v1710
        %v1712 = vrcp.pop %v1679
        %v1713 = vmul.f32 %v1633, %v1712
        %v1714 = vrcp.pop %v1682
        %v1715 = vmul.f32 %v1635, %v1714
        %v1716 = vrcp.pop %v1685
        %v1717 = vmul.f32 %v1637, %v1716
        %v1718 = vld [vmem:[%s2 + $0x30] sm:$0xf]
        %v1719 = vld [vmem:[%s2 + $0x34] sm:$0xf]
        %v1720 = vpack.c.bf16 %v1296, %v1293
        %v1721 = vpack.c.bf16 %v1304, %v1301
        %v1722 = vpack.c.bf16 %v1312, %v1309
        %v1723 = vpack.c.bf16 %v1320, %v1317
        %v1724 = vpack.c.bf16 %v1328, %v1325
        %v1725 = vpack.c.bf16 %v1336, %v1333
        %v1726 = vpack.c.bf16 %v1344, %v1341
        %v1727 = vpack.c.bf16 %v1352, %v1349
        %v1728 = vld [vmem:[%s4 + $0x3] sm:$0x1]
        %v1730 = vlaneseq
        %v1731 = vshrl.u32 %v1730, 7
        %v1732 = vsub.s32 0, %v1731
        %v1733 = vrot.slane %v1728, %v1732
        %v1737 = vunpack.c.l.b16 %v1718
        %v1738 = vunpack.c.l.b16 %v1719
        %v1739 = vpack.c.b16 %v1738, %v1737
        %v1742 = vsel %vm1419, %v1720, 0
        %v1745 = vsel %vm1419, %v1721, 0
        %v1748 = vsel %vm1419, %v1722, 0
        %v1751 = vsel %vm1419, %v1723, 0
        %v1754 = vsel %vm1419, %v1724, 0
        %v1757 = vsel %vm1419, %v1725, 0
        %v1760 = vsel %vm1419, %v1726, 0
        %v1763 = vsel %vm1419, %v1727, 0
        %1765 = vmatprep.subr.bf16.mxu0 0
        %1766 = vmatpush1.bf16.msra.mxu0 0
        %1767 = vmatprep.subr.bf16.mxu0 0
        %1768 = vmatpush1.bf16.msra.mxu0 0
        %1769 = vmatprep.subr.bf16.mxu0 0
        %1770 = vmatpush1.bf16.msra.mxu0 0
        %1771 = vmatprep.subr.bf16.mxu0 0
        %1772 = vmatpush1.bf16.msra.mxu0 0
        %1773 = vmatprep.subr.bf16.mxu0 0
        %1774 = vmatpush1.bf16.msra.mxu0 0
        %1775 = vmatprep.subr.bf16.mxu0 0
        %1776 = vmatpush1.bf16.msra.mxu0 0
        %1777 = vmatprep.subr.bf16.mxu0 0
        %1778 = vmatpush1.bf16.msra.mxu0 0
        %1779 = vmatprep.subr.bf16.mxu0 0
        %1780 = vmatpush1.bf16.msra.mxu0 %v1739
        %1781 = vmatprep.subr.bf16.mxu0 0
        %1782 = vmatpush2.bf16.msra.mxu0 0
        %1783 = vmatprep.subr.bf16.mxu0 0
        %1784 = vmatpush2.bf16.msra.mxu0 0
        %1785 = vmatprep.subr.bf16.mxu0 0
        %1786 = vmatpush2.bf16.msra.mxu0 0
        %1787 = vmatprep.subr.bf16.mxu0 0
        %1788 = vmatpush2.bf16.msra.mxu0 0
        %1789 = vmatprep.subr.bf16.mxu0 0
        %1790 = vmatpush2.bf16.msra.mxu0 0
        %1791 = vmatprep.subr.bf16.mxu0 0
        %1792 = vmatpush2.bf16.msra.mxu0 0
        %1793 = vmatprep.subr.bf16.mxu0 0
        %1794 = vmatpush2.bf16.msra.mxu0 0
        %1795 = vmatprep.subr.bf16.mxu0 0
        %1796 = vmatpush2.bf16.msra.mxu0 0
        %1797 = vmatprep.mubr.bf16.mxu0 0
        %1798 = vmatmul.mubr.bf16.gmra.mxu0 %v1742
        %v1799 = vpop.f32.mrf.mxu0
        %v1800 = vadd.f32 %v1733, %v1799
        %v1801 = vpop.f32.mrf.mxu0
        %v1802 = vpop.f32.mrf.mxu0
        %v1803 = vadd.f32 %v1733, %v1802
        %v1804 = vpop.f32.mrf.mxu0
        %1805 = vmatprep.mubr.bf16.mxu0 0
        %1806 = vmatmul.mubr.bf16.gmra.mxu0 %v1745
        %v1807 = vpop.f32.mrf.mxu0
        %v1808 = vadd.f32 %v1733, %v1807
        %v1809 = vpop.f32.mrf.mxu0
        %v1810 = vpop.f32.mrf.mxu0
        %v1811 = vadd.f32 %v1733, %v1810
        %v1812 = vpop.f32.mrf.mxu0
        %1813 = vmatprep.mubr.bf16.mxu0 0
        %1814 = vmatmul.mubr.bf16.gmra.mxu0 %v1748
        %v1815 = vpop.f32.mrf.mxu0
        %v1816 = vadd.f32 %v1733, %v1815
        %v1817 = vpop.f32.mrf.mxu0
        %v1818 = vpop.f32.mrf.mxu0
        %v1819 = vadd.f32 %v1733, %v1818
        %v1820 = vpop.f32.mrf.mxu0
        %1821 = vmatprep.mubr.bf16.mxu0 0
        %1822 = vmatmul.mubr.bf16.gmra.mxu0 %v1751
        %v1823 = vpop.f32.mrf.mxu0
        %v1824 = vadd.f32 %v1733, %v1823
        %v1825 = vpop.f32.mrf.mxu0
        %v1826 = vpop.f32.mrf.mxu0
        %v1827 = vadd.f32 %v1733, %v1826
        %v1828 = vpop.f32.mrf.mxu0
        %1829 = vmatprep.mubr.bf16.mxu0 0
        %1830 = vmatmul.mubr.bf16.gmra.mxu0 %v1754
        %v1831 = vpop.f32.mrf.mxu0
        %v1832 = vadd.f32 %v1733, %v1831
        %v1833 = vpop.f32.mrf.mxu0
        %v1834 = vpop.f32.mrf.mxu0
        %v1835 = vadd.f32 %v1733, %v1834
        %v1836 = vpop.f32.mrf.mxu0
        %1837 = vmatprep.mubr.bf16.mxu0 0
        %1838 = vmatmul.mubr.bf16.gmra.mxu0 %v1757
        %v1839 = vpop.f32.mrf.mxu0
        %v1840 = vadd.f32 %v1733, %v1839
        %v1841 = vpop.f32.mrf.mxu0
        %v1842 = vpop.f32.mrf.mxu0
        %v1843 = vadd.f32 %v1733, %v1842
        %v1844 = vpop.f32.mrf.mxu0
        %1845 = vmatprep.mubr.bf16.mxu0 0
        %1846 = vmatmul.mubr.bf16.gmra.mxu0 %v1760
        %v1847 = vpop.f32.mrf.mxu0
        %v1848 = vadd.f32 %v1733, %v1847
        %v1849 = vpop.f32.mrf.mxu0
        %v1850 = vpop.f32.mrf.mxu0
        %v1851 = vadd.f32 %v1733, %v1850
        %v1852 = vpop.f32.mrf.mxu0
        %1853 = vmatprep.mubr.bf16.mxu0 0
        %1854 = vmatmul.mubr.bf16.gmra.mxu0 %v1763
        %v1855 = vpop.f32.mrf.mxu0
        %v1856 = vadd.f32 %v1733, %v1855
        %v1857 = vpop.f32.mrf.mxu0
        %v1858 = vpop.f32.mrf.mxu0
        %v1859 = vadd.f32 %v1733, %v1858
        %v1860 = vpop.f32.mrf.mxu0
        %1861 = vdwg.mxu0
        %v1862 = vmax.f32 %v1800, 0.0
        %v1863 = vmax.f32 %v1803, 0.0
        %v1864 = vmax.f32 %v1808, 0.0
        %v1865 = vmax.f32 %v1811, 0.0
        %v1866 = vmax.f32 %v1816, 0.0
        %v1867 = vmax.f32 %v1819, 0.0
        %v1868 = vmax.f32 %v1824, 0.0
        %v1869 = vmax.f32 %v1827, 0.0
        %v1870 = vmax.f32 %v1832, 0.0
        %v1871 = vmax.f32 %v1835, 0.0
        %v1872 = vmax.f32 %v1840, 0.0
        %v1873 = vmax.f32 %v1843, 0.0
        %v1874 = vmax.f32 %v1848, 0.0
        %v1875 = vmax.f32 %v1851, 0.0
        %v1876 = vmax.f32 %v1856, 0.0
        %v1877 = vmax.f32 %v1859, 0.0
        %v1878 = vld [vmem:[%s2 + $0x38] sm:$0xf]
        %v1879 = vld [vmem:[%s2 + $0x3c] sm:$0xf]
        %v1880 = vld [vmem:[%s2 + $0x40] sm:$0xf]
        %v1881 = vld [vmem:[%s2 + $0x44] sm:$0xf]
        %v1882 = vpack.c.bf16 %v1863, %v1862
        %v1883 = vpack.c.bf16 %v1865, %v1864
        %v1884 = vpack.c.bf16 %v1867, %v1866
        %v1885 = vpack.c.bf16 %v1869, %v1868
        %v1886 = vpack.c.bf16 %v1871, %v1870
        %v1887 = vpack.c.bf16 %v1873, %v1872
        %v1888 = vpack.c.bf16 %v1875, %v1874
        %v1889 = vpack.c.bf16 %v1877, %v1876
        %v1890 = vld [vmem:[%s4 + $0x4] sm:$0x1]
        %v1892 = vlaneseq
        %v1893 = vshrl.u32 %v1892, 7
        %v1894 = vsub.s32 0, %v1893
        %v1895 = vrot.slane %v1890, %v1894
        %v1901 = vunpack.c.l.b16 %v1878
        %v1902 = vunpack.c.l.b16 %v1879
        %v1903 = vunpack.c.l.b16 %v1880
        %v1904 = vunpack.c.l.b16 %v1881
        %v1905 = vpack.c.b16 %v1902, %v1901
        %v1906 = vpack.c.b16 %v1904, %v1903
        %v1910 = vsel %vm374, %v1882, 0
        %v1913 = vsel %vm374, %v1883, 0
        %v1916 = vsel %vm374, %v1884, 0
        %v1919 = vsel %vm374, %v1885, 0
        %v1922 = vsel %vm374, %v1886, 0
        %v1925 = vsel %vm374, %v1887, 0
        %v1928 = vsel %vm374, %v1888, 0
        %v1931 = vsel %vm374, %v1889, 0
        %1933 = vmatprep.subr.bf16.mxu0 0
        %1934 = vmatpush1.bf16.msra.mxu0 0
        %1935 = vmatprep.subr.bf16.mxu0 0
        %1936 = vmatpush1.bf16.msra.mxu0 0
        %1937 = vmatprep.subr.bf16.mxu0 0
        %1938 = vmatpush1.bf16.msra.mxu0 0
        %1939 = vmatprep.subr.bf16.mxu0 0
        %1940 = vmatpush1.bf16.msra.mxu0 0
        %1941 = vmatprep.subr.bf16.mxu0 0
        %1942 = vmatpush1.bf16.msra.mxu0 0
        %1943 = vmatprep.subr.bf16.mxu0 0
        %1944 = vmatpush1.bf16.msra.mxu0 0
        %1945 = vmatprep.subr.bf16.mxu0 0
        %1946 = vmatpush1.bf16.msra.mxu0 %v1906
        %1947 = vmatprep.subr.bf16.mxu0 0
        %1948 = vmatpush1.bf16.msra.mxu0 %v1905
        %1949 = vmatprep.subr.bf16.mxu0 0
        %1950 = vmatpush2.bf16.msra.mxu0 0
        %1951 = vmatprep.subr.bf16.mxu0 0
        %1952 = vmatpush2.bf16.msra.mxu0 0
        %1953 = vmatprep.subr.bf16.mxu0 0
        %1954 = vmatpush2.bf16.msra.mxu0 0
        %1955 = vmatprep.subr.bf16.mxu0 0
        %1956 = vmatpush2.bf16.msra.mxu0 0
        %1957 = vmatprep.subr.bf16.mxu0 0
        %1958 = vmatpush2.bf16.msra.mxu0 0
        %1959 = vmatprep.subr.bf16.mxu0 0
        %1960 = vmatpush2.bf16.msra.mxu0 0
        %1961 = vmatprep.subr.bf16.mxu0 0
        %1962 = vmatpush2.bf16.msra.mxu0 0
        %1963 = vmatprep.subr.bf16.mxu0 0
        %1964 = vmatpush2.bf16.msra.mxu0 0
        %1965 = vmatprep.mubr.bf16.mxu0 0
        %1966 = vmatmul.mubr.bf16.gmra.mxu0 %v1910
        %v1967 = vpop.f32.mrf.mxu0
        %v1968 = vadd.f32 %v1895, %v1967
        %v1969 = vpop.f32.mrf.mxu0
        %v1970 = vpop.f32.mrf.mxu0
        %v1971 = vadd.f32 %v1895, %v1970
        %v1972 = vpop.f32.mrf.mxu0
        %1973 = vmatprep.mubr.bf16.mxu0 0
        %1974 = vmatmul.mubr.bf16.gmra.mxu0 %v1913
        %v1975 = vpop.f32.mrf.mxu0
        %v1976 = vadd.f32 %v1895, %v1975
        %v1977 = vpop.f32.mrf.mxu0
        %v1978 = vpop.f32.mrf.mxu0
        %v1979 = vadd.f32 %v1895, %v1978
        %v1980 = vpop.f32.mrf.mxu0
        %1981 = vmatprep.mubr.bf16.mxu0 0
        %1982 = vmatmul.mubr.bf16.gmra.mxu0 %v1916
        %v1983 = vpop.f32.mrf.mxu0
        %v1984 = vadd.f32 %v1895, %v1983
        %v1985 = vpop.f32.mrf.mxu0
        %v1986 = vpop.f32.mrf.mxu0
        %v1987 = vadd.f32 %v1895, %v1986
        %v1988 = vpop.f32.mrf.mxu0
        %1989 = vmatprep.mubr.bf16.mxu0 0
        %1990 = vmatmul.mubr.bf16.gmra.mxu0 %v1919
        %v1991 = vpop.f32.mrf.mxu0
        %v1992 = vadd.f32 %v1895, %v1991
        %v1993 = vpop.f32.mrf.mxu0
        %v1994 = vpop.f32.mrf.mxu0
        %v1995 = vadd.f32 %v1895, %v1994
        %v1996 = vpop.f32.mrf.mxu0
        %1997 = vmatprep.mubr.bf16.mxu0 0
        %1998 = vmatmul.mubr.bf16.gmra.mxu0 %v1922
        %v1999 = vpop.f32.mrf.mxu0
        %v2000 = vadd.f32 %v1895, %v1999
        %v2001 = vpop.f32.mrf.mxu0
        %v2002 = vpop.f32.mrf.mxu0
        %v2003 = vadd.f32 %v1895, %v2002
        %v2004 = vpop.f32.mrf.mxu0
        %2005 = vmatprep.mubr.bf16.mxu0 0
        %2006 = vmatmul.mubr.bf16.gmra.mxu0 %v1925
        %v2007 = vpop.f32.mrf.mxu0
        %v2008 = vadd.f32 %v1895, %v2007
        %v2009 = vpop.f32.mrf.mxu0
        %v2010 = vpop.f32.mrf.mxu0
        %v2011 = vadd.f32 %v1895, %v2010
        %v2012 = vpop.f32.mrf.mxu0
        %2013 = vmatprep.mubr.bf16.mxu0 0
        %2014 = vmatmul.mubr.bf16.gmra.mxu0 %v1928
        %v2015 = vpop.f32.mrf.mxu0
        %v2016 = vadd.f32 %v1895, %v2015
        %v2017 = vpop.f32.mrf.mxu0
        %v2018 = vpop.f32.mrf.mxu0
        %v2019 = vadd.f32 %v1895, %v2018
        %v2020 = vpop.f32.mrf.mxu0
        %2021 = vmatprep.mubr.bf16.mxu0 0
        %2022 = vmatmul.mubr.bf16.gmra.mxu0 %v1931
        %v2023 = vpop.f32.mrf.mxu0
        %v2024 = vadd.f32 %v1895, %v2023
        %v2025 = vpop.f32.mrf.mxu0
        %v2026 = vpop.f32.mrf.mxu0
        %v2027 = vadd.f32 %v1895, %v2026
        %v2028 = vpop.f32.mrf.mxu0
        %2029 = vdwg.mxu0
        %v2030 = vmax.f32 %v1968, 0.0
        %v2031 = vmax.f32 %v1971, 0.0
        %v2032 = vmax.f32 %v1976, 0.0
        %v2033 = vmax.f32 %v1979, 0.0
        %v2034 = vmax.f32 %v1984, 0.0
        %v2035 = vmax.f32 %v1987, 0.0
        %v2036 = vmax.f32 %v1992, 0.0
        %v2037 = vmax.f32 %v1995, 0.0
        %v2038 = vmax.f32 %v2000, 0.0
        %v2039 = vmax.f32 %v2003, 0.0
        %v2040 = vmax.f32 %v2008, 0.0
        %v2041 = vmax.f32 %v2011, 0.0
        %v2042 = vmax.f32 %v2016, 0.0
        %v2043 = vmax.f32 %v2019, 0.0
        %v2044 = vmax.f32 %v2024, 0.0
        %v2045 = vmax.f32 %v2027, 0.0
        %v2046 = vld [vmem:[%s3] sm:$0xf]
        %v2047 = vld [vmem:[%s3 + $0x4] sm:$0xf]
        %v2048 = vld [vmem:[%s3 + $0x8] sm:$0xf]
        %v2049 = vld [vmem:[%s3 + $0xc] sm:$0xf]
        %v2050 = vld [vmem:[%s3 + $0x10] sm:$0xf]
        %v2051 = vld [vmem:[%s3 + $0x14] sm:$0xf]
        %v2052 = vld [vmem:[%s3 + $0x18] sm:$0xf]
        %v2053 = vld [vmem:[%s3 + $0x1c] sm:$0xf]
        %v2054 = vpack.c.bf16 %v2031, %v2030
        %v2055 = vpack.c.bf16 %v2033, %v2032
        %v2056 = vpack.c.bf16 %v2035, %v2034
        %v2057 = vpack.c.bf16 %v2037, %v2036
        %v2058 = vpack.c.bf16 %v2039, %v2038
        %v2059 = vpack.c.bf16 %v2041, %v2040
        %v2060 = vpack.c.bf16 %v2043, %v2042
        %v2061 = vpack.c.bf16 %v2045, %v2044
        %v2062 = vld [vmem:[%s4 + $0x5] sm:$0x1]
        %v2064 = vlaneseq
        %v2065 = vshrl.u32 %v2064, 7
        %v2066 = vsub.s32 0, %v2065
        %v2067 = vrot.slane %v2062, %v2066
        %v2077 = vunpack.c.l.b16 %v2046
        %v2078 = vunpack.c.l.b16 %v2047
        %v2079 = vunpack.c.l.b16 %v2048
        %v2080 = vunpack.c.l.b16 %v2049
        %v2081 = vunpack.c.l.b16 %v2050
        %v2082 = vunpack.c.l.b16 %v2051
        %v2083 = vunpack.c.l.b16 %v2052
        %v2084 = vunpack.c.l.b16 %v2053
        %v2085 = vpack.c.b16 %v2078, %v2077
        %v2086 = vpack.c.b16 %v2080, %v2079
        %v2087 = vpack.c.b16 %v2082, %v2081
        %v2088 = vpack.c.b16 %v2084, %v2083
        %v2094 = vsel %vm672, %v2054, 0
        %v2097 = vsel %vm672, %v2055, 0
        %v2100 = vsel %vm672, %v2056, 0
        %v2103 = vsel %vm672, %v2057, 0
        %v2106 = vsel %vm672, %v2058, 0
        %v2109 = vsel %vm672, %v2059, 0
        %v2112 = vsel %vm672, %v2060, 0
        %v2115 = vsel %vm672, %v2061, 0
        %2117 = vmatprep.subr.bf16.mxu0 0
        %2118 = vmatpush1.bf16.msra.mxu0 0
        %2119 = vmatprep.subr.bf16.mxu0 0
        %2120 = vmatpush1.bf16.msra.mxu0 0
        %2121 = vmatprep.subr.bf16.mxu0 0
        %2122 = vmatpush1.bf16.msra.mxu0 0
        %2123 = vmatprep.subr.bf16.mxu0 0
        %2124 = vmatpush1.bf16.msra.mxu0 0
        %2125 = vmatprep.subr.bf16.mxu0 0
        %2126 = vmatpush1.bf16.msra.mxu0 %v2088
        %2127 = vmatprep.subr.bf16.mxu0 0
        %2128 = vmatpush1.bf16.msra.mxu0 %v2087
        %2129 = vmatprep.subr.bf16.mxu0 0
        %2130 = vmatpush1.bf16.msra.mxu0 %v2086
        %2131 = vmatprep.subr.bf16.mxu0 0
        %2132 = vmatpush1.bf16.msra.mxu0 %v2085
        %2133 = vmatprep.subr.bf16.mxu0 0
        %2134 = vmatpush2.bf16.msra.mxu0 0
        %2135 = vmatprep.subr.bf16.mxu0 0
        %2136 = vmatpush2.bf16.msra.mxu0 0
        %2137 = vmatprep.subr.bf16.mxu0 0
        %2138 = vmatpush2.bf16.msra.mxu0 0
        %2139 = vmatprep.subr.bf16.mxu0 0
        %2140 = vmatpush2.bf16.msra.mxu0 0
        %2141 = vmatprep.subr.bf16.mxu0 0
        %2142 = vmatpush2.bf16.msra.mxu0 0
        %2143 = vmatprep.subr.bf16.mxu0 0
        %2144 = vmatpush2.bf16.msra.mxu0 0
        %2145 = vmatprep.subr.bf16.mxu0 0
        %2146 = vmatpush2.bf16.msra.mxu0 0
        %2147 = vmatprep.subr.bf16.mxu0 0
        %2148 = vmatpush2.bf16.msra.mxu0 0
        %2149 = vmatprep.mubr.bf16.mxu0 0
        %2150 = vmatmul.mubr.bf16.gmra.mxu0 %v2094
        %v2151 = vpop.f32.mrf.mxu0
        %v2152 = vadd.f32 %v2067, %v2151
        %v2153 = vpop.f32.mrf.mxu0
        %v2154 = vpop.f32.mrf.mxu0
        %v2155 = vadd.f32 %v2067, %v2154
        %v2156 = vpop.f32.mrf.mxu0
        %2157 = vmatprep.mubr.bf16.mxu0 0
        %2158 = vmatmul.mubr.bf16.gmra.mxu0 %v2097
        %v2159 = vpop.f32.mrf.mxu0
        %v2160 = vadd.f32 %v2067, %v2159
        %v2161 = vpop.f32.mrf.mxu0
        %v2162 = vpop.f32.mrf.mxu0
        %v2163 = vadd.f32 %v2067, %v2162
        %v2164 = vpop.f32.mrf.mxu0
        %2165 = vmatprep.mubr.bf16.mxu0 0
        %2166 = vmatmul.mubr.bf16.gmra.mxu0 %v2100
        %v2167 = vpop.f32.mrf.mxu0
        %v2168 = vadd.f32 %v2067, %v2167
        %v2169 = vpop.f32.mrf.mxu0
        %v2170 = vpop.f32.mrf.mxu0
        %v2171 = vadd.f32 %v2067, %v2170
        %v2172 = vpop.f32.mrf.mxu0
        %2173 = vmatprep.mubr.bf16.mxu0 0
        %2174 = vmatmul.mubr.bf16.gmra.mxu0 %v2103
        %v2175 = vpop.f32.mrf.mxu0
        %v2176 = vadd.f32 %v2067, %v2175
        %v2177 = vpop.f32.mrf.mxu0
        %v2178 = vpop.f32.mrf.mxu0
        %v2179 = vadd.f32 %v2067, %v2178
        %v2180 = vpop.f32.mrf.mxu0
        %2181 = vmatprep.mubr.bf16.mxu0 0
        %2182 = vmatmul.mubr.bf16.gmra.mxu0 %v2106
        %v2183 = vpop.f32.mrf.mxu0
        %v2184 = vadd.f32 %v2067, %v2183
        %v2185 = vpop.f32.mrf.mxu0
        %v2186 = vpop.f32.mrf.mxu0
        %v2187 = vadd.f32 %v2067, %v2186
        %v2188 = vpop.f32.mrf.mxu0
        %2189 = vmatprep.mubr.bf16.mxu0 0
        %2190 = vmatmul.mubr.bf16.gmra.mxu0 %v2109
        %v2191 = vpop.f32.mrf.mxu0
        %v2192 = vadd.f32 %v2067, %v2191
        %v2193 = vpop.f32.mrf.mxu0
        %v2194 = vpop.f32.mrf.mxu0
        %v2195 = vadd.f32 %v2067, %v2194
        %v2196 = vpop.f32.mrf.mxu0
        %2197 = vmatprep.mubr.bf16.mxu0 0
        %2198 = vmatmul.mubr.bf16.gmra.mxu0 %v2112
        %v2199 = vpop.f32.mrf.mxu0
        %v2200 = vadd.f32 %v2067, %v2199
        %v2201 = vpop.f32.mrf.mxu0
        %v2202 = vpop.f32.mrf.mxu0
        %v2203 = vadd.f32 %v2067, %v2202
        %v2204 = vpop.f32.mrf.mxu0
        %2205 = vmatprep.mubr.bf16.mxu0 0
        %2206 = vmatmul.mubr.bf16.gmra.mxu0 %v2115
        %v2207 = vpop.f32.mrf.mxu0
        %v2208 = vadd.f32 %v2067, %v2207
        %v2209 = vpop.f32.mrf.mxu0
        %v2210 = vpop.f32.mrf.mxu0
        %v2211 = vadd.f32 %v2067, %v2210
        %v2212 = vpop.f32.mrf.mxu0
        %2213 = vdwg.mxu0
        %2214 = vst.msk [vmem:[%s291] sm:$0xff] %vm374, %v2152
        %2215 = vst.msk [vmem:[%s291 + $0x8] sm:$0xff] %vm374, %v2155
        %2216 = vst.msk [vmem:[%s291 + $0x10] sm:$0xff] %vm374, %v2160
        %2217 = vst.msk [vmem:[%s291 + $0x18] sm:$0xff] %vm374, %v2163
        %2218 = vst.msk [vmem:[%s291 + $0x20] sm:$0xff] %vm374, %v2168
        %2219 = vst.msk [vmem:[%s291 + $0x28] sm:$0xff] %vm374, %v2171
        %2220 = vst.msk [vmem:[%s291 + $0x30] sm:$0xff] %vm374, %v2176
        %2221 = vst.msk [vmem:[%s291 + $0x38] sm:$0xff] %vm374, %v2179
        %2222 = vst.msk [vmem:[%s291 + $0x40] sm:$0xff] %vm374, %v2184
        %2223 = vst.msk [vmem:[%s291 + $0x48] sm:$0xff] %vm374, %v2187
        %2224 = vst.msk [vmem:[%s291 + $0x50] sm:$0xff] %vm374, %v2192
        %2225 = vst.msk [vmem:[%s291 + $0x58] sm:$0xff] %vm374, %v2195
        %2226 = vst.msk [vmem:[%s291 + $0x60] sm:$0xff] %vm374, %v2200
        %2227 = vst.msk [vmem:[%s291 + $0x68] sm:$0xff] %vm374, %v2203
        %2228 = vst.msk [vmem:[%s291 + $0x70] sm:$0xff] %vm374, %v2208
        %2229 = vst.msk [vmem:[%s291 + $0x78] sm:$0xff] %vm374, %v2211
        %v2230 = vld [vmem:[%s5] sm:$0xff]
        %v2231 = vld [vmem:[%s5 + $0x8] sm:$0xff]
        %v2233 = vsel %vm1419, %v1293, 0
        %v2236 = vsel %vm1419, %v1296, 0
        %v2239 = vsel %vm1419, %v1301, 0
        %v2242 = vsel %vm1419, %v1304, 0
        %v2245 = vsel %vm1419, %v1309, 0
        %v2248 = vsel %vm1419, %v1312, 0
        %v2251 = vsel %vm1419, %v1317, 0
        %v2254 = vsel %vm1419, %v1320, 0
        %v2257 = vsel %vm1419, %v1325, 0
        %v2260 = vsel %vm1419, %v1328, 0
        %v2263 = vsel %vm1419, %v1333, 0
        %v2266 = vsel %vm1419, %v1336, 0
        %v2269 = vsel %vm1419, %v1341, 0
        %v2272 = vsel %vm1419, %v1344, 0
        %v2275 = vsel %vm1419, %v1349, 0
        %v2278 = vsel %vm1419, %v1352, 0
        %2280 = vmatprep.subr.mxu0 0.0
        %2281 = vmatpush1.msra.mxu0 0.0
        %2282 = vmatprep.subr.mxu0 0.0
        %2283 = vmatpush1.msra.mxu0 0.0
        %2284 = vmatprep.subr.mxu0 0.0
        %2285 = vmatpush1.msra.mxu0 0.0
        %2286 = vmatprep.subr.mxu0 0.0
        %2287 = vmatpush1.msra.mxu0 0.0
        %2288 = vmatprep.subr.mxu0 0.0
        %2289 = vmatpush1.msra.mxu0 0.0
        %2290 = vmatprep.subr.mxu0 0.0
        %2291 = vmatpush1.msra.mxu0 0.0
        %2292 = vmatprep.subr.mxu0 0.0
        %2293 = vmatpush1.msra.mxu0 0.0
        %2294 = vmatprep.subr.mxu0 0.0
        %2295 = vmatpush1.msra.mxu0 0.0
        %2296 = vmatprep.subr.mxu0 0.0
        %2297 = vmatpush1.msra.mxu0 0.0
        %2298 = vmatprep.subr.mxu0 0.0
        %2299 = vmatpush1.msra.mxu0 0.0
        %2300 = vmatprep.subr.mxu0 0.0
        %2301 = vmatpush1.msra.mxu0 0.0
        %2302 = vmatprep.subr.mxu0 0.0
        %2303 = vmatpush1.msra.mxu0 0.0
        %2304 = vmatprep.subr.mxu0 0.0
        %2305 = vmatpush1.msra.mxu0 0.0
        %2306 = vmatprep.subr.mxu0 0.0
        %2307 = vmatpush1.msra.mxu0 0.0
        %2308 = vmatprep.subr.mxu0 0.0
        %2309 = vmatpush1.msra.mxu0 %v2231
        %2310 = vmatprep.subr.mxu0 0.0
        %2311 = vmatpush1.msra.mxu0 %v2230
        %2312 = vmatprep.subr.mxu0 0.0
        %2313 = vmatpush2.msra.mxu0 0.0
        %2314 = vmatprep.subr.mxu0 0.0
        %2315 = vmatpush2.msra.mxu0 0.0
        %2316 = vmatprep.subr.mxu0 0.0
        %2317 = vmatpush2.msra.mxu0 0.0
        %2318 = vmatprep.subr.mxu0 0.0
        %2319 = vmatpush2.msra.mxu0 0.0
        %2320 = vmatprep.subr.mxu0 0.0
        %2321 = vmatpush2.msra.mxu0 0.0
        %2322 = vmatprep.subr.mxu0 0.0
        %2323 = vmatpush2.msra.mxu0 0.0
        %2324 = vmatprep.subr.mxu0 0.0
        %2325 = vmatpush2.msra.mxu0 0.0
        %2326 = vmatprep.subr.mxu0 0.0
        %2327 = vmatpush2.msra.mxu0 0.0
        %2328 = vmatprep.subr.mxu0 0.0
        %2329 = vmatpush2.msra.mxu0 0.0
        %2330 = vmatprep.subr.mxu0 0.0
        %2331 = vmatpush2.msra.mxu0 0.0
        %2332 = vmatprep.subr.mxu0 0.0
        %2333 = vmatpush2.msra.mxu0 0.0
        %2334 = vmatprep.subr.mxu0 0.0
        %2335 = vmatpush2.msra.mxu0 0.0
        %2336 = vmatprep.subr.mxu0 0.0
        %2337 = vmatpush2.msra.mxu0 0.0
        %2338 = vmatprep.subr.mxu0 0.0
        %2339 = vmatpush2.msra.mxu0 0.0
        %2340 = vmatprep.subr.mxu0 0.0
        %2341 = vmatpush2.msra.mxu0 0.0
        %2342 = vmatprep.subr.mxu0 0.0
        %2343 = vmatpush2.msra.mxu0 0.0
        %2344 = vmatprep.mubr.f32.mxu0 0.0
        %2345 = vmatmul.mubr.f32.gmra.mxu0 %v2233
        %v2346 = vpop.f32.mrf.mxu0
        %v2347 = vadd.f32 0.0, %v2346
        %v2348 = vpop.f32.mrf.mxu0
        %2349 = vmatprep.mubr.f32.mxu0 0.0
        %2350 = vmatmul.mubr.f32.gmra.mxu0 %v2236
        %v2351 = vpop.f32.mrf.mxu0
        %v2352 = vadd.f32 0.0, %v2351
        %v2353 = vpop.f32.mrf.mxu0
        %2354 = vmatprep.mubr.f32.mxu0 0.0
        %2355 = vmatmul.mubr.f32.gmra.mxu0 %v2239
        %v2356 = vpop.f32.mrf.mxu0
        %v2357 = vadd.f32 0.0, %v2356
        %v2358 = vpop.f32.mrf.mxu0
        %2359 = vmatprep.mubr.f32.mxu0 0.0
        %2360 = vmatmul.mubr.f32.gmra.mxu0 %v2242
        %v2361 = vpop.f32.mrf.mxu0
        %v2362 = vadd.f32 0.0, %v2361
        %v2363 = vpop.f32.mrf.mxu0
        %2364 = vmatprep.mubr.f32.mxu0 0.0
        %2365 = vmatmul.mubr.f32.gmra.mxu0 %v2245
        %v2366 = vpop.f32.mrf.mxu0
        %v2367 = vadd.f32 0.0, %v2366
        %v2368 = vpop.f32.mrf.mxu0
        %2369 = vmatprep.mubr.f32.mxu0 0.0
        %2370 = vmatmul.mubr.f32.gmra.mxu0 %v2248
        %v2371 = vpop.f32.mrf.mxu0
        %v2372 = vadd.f32 0.0, %v2371
        %v2373 = vpop.f32.mrf.mxu0
        %2374 = vmatprep.mubr.f32.mxu0 0.0
        %2375 = vmatmul.mubr.f32.gmra.mxu0 %v2251
        %v2376 = vpop.f32.mrf.mxu0
        %v2377 = vadd.f32 0.0, %v2376
        %v2378 = vpop.f32.mrf.mxu0
        %2379 = vmatprep.mubr.f32.mxu0 0.0
        %2380 = vmatmul.mubr.f32.gmra.mxu0 %v2254
        %v2381 = vpop.f32.mrf.mxu0
        %v2382 = vadd.f32 0.0, %v2381
        %v2383 = vpop.f32.mrf.mxu0
        %2384 = vmatprep.mubr.f32.mxu0 0.0
        %2385 = vmatmul.mubr.f32.gmra.mxu0 %v2257
        %v2386 = vpop.f32.mrf.mxu0
        %v2387 = vadd.f32 0.0, %v2386
        %v2388 = vpop.f32.mrf.mxu0
        %2389 = vmatprep.mubr.f32.mxu0 0.0
        %2390 = vmatmul.mubr.f32.gmra.mxu0 %v2260
        %v2391 = vpop.f32.mrf.mxu0
        %v2392 = vadd.f32 0.0, %v2391
        %v2393 = vpop.f32.mrf.mxu0
        %2394 = vmatprep.mubr.f32.mxu0 0.0
        %2395 = vmatmul.mubr.f32.gmra.mxu0 %v2263
        %v2396 = vpop.f32.mrf.mxu0
        %v2397 = vadd.f32 0.0, %v2396
        %v2398 = vpop.f32.mrf.mxu0
        %2399 = vmatprep.mubr.f32.mxu0 0.0
        %2400 = vmatmul.mubr.f32.gmra.mxu0 %v2266
        %v2401 = vpop.f32.mrf.mxu0
        %v2402 = vadd.f32 0.0, %v2401
        %v2403 = vpop.f32.mrf.mxu0
        %2404 = vmatprep.mubr.f32.mxu0 0.0
        %2405 = vmatmul.mubr.f32.gmra.mxu0 %v2269
        %v2406 = vpop.f32.mrf.mxu0
        %v2407 = vadd.f32 0.0, %v2406
        %v2408 = vpop.f32.mrf.mxu0
        %2409 = vmatprep.mubr.f32.mxu0 0.0
        %2410 = vmatmul.mubr.f32.gmra.mxu0 %v2272
        %v2411 = vpop.f32.mrf.mxu0
        %v2412 = vadd.f32 0.0, %v2411
        %v2413 = vpop.f32.mrf.mxu0
        %2414 = vmatprep.mubr.f32.mxu0 0.0
        %2415 = vmatmul.mubr.f32.gmra.mxu0 %v2275
        %v2416 = vpop.f32.mrf.mxu0
        %v2417 = vadd.f32 0.0, %v2416
        %v2418 = vpop.f32.mrf.mxu0
        %2419 = vmatprep.mubr.f32.mxu0 0.0
        %2420 = vmatmul.mubr.f32.gmra.mxu0 %v2278
        %v2421 = vpop.f32.mrf.mxu0
        %v2422 = vadd.f32 0.0, %v2421
        %v2423 = vpop.f32.mrf.mxu0
        %2424 = vdwg.mxu0
        %v2425 = vmul.f32 %v1293, %v1293
        %v2426 = vmul.f32 %v1296, %v1296
        %v2427 = vmul.f32 %v1301, %v1301
        %v2428 = vmul.f32 %v1304, %v1304
        %v2429 = vmul.f32 %v1309, %v1309
        %v2430 = vmul.f32 %v1312, %v1312
        %v2431 = vmul.f32 %v1317, %v1317
        %v2432 = vmul.f32 %v1320, %v1320
        %v2433 = vmul.f32 %v1325, %v1325
        %v2434 = vmul.f32 %v1328, %v1328
        %v2435 = vmul.f32 %v1333, %v1333
        %v2436 = vmul.f32 %v1336, %v1336
        %v2437 = vmul.f32 %v1341, %v1341
        %v2438 = vmul.f32 %v1344, %v1344
        %v2439 = vmul.f32 %v1349, %v1349
        %v2440 = vmul.f32 %v1352, %v1352
        %v2441 = vsel %vm1419, %v2425, 0.0
        %2442 = vadd.xlane.f32.xlu0 %v2441
        %v2443 = vpop.xlane.xlu0 %2442
        %v2444 = vsel %vm1419, %v2426, 0.0
        %2445 = vadd.xlane.f32.xlu0 %v2444
        %v2446 = vpop.xlane.xlu0 %2445
        %v2447 = vsel %vm1419, %v2427, 0.0
        %2448 = vadd.xlane.f32.xlu0 %v2447
        %v2449 = vpop.xlane.xlu0 %2448
        %v2450 = vsel %vm1419, %v2428, 0.0
        %2451 = vadd.xlane.f32.xlu0 %v2450
        %v2452 = vpop.xlane.xlu0 %2451
        %v2453 = vsel %vm1419, %v2429, 0.0
        %2454 = vadd.xlane.f32.xlu0 %v2453
        %v2455 = vpop.xlane.xlu0 %2454
        %v2456 = vsel %vm1419, %v2430, 0.0
        %2457 = vadd.xlane.f32.xlu0 %v2456
        %v2458 = vpop.xlane.xlu0 %2457
        %v2459 = vsel %vm1419, %v2431, 0.0
        %2460 = vadd.xlane.f32.xlu0 %v2459
        %v2461 = vpop.xlane.xlu0 %2460
        %v2462 = vsel %vm1419, %v2432, 0.0
        %2463 = vadd.xlane.f32.xlu0 %v2462
        %v2464 = vpop.xlane.xlu0 %2463
        %v2465 = vsel %vm1419, %v2433, 0.0
        %2466 = vadd.xlane.f32.xlu0 %v2465
        %v2467 = vpop.xlane.xlu0 %2466
        %v2468 = vsel %vm1419, %v2434, 0.0
        %2469 = vadd.xlane.f32.xlu0 %v2468
        %v2470 = vpop.xlane.xlu0 %2469
        %v2471 = vsel %vm1419, %v2435, 0.0
        %2472 = vadd.xlane.f32.xlu0 %v2471
        %v2473 = vpop.xlane.xlu0 %2472
        %v2474 = vsel %vm1419, %v2436, 0.0
        %2475 = vadd.xlane.f32.xlu0 %v2474
        %v2476 = vpop.xlane.xlu0 %2475
        %v2477 = vsel %vm1419, %v2437, 0.0
        %2478 = vadd.xlane.f32.xlu0 %v2477
        %v2479 = vpop.xlane.xlu0 %2478
        %v2480 = vsel %vm1419, %v2438, 0.0
        %2481 = vadd.xlane.f32.xlu0 %v2480
        %v2482 = vpop.xlane.xlu0 %2481
        %v2483 = vsel %vm1419, %v2439, 0.0
        %2484 = vadd.xlane.f32.xlu0 %v2483
        %v2485 = vpop.xlane.xlu0 %2484
        %v2486 = vsel %vm1419, %v2440, 0.0
        %2487 = vadd.xlane.f32.xlu0 %v2486
        %v2488 = vpop.xlane.xlu0 %2487
        %v2489 = vmul.f32 %v2230, %v2230
        %v2490 = vmul.f32 %v2231, %v2231
        %v2491 = vsel %vm1541, %v2489, 0.0
        %v2492 = vsel %vm1541, %v2490, 0.0
        %v2493 = vadd.f32 %v2491, %v2492
        %v2494 = vrot.slane %v2493, 4
        %v2495 = vadd.f32 %v2493, %v2494
        %v2496 = vrot.slane %v2495, 2
        %v2497 = vadd.f32 %v2495, %v2496
        %v2498 = vrot.slane %v2497, 1
        %v2499 = vadd.f32 %v2497, %v2498
        %v2500 = vadd.f32 %v2443, %v2499
        %v2501 = vadd.f32 %v2446, %v2499
        %v2502 = vadd.f32 %v2449, %v2499
        %v2503 = vadd.f32 %v2452, %v2499
        %v2504 = vadd.f32 %v2455, %v2499
        %v2505 = vadd.f32 %v2458, %v2499
        %v2506 = vadd.f32 %v2461, %v2499
        %v2507 = vadd.f32 %v2464, %v2499
        %v2508 = vadd.f32 %v2467, %v2499
        %v2509 = vadd.f32 %v2470, %v2499
        %v2510 = vadd.f32 %v2473, %v2499
        %v2511 = vadd.f32 %v2476, %v2499
        %v2512 = vadd.f32 %v2479, %v2499
        %v2513 = vadd.f32 %v2482, %v2499
        %v2514 = vadd.f32 %v2485, %v2499
        %v2515 = vadd.f32 %v2488, %v2499
        %v2516 = vmul.f32 %v2347, 2.0
        %v2517 = vmul.f32 %v2352, 2.0
        %v2518 = vmul.f32 %v2357, 2.0
        %v2519 = vmul.f32 %v2362, 2.0
        %v2520 = vmul.f32 %v2367, 2.0
        %v2521 = vmul.f32 %v2372, 2.0
        %v2522 = vmul.f32 %v2377, 2.0
        %v2523 = vmul.f32 %v2382, 2.0
        %v2524 = vmul.f32 %v2387, 2.0
        %v2525 = vmul.f32 %v2392, 2.0
        %v2526 = vmul.f32 %v2397, 2.0
        %v2527 = vmul.f32 %v2402, 2.0
        %v2528 = vmul.f32 %v2407, 2.0
        %v2529 = vmul.f32 %v2412, 2.0
        %v2530 = vmul.f32 %v2417, 2.0
        %v2531 = vmul.f32 %v2422, 2.0
        %v2532 = vsub.f32 %v2500, %v2516
        %v2533 = vsub.f32 %v2501, %v2517
        %v2534 = vsub.f32 %v2502, %v2518
        %v2535 = vsub.f32 %v2503, %v2519
        %v2536 = vsub.f32 %v2504, %v2520
        %v2537 = vsub.f32 %v2505, %v2521
        %v2538 = vsub.f32 %v2506, %v2522
        %v2539 = vsub.f32 %v2507, %v2523
        %v2540 = vsub.f32 %v2508, %v2524
        %v2541 = vsub.f32 %v2509, %v2525
        %v2542 = vsub.f32 %v2510, %v2526
        %v2543 = vsub.f32 %v2511, %v2527
        %v2544 = vsub.f32 %v2512, %v2528
        %v2545 = vsub.f32 %v2513, %v2529
        %v2546 = vsub.f32 %v2514, %v2530
        %v2547 = vsub.f32 %v2515, %v2531
        %v2548 = vmax.f32 %v2532, 0.0
        %v2549 = vmax.f32 %v2533, 0.0
        %v2550 = vmax.f32 %v2534, 0.0
        %v2551 = vmax.f32 %v2535, 0.0
        %v2552 = vmax.f32 %v2536, 0.0
        %v2553 = vmax.f32 %v2537, 0.0
        %v2554 = vmax.f32 %v2538, 0.0
        %v2555 = vmax.f32 %v2539, 0.0
        %v2556 = vmax.f32 %v2540, 0.0
        %v2557 = vmax.f32 %v2541, 0.0
        %v2558 = vmax.f32 %v2542, 0.0
        %v2559 = vmax.f32 %v2543, 0.0
        %v2560 = vmax.f32 %v2544, 0.0
        %v2561 = vmax.f32 %v2545, 0.0
        %v2562 = vmax.f32 %v2546, 0.0
        %v2563 = vmax.f32 %v2547, 0.0
        %v2564 = vadd.f32 %v2548, 1.0
        %v2565 = vadd.f32 %v2549, 1.0
        %v2566 = vadd.f32 %v2550, 1.0
        %v2567 = vadd.f32 %v2551, 1.0
        %v2568 = vadd.f32 %v2552, 1.0
        %v2569 = vadd.f32 %v2553, 1.0
        %v2570 = vadd.f32 %v2554, 1.0
        %v2571 = vadd.f32 %v2555, 1.0
        %v2572 = vadd.f32 %v2556, 1.0
        %v2573 = vadd.f32 %v2557, 1.0
        %v2574 = vadd.f32 %v2558, 1.0
        %v2575 = vadd.f32 %v2559, 1.0
        %v2576 = vadd.f32 %v2560, 1.0
        %v2577 = vadd.f32 %v2561, 1.0
        %v2578 = vadd.f32 %v2562, 1.0
        %v2579 = vadd.f32 %v2563, 1.0
        %v2580 = vrcp.pop %v2564
        %v2581 = vmul.f32 1.0, %v2580
        %v2582 = vrcp.pop %v2565
        %v2583 = vmul.f32 1.0, %v2582
        %v2584 = vrcp.pop %v2566
        %v2585 = vmul.f32 1.0, %v2584
        %v2586 = vrcp.pop %v2567
        %v2587 = vmul.f32 1.0, %v2586
        %v2588 = vrcp.pop %v2568
        %v2589 = vmul.f32 1.0, %v2588
        %v2590 = vrcp.pop %v2569
        %v2591 = vmul.f32 1.0, %v2590
        %v2592 = vrcp.pop %v2570
        %v2593 = vmul.f32 1.0, %v2592
        %v2594 = vrcp.pop %v2571
        %v2595 = vmul.f32 1.0, %v2594
        %v2596 = vrcp.pop %v2572
        %v2597 = vmul.f32 1.0, %v2596
        %v2598 = vrcp.pop %v2573
        %v2599 = vmul.f32 1.0, %v2598
        %v2600 = vrcp.pop %v2574
        %v2601 = vmul.f32 1.0, %v2600
        %v2602 = vrcp.pop %v2575
        %v2603 = vmul.f32 1.0, %v2602
        %v2604 = vrcp.pop %v2576
        %v2605 = vmul.f32 1.0, %v2604
        %v2606 = vrcp.pop %v2577
        %v2607 = vmul.f32 1.0, %v2606
        %v2608 = vrcp.pop %v2578
        %v2609 = vmul.f32 1.0, %v2608
        %v2610 = vrcp.pop %v2579
        %v2611 = vmul.f32 1.0, %v2610
        %v2612 = vsel %vm1541, %v2581, 0.0
        %2613 = vadd.xlane.f32.xlu0 %v2612
        %v2614 = vpop.xlane.xlu0 %2613
        %v2615 = vsel %vm1541, %v2583, 0.0
        %2616 = vadd.xlane.f32.xlu0 %v2615
        %v2617 = vpop.xlane.xlu0 %2616
        %v2618 = vsel %vm1541, %v2585, 0.0
        %2619 = vadd.xlane.f32.xlu0 %v2618
        %v2620 = vpop.xlane.xlu0 %2619
        %v2621 = vsel %vm1541, %v2587, 0.0
        %2622 = vadd.xlane.f32.xlu0 %v2621
        %v2623 = vpop.xlane.xlu0 %2622
        %v2624 = vsel %vm1541, %v2589, 0.0
        %2625 = vadd.xlane.f32.xlu0 %v2624
        %v2626 = vpop.xlane.xlu0 %2625
        %v2627 = vsel %vm1541, %v2591, 0.0
        %2628 = vadd.xlane.f32.xlu0 %v2627
        %v2629 = vpop.xlane.xlu0 %2628
        %v2630 = vsel %vm1541, %v2593, 0.0
        %2631 = vadd.xlane.f32.xlu0 %v2630
        %v2632 = vpop.xlane.xlu0 %2631
        %v2633 = vsel %vm1541, %v2595, 0.0
        %2634 = vadd.xlane.f32.xlu0 %v2633
        %v2635 = vpop.xlane.xlu0 %2634
        %v2636 = vsel %vm1541, %v2597, 0.0
        %2637 = vadd.xlane.f32.xlu0 %v2636
        %v2638 = vpop.xlane.xlu0 %2637
        %v2639 = vsel %vm1541, %v2599, 0.0
        %2640 = vadd.xlane.f32.xlu0 %v2639
        %v2641 = vpop.xlane.xlu0 %2640
        %v2642 = vsel %vm1541, %v2601, 0.0
        %2643 = vadd.xlane.f32.xlu0 %v2642
        %v2644 = vpop.xlane.xlu0 %2643
        %v2645 = vsel %vm1541, %v2603, 0.0
        %2646 = vadd.xlane.f32.xlu0 %v2645
        %v2647 = vpop.xlane.xlu0 %2646
        %v2648 = vsel %vm1541, %v2605, 0.0
        %2649 = vadd.xlane.f32.xlu0 %v2648
        %v2650 = vpop.xlane.xlu0 %2649
        %v2651 = vsel %vm1541, %v2607, 0.0
        %2652 = vadd.xlane.f32.xlu0 %v2651
        %v2653 = vpop.xlane.xlu0 %2652
        %v2654 = vsel %vm1541, %v2609, 0.0
        %2655 = vadd.xlane.f32.xlu0 %v2654
        %v2656 = vpop.xlane.xlu0 %2655
        %v2657 = vsel %vm1541, %v2611, 0.0
        %2658 = vadd.xlane.f32.xlu0 %v2657
        %v2659 = vpop.xlane.xlu0 %2658
        %v2660 = vrcp.pop %v2614
        %v2661 = vmul.f32 %v2581, %v2660
        %v2662 = vrcp.pop %v2617
        %v2663 = vmul.f32 %v2583, %v2662
        %v2664 = vrcp.pop %v2620
        %v2665 = vmul.f32 %v2585, %v2664
        %v2666 = vrcp.pop %v2623
        %v2667 = vmul.f32 %v2587, %v2666
        %v2668 = vrcp.pop %v2626
        %v2669 = vmul.f32 %v2589, %v2668
        %v2670 = vrcp.pop %v2629
        %v2671 = vmul.f32 %v2591, %v2670
        %v2672 = vrcp.pop %v2632
        %v2673 = vmul.f32 %v2593, %v2672
        %v2674 = vrcp.pop %v2635
        %v2675 = vmul.f32 %v2595, %v2674
        %v2676 = vrcp.pop %v2638
        %v2677 = vmul.f32 %v2597, %v2676
        %v2678 = vrcp.pop %v2641
        %v2679 = vmul.f32 %v2599, %v2678
        %v2680 = vrcp.pop %v2644
        %v2681 = vmul.f32 %v2601, %v2680
        %v2682 = vrcp.pop %v2647
        %v2683 = vmul.f32 %v2603, %v2682
        %v2684 = vrcp.pop %v2650
        %v2685 = vmul.f32 %v2605, %v2684
        %v2686 = vrcp.pop %v2653
        %v2687 = vmul.f32 %v2607, %v2686
        %v2688 = vrcp.pop %v2656
        %v2689 = vmul.f32 %v2609, %v2688
        %v2690 = vrcp.pop %v2659
        %v2691 = vmul.f32 %v2611, %v2690
        %2692 = vst.msk [vmem:[%s280] sm:$0xff] %vm1541, %v2661
        %2693 = vst.msk [vmem:[%s280 + $0x8] sm:$0xff] %vm1541, %v2663
        %2694 = vst.msk [vmem:[%s280 + $0x10] sm:$0xff] %vm1541, %v2665
        %2695 = vst.msk [vmem:[%s280 + $0x18] sm:$0xff] %vm1541, %v2667
        %2696 = vst.msk [vmem:[%s280 + $0x20] sm:$0xff] %vm1541, %v2669
        %2697 = vst.msk [vmem:[%s280 + $0x28] sm:$0xff] %vm1541, %v2671
        %2698 = vst.msk [vmem:[%s280 + $0x30] sm:$0xff] %vm1541, %v2673
        %2699 = vst.msk [vmem:[%s280 + $0x38] sm:$0xff] %vm1541, %v2675
        %2700 = vst.msk [vmem:[%s280 + $0x40] sm:$0xff] %vm1541, %v2677
        %2701 = vst.msk [vmem:[%s280 + $0x48] sm:$0xff] %vm1541, %v2679
        %2702 = vst.msk [vmem:[%s280 + $0x50] sm:$0xff] %vm1541, %v2681
        %2703 = vst.msk [vmem:[%s280 + $0x58] sm:$0xff] %vm1541, %v2683
        %2704 = vst.msk [vmem:[%s280 + $0x60] sm:$0xff] %vm1541, %v2685
        %2705 = vst.msk [vmem:[%s280 + $0x68] sm:$0xff] %vm1541, %v2687
        %2706 = vst.msk [vmem:[%s280 + $0x70] sm:$0xff] %vm1541, %v2689
        %2707 = vst.msk [vmem:[%s280 + $0x78] sm:$0xff] %vm1541, %v2691
        %2724 = vrot.lane.b32.xlu0 %v1687, 4
        %v2725 = vpop.permute.xlu0 %2724
        %2726 = vrot.lane.b32.xlu0 %v1689, 4
        %v2727 = vpop.permute.xlu0 %2726
        %2728 = vrot.lane.b32.xlu0 %v1691, 4
        %v2729 = vpop.permute.xlu0 %2728
        %2730 = vrot.lane.b32.xlu0 %v1693, 4
        %v2731 = vpop.permute.xlu0 %2730
        %2732 = vrot.lane.b32.xlu0 %v1695, 4
        %v2733 = vpop.permute.xlu0 %2732
        %2734 = vrot.lane.b32.xlu0 %v1697, 4
        %v2735 = vpop.permute.xlu0 %2734
        %2736 = vrot.lane.b32.xlu0 %v1699, 4
        %v2737 = vpop.permute.xlu0 %2736
        %2738 = vrot.lane.b32.xlu0 %v1701, 4
        %v2739 = vpop.permute.xlu0 %2738
        %2740 = vrot.lane.b32.xlu0 %v1703, 4
        %v2741 = vpop.permute.xlu0 %2740
        %2742 = vrot.lane.b32.xlu0 %v1705, 4
        %v2743 = vpop.permute.xlu0 %2742
        %2744 = vrot.lane.b32.xlu0 %v1707, 4
        %v2745 = vpop.permute.xlu0 %2744
        %2746 = vrot.lane.b32.xlu0 %v1709, 4
        %v2747 = vpop.permute.xlu0 %2746
        %2748 = vrot.lane.b32.xlu0 %v1711, 4
        %v2749 = vpop.permute.xlu0 %2748
        %2750 = vrot.lane.b32.xlu0 %v1713, 4
        %v2751 = vpop.permute.xlu0 %2750
        %2752 = vrot.lane.b32.xlu0 %v1715, 4
        %v2753 = vpop.permute.xlu0 %2752
        %2754 = vrot.lane.b32.xlu0 %v1717, 4
        %v2755 = vpop.permute.xlu0 %2754
        %vm2772 = vcmask 64544
        %2773 = vst.msk [vmem:[%s280] sm:$0xff] %vm2772, %v2725
        %2774 = vst.msk [vmem:[%s280 + $0x8] sm:$0xff] %vm2772, %v2727
        %2775 = vst.msk [vmem:[%s280 + $0x10] sm:$0xff] %vm2772, %v2729
        %2776 = vst.msk [vmem:[%s280 + $0x18] sm:$0xff] %vm2772, %v2731
        %2777 = vst.msk [vmem:[%s280 + $0x20] sm:$0xff] %vm2772, %v2733
        %2778 = vst.msk [vmem:[%s280 + $0x28] sm:$0xff] %vm2772, %v2735
        %2779 = vst.msk [vmem:[%s280 + $0x30] sm:$0xff] %vm2772, %v2737
        %2780 = vst.msk [vmem:[%s280 + $0x38] sm:$0xff] %vm2772, %v2739
        %2781 = vst.msk [vmem:[%s280 + $0x40] sm:$0xff] %vm2772, %v2741
        %2782 = vst.msk [vmem:[%s280 + $0x48] sm:$0xff] %vm2772, %v2743
        %2783 = vst.msk [vmem:[%s280 + $0x50] sm:$0xff] %vm2772, %v2745
        %2784 = vst.msk [vmem:[%s280 + $0x58] sm:$0xff] %vm2772, %v2747
        %2785 = vst.msk [vmem:[%s280 + $0x60] sm:$0xff] %vm2772, %v2749
        %2786 = vst.msk [vmem:[%s280 + $0x68] sm:$0xff] %vm2772, %v2751
        %2787 = vst.msk [vmem:[%s280 + $0x70] sm:$0xff] %vm2772, %v2753
        %2788 = vst.msk [vmem:[%s280 + $0x78] sm:$0xff] %vm2772, %v2755
        %2789 = vrot.lane.b32.xlu0 %v1293, 8
        %v2790 = vpop.permute.xlu0 %2789
        %2791 = vrot.lane.b32.xlu0 %v1296, 8
        %v2792 = vpop.permute.xlu0 %2791
        %2793 = vrot.lane.b32.xlu0 %v1301, 8
        %v2794 = vpop.permute.xlu0 %2793
        %2795 = vrot.lane.b32.xlu0 %v1304, 8
        %v2796 = vpop.permute.xlu0 %2795
        %2797 = vrot.lane.b32.xlu0 %v1309, 8
        %v2798 = vpop.permute.xlu0 %2797
        %2799 = vrot.lane.b32.xlu0 %v1312, 8
        %v2800 = vpop.permute.xlu0 %2799
        %2801 = vrot.lane.b32.xlu0 %v1317, 8
        %v2802 = vpop.permute.xlu0 %2801
        %2803 = vrot.lane.b32.xlu0 %v1320, 8
        %v2804 = vpop.permute.xlu0 %2803
        %2805 = vrot.lane.b32.xlu0 %v1325, 8
        %v2806 = vpop.permute.xlu0 %2805
        %2807 = vrot.lane.b32.xlu0 %v1328, 8
        %v2808 = vpop.permute.xlu0 %2807
        %2809 = vrot.lane.b32.xlu0 %v1333, 8
        %v2810 = vpop.permute.xlu0 %2809
        %2811 = vrot.lane.b32.xlu0 %v1336, 8
        %v2812 = vpop.permute.xlu0 %2811
        %2813 = vrot.lane.b32.xlu0 %v1341, 8
        %v2814 = vpop.permute.xlu0 %2813
        %2815 = vrot.lane.b32.xlu0 %v1344, 8
        %v2816 = vpop.permute.xlu0 %2815
        %2817 = vrot.lane.b32.xlu0 %v1349, 8
        %v2818 = vpop.permute.xlu0 %2817
        %2819 = vrot.lane.b32.xlu0 %v1352, 8
        %v2820 = vpop.permute.xlu0 %2819
        %vm2837 = vcmask 195648
        %2838 = vst.msk [vmem:[%s280] sm:$0xff] %vm2837, %v2790
        %2839 = vst.msk [vmem:[%s280 + $0x8] sm:$0xff] %vm2837, %v2792
        %2840 = vst.msk [vmem:[%s280 + $0x10] sm:$0xff] %vm2837, %v2794
        %2841 = vst.msk [vmem:[%s280 + $0x18] sm:$0xff] %vm2837, %v2796
        %2842 = vst.msk [vmem:[%s280 + $0x20] sm:$0xff] %vm2837, %v2798
        %2843 = vst.msk [vmem:[%s280 + $0x28] sm:$0xff] %vm2837, %v2800
        %2844 = vst.msk [vmem:[%s280 + $0x30] sm:$0xff] %vm2837, %v2802
        %2845 = vst.msk [vmem:[%s280 + $0x38] sm:$0xff] %vm2837, %v2804
        %2846 = vst.msk [vmem:[%s280 + $0x40] sm:$0xff] %vm2837, %v2806
        %2847 = vst.msk [vmem:[%s280 + $0x48] sm:$0xff] %vm2837, %v2808
        %2848 = vst.msk [vmem:[%s280 + $0x50] sm:$0xff] %vm2837, %v2810
        %2849 = vst.msk [vmem:[%s280 + $0x58] sm:$0xff] %vm2837, %v2812
        %2850 = vst.msk [vmem:[%s280 + $0x60] sm:$0xff] %vm2837, %v2814
        %2851 = vst.msk [vmem:[%s280 + $0x68] sm:$0xff] %vm2837, %v2816
        %2852 = vst.msk [vmem:[%s280 + $0x70] sm:$0xff] %vm2837, %v2818
        %2853 = vst.msk [vmem:[%s280 + $0x78] sm:$0xff] %vm2837, %v2820
        %vm2854 = vcmask 1047744
        %2855 = vst.msk [vmem:[%s280] sm:$0xff] %vm2854, 0.0
        %2856 = vst.msk [vmem:[%s280 + $0x8] sm:$0xff] %vm2854, 0.0
        %2857 = vst.msk [vmem:[%s280 + $0x10] sm:$0xff] %vm2854, 0.0
        %2858 = vst.msk [vmem:[%s280 + $0x18] sm:$0xff] %vm2854, 0.0
        %2859 = vst.msk [vmem:[%s280 + $0x20] sm:$0xff] %vm2854, 0.0
        %2860 = vst.msk [vmem:[%s280 + $0x28] sm:$0xff] %vm2854, 0.0
        %2861 = vst.msk [vmem:[%s280 + $0x30] sm:$0xff] %vm2854, 0.0
        %2862 = vst.msk [vmem:[%s280 + $0x38] sm:$0xff] %vm2854, 0.0
        %2863 = vst.msk [vmem:[%s280 + $0x40] sm:$0xff] %vm2854, 0.0
        %2864 = vst.msk [vmem:[%s280 + $0x48] sm:$0xff] %vm2854, 0.0
        %2865 = vst.msk [vmem:[%s280 + $0x50] sm:$0xff] %vm2854, 0.0
        %2866 = vst.msk [vmem:[%s280 + $0x58] sm:$0xff] %vm2854, 0.0
        %2867 = vst.msk [vmem:[%s280 + $0x60] sm:$0xff] %vm2854, 0.0
        %2868 = vst.msk [vmem:[%s280 + $0x68] sm:$0xff] %vm2854, 0.0
        %2869 = vst.msk [vmem:[%s280 + $0x70] sm:$0xff] %vm2854, 0.0
        %2870 = vst.msk [vmem:[%s280 + $0x78] sm:$0xff] %vm2854, 0.0
        %s2871 = smul.u32 16, %s22
        %p2872 = scmp.lt.s32.totalorder %s2871, 63
        %s2873 = scalar_select %p2872, %s2871, 63
        %s2874 = smul.addr %s2873, 8
        %s2875 = scalar_lea.vmem %s6, %s2874
        %s2876 = sand.u32 %s187, 1
        %s2877 = scalar_lea.sflag [#allocation3], %s2876
        %s2878 = sand.u32 %s187, 1
        %s2879 = smul.addr %s2878, 128
        %s2880 = scalar_lea.vmem [#allocation2], %s2879
        // Predicated region
        $region45: #{tpu_custom_call.1} parent=43 // pred_check
          %p2881 = pneg %p171
        $region46: #{tpu_custom_call.1} parent=43 // pred_check_branch
          %2883 = sbr.rel (%p2881) target = $region48
        $region47: #{tpu_custom_call.1} parent=43 // pred_region
          %s2884 = smul.u32 16, %s22
        $region48: #{tpu_custom_call.1} parent=43 // pred_fallthru
          _
        // Predicated region
        $region49: #{tpu_custom_call.1} parent=43 // pred_check
          %p2885 = pneg %p197
        $region50: #{tpu_custom_call.1} parent=43 // pred_check_branch
          %2887 = sbr.rel (%p2885) target = $region52
        $region51: #{tpu_custom_call.1} parent=43 // pred_region
          %s2888 = smul.u32 16, %s22
          %s2890 = ssub.s32 2048, 2048
          %2891 = vsyncadd %s2877, %s2890
          %s2892 = smul.addr %s2888, 128
          %s2893 = scalar_lea.hbm %s7, %s2892
          %s2894 = sshll.u32 %s2880, 4
          %s2895 = int_to_ptr.vmem [resolvable:$true] %s2894
          %2900 = dma.vmem_to_hbm [thread:$0]  %s2895, 2048, %s2893, %s2877, 128, 128, 8
        $region52: #{tpu_custom_call.1} parent=43 // pred_fallthru
          _
      $region44: #{tpu_custom_call.1} parent=5 // pred_fallthru
        _
      %p2901 = scmp.le.s32.totalorder 2, %s17
      // Predicated region
      $region53: #{tpu_custom_call.1} parent=5 // pred_check
        %p2902 = pneg %p2901
      $region54: #{tpu_custom_call.1} parent=5 // pred_check_branch
        %2904 = sbr.rel (%p2902) target = $region56
      $region55: #{tpu_custom_call.1} parent=5 // pred_region
        %s2905 = ssub.s32 %s17, 2
        // Predicated region
        $region57: #{tpu_custom_call.1} parent=55 // pred_check
          %p2906 = pneg %p177
        $region58: #{tpu_custom_call.1} parent=55 // pred_check_branch
          %2908 = sbr.rel (%p2906) target = $region60
        $region59: #{tpu_custom_call.1} parent=55 // pred_region
          %s2909 = smul.u32 16, %s23
          %p2910 = scmp.lt.s32.totalorder %s2909, 63
          %s2911 = scalar_select %p2910, %s2909, 63
          %s2912 = smul.addr %s2911, 8
          %s2913 = scalar_lea.vmem %s6, %s2912
        $region60: #{tpu_custom_call.1} parent=55 // pred_fallthru
          _
        // Predicated region
        $region61: #{tpu_custom_call.1} parent=55 // pred_check
          %p2914 = pneg %p203
        $region62: #{tpu_custom_call.1} parent=55 // pred_check_branch
          %2916 = sbr.rel (%p2914) target = $region64
        $region63: #{tpu_custom_call.1} parent=55 // pred_region
          %s2917 = sand.u32 %s188, 1
          %s2918 = scalar_lea.sflag [#allocation3], %s2917
          %s2919 = sand.u32 %s188, 1
          %s2920 = smul.addr %s2919, 128
          %s2921 = scalar_lea.vmem [#allocation2], %s2920
          %2922 = dma.done %s2918, 2048
        $region64: #{tpu_custom_call.1} parent=55 // pred_fallthru
          _
      $region56: #{tpu_custom_call.1} parent=5 // pred_fallthru
        _
    $region6: #{tpu_custom_call.1} parent=1 // loop_footer
      %s21 = sadd.s32 1, %s17
    $region7: #{tpu_custom_call.1} parent=1 // loop_footer_branch
      %16 = sbr.rel target = $region3
    $region8: #{tpu_custom_call.1} parent=1 // loop_exit
      _
    %2923 = vsyncpa [#allocation3], 1
    %s2924 = scalar_lea.sflag [#allocation3], 1
    %2925 = vsyncpa %s2924, 1

// kernel: tpu_custom_call.1
$region0: #{tpu_custom_call.1}
  #allocation0 [shape = 'u32[]', space=smem, size = 0x4, offset = 0x4, fixed_abs, tag = 'smem constant byte address 0x4 - core index']
  #allocation1 [shape = 'u32[144,128]{1,0:T(1,128)}', space=vmem, size = 0x12000, scoped, tag = 'internal scratch']
  %s0 = inlined_call_operand.vmem [shape: bf16[512,32], index: 0, kind: input, shape index: {}]
  %s1 = inlined_call_operand.vmem [shape: bf16[32,128], index: 1, kind: input, shape index: {}]
  %s2 = inlined_call_operand.vmem [shape: bf16[256,128], index: 2, kind: input, shape index: {}]
  %s3 = inlined_call_operand.vmem [shape: bf16[64,32], index: 3, kind: input, shape index: {}]
  %s4 = inlined_call_operand.vmem [shape: f32[1,768], index: 4, kind: input, shape index: {}]
  %s5 = inlined_call_operand.vmem [shape: f32[16,4], index: 5, kind: input, shape index: {}]
  %s6 = inlined_call_operand.vmem [shape: f32[512,32], index: 6, kind: output, shape index: {0}]
  %s7 = inlined_call_operand.hbm [shape: f32[512,128], index: 7, kind: output, shape index: {1}]
  %8 = xla_tuple %s6, %s7
  %s9 = sld [smem:[#allocation0]]
  $region65: #{tpu_custom_call.1} parent=0
    _
  %s11 = ssub.s32 1, %s9
  %s12 = scalar_select 0, %s11, %s9
  $region1: #{tpu_custom_call.1} parent=0
    #allocation2 [shape = 'u8[131072]{0}', space=vmem, size = 0x20000, scoped, tag = 'output window, operand 1']
    #allocation3 [shape = 's32[2]{0}', space=sflag, size = 0x8, scoped, tag = 'scoped memory for tpu_custom_call.1']
    %13 = vsyncpa [#allocation3], 0
    %s14 = scalar_lea.sflag [#allocation3], 1
    %15 = vsyncpa %s14, 0
    loop: start=0, step=1, limit=6
    $region2: #{tpu_custom_call.1} parent=1 // loop_pre_header
      _
    $region3: #{tpu_custom_call.1} parent=1 // loop_header
      %s17 = sphi 0, %s21
      %p18 = scmp.ge.s32.totalorder %s17, 6
      %s27 = sphi 0, %s29
      %s30 = sphi 0, %s27
      %s31 = sphi 0, %s30
      %s47 = sphi 0, %s31
      %s51 = sphi 0, %s51
      %s53 = sphi 0, %s51
      %s54 = sphi 0, %s53
      %s68 = sphi 0, %s54
      %s72 = sphi 0, %s72
      %s74 = sphi 0, %s72
      %s75 = sphi 0, %s74
      %s89 = sphi 0, %s75
      %s93 = sphi 0, %s93
      %s95 = sphi 0, %s93
      %s96 = sphi 0, %s95
      %s110 = sphi 0, %s96
      %s114 = sphi 0, %s114
      %s116 = sphi 0, %s114
      %s117 = sphi 0, %s116
      %s131 = sphi 0, %s117
      %s135 = sphi 0, %s135
      %s137 = sphi 0, %s135
      %s138 = sphi 0, %s137
      %s152 = sphi 0, %s138
      %s158 = sphi 0, %s160
      %s161 = sphi 0, %s158
      %s162 = sphi 0, %s161
      %s178 = sphi 0, %s162
      %s184 = sphi 0, %s186
      %s187 = sphi 0, %s184
      %s188 = sphi 0, %s187
      %s204 = sphi 0, %s188
    $region4: #{tpu_custom_call.1} parent=1 // loop_header_branch
      %20 = sbr.rel (%p18) target = $region8
    $region5: #{tpu_custom_call.1} parent=1 // loop_body
      %s22 = ssub.s32 %s17, 1
      %s23 = ssub.s32 %s17, 2
      %s24 = sadd.s32 %s17, 1
      %s25 = ssub.s32 %s17, %s24
      %p26 = scmp.eq.s32.totalorder %s25, 0
      %s28 = sadd.s32 %s27, 1
      %s29 = scalar_select %p26, %s27, %s28
      %p32 = pneg %p26
      %p33 = scmp.eq.s32.totalorder %s17, 3
      %p34 = por %p32, %p33
      %p35 = scmp.ne.s32.totalorder %s27, %s30
      %p36 = scmp.eq.s32.totalorder %s17, 0
      %p37 = por %p35, %p36
      %p38 = scmp.ne.s32.totalorder %s27, %s30
      %p39 = scmp.eq.s32.totalorder %s22, 3
      %p40 = por %p38, %p39
      %p41 = scmp.ne.s32.totalorder %s30, %s31
      %p42 = scmp.eq.s32.totalorder %s22, 0
      %p43 = por %p41, %p42
      %p44 = scmp.ne.s32.totalorder %s30, %s31
      %p45 = scmp.eq.s32.totalorder %s23, 3
      %p46 = por %p44, %p45
      %p48 = scmp.ne.s32.totalorder %s31, %s47
      %p49 = scmp.eq.s32.totalorder %s23, 0
      %p50 = por %p48, %p49
      %s52 = sadd.s32 %s51, 1
      %p55 = scmp.eq.s32.totalorder %s17, 3
      %p56 = scmp.ne.s32.totalorder %s51, %s53
      %p57 = scmp.eq.s32.totalorder %s17, 0
      %p58 = por %p56, %p57
      %p59 = scmp.ne.s32.totalorder %s51, %s53
      %p60 = scmp.eq.s32.totalorder %s22, 3
      %p61 = por %p59, %p60
      %p62 = scmp.ne.s32.totalorder %s53, %s54
      %p63 = scmp.eq.s32.totalorder %s22, 0
      %p64 = por %p62, %p63
      %p65 = scmp.ne.s32.totalorder %s53, %s54
      %p66 = scmp.eq.s32.totalorder %s23, 3
      %p67 = por %p65, %p66
      %p69 = scmp.ne.s32.totalorder %s54, %s68
      %p70 = scmp.eq.s32.totalorder %s23, 0
      %p71 = por %p69, %p70
      %s73 = sadd.s32 %s72, 1
      %p76 = scmp.eq.s32.totalorder %s17, 3
      %p77 = scmp.ne.s32.totalorder %s72, %s74
      %p78 = scmp.eq.s32.totalorder %s17, 0
      %p79 = por %p77, %p78
      %p80 = scmp.ne.s32.totalorder %s72, %s74
      %p81 = scmp.eq.s32.totalorder %s22, 3
      %p82 = por %p80, %p81
      %p83 = scmp.ne.s32.totalorder %s74, %s75
      %p84 = scmp.eq.s32.totalorder %s22, 0
      %p85 = por %p83, %p84
      %p86 = scmp.ne.s32.totalorder %s74, %s75
      %p87 = scmp.eq.s32.totalorder %s23, 3
      %p88 = por %p86, %p87
      %p90 = scmp.ne.s32.totalorder %s75, %s89
      %p91 = scmp.eq.s32.totalorder %s23, 0
      %p92 = por %p90, %p91
      %s94 = sadd.s32 %s93, 1
      %p97 = scmp.eq.s32.totalorder %s17, 3
      %p98 = scmp.ne.s32.totalorder %s93, %s95
      %p99 = scmp.eq.s32.totalorder %s17, 0
      %p100 = por %p98, %p99
      %p101 = scmp.ne.s32.totalorder %s93, %s95
      %p102 = scmp.eq.s32.totalorder %s22, 3
      %p103 = por %p101, %p102
      %p104 = scmp.ne.s32.totalorder %s95, %s96
      %p105 = scmp.eq.s32.totalorder %s22, 0
      %p106 = por %p104, %p105
      %p107 = scmp.ne.s32.totalorder %s95, %s96
      %p108 = scmp.eq.s32.totalorder %s23, 3
      %p109 = por %p107, %p108
      %p111 = scmp.ne.s32.totalorder %s96, %s110
      %p112 = scmp.eq.s32.totalorder %s23, 0
      %p113 = por %p111, %p112
      %s115 = sadd.s32 %s114, 1
      %p118 = scmp.eq.s32.totalorder %s17, 3
      %p119 = scmp.ne.s32.totalorder %s114, %s116
      %p120 = scmp.eq.s32.totalorder %s17, 0
      %p121 = por %p119, %p120
      %p122 = scmp.ne.s32.totalorder %s114, %s116
      %p123 = scmp.eq.s32.totalorder %s22, 3
      %p124 = por %p122, %p123
      %p125 = scmp.ne.s32.totalorder %s116, %s117
      %p126 = scmp.eq.s32.totalorder %s22, 0
      %p127 = por %p125, %p126
      %p128 = scmp.ne.s32.totalorder %s116, %s117
      %p129 = scmp.eq.s32.totalorder %s23, 3
      %p130 = por %p128, %p129
      %p132 = scmp.ne.s32.totalorder %s117, %s131
      %p133 = scmp.eq.s32.totalorder %s23, 0
      %p134 = por %p132, %p133
      %s136 = sadd.s32 %s135, 1
      %p139 = scmp.eq.s32.totalorder %s17, 3
      %p140 = scmp.ne.s32.totalorder %s135, %s137
      %p141 = scmp.eq.s32.totalorder %s17, 0
      %p142 = por %p140, %p141
      %p143 = scmp.ne.s32.totalorder %s135, %s137
      %p144 = scmp.eq.s32.totalorder %s22, 3
      %p145 = por %p143, %p144
      %p146 = scmp.ne.s32.totalorder %s137, %s138
      %p147 = scmp.eq.s32.totalorder %s22, 0
      %p148 = por %p146, %p147
      %p149 = scmp.ne.s32.totalorder %s137, %s138
      %p150 = scmp.eq.s32.totalorder %s23, 3
      %p151 = por %p149, %p150
      %p153 = scmp.ne.s32.totalorder %s138, %s152
      %p154 = scmp.eq.s32.totalorder %s23, 0
      %p155 = por %p153, %p154
      %s156 = ssub.s32 %s17, %s24
      %p157 = scmp.eq.s32.totalorder %s156, 0
      %s159 = sadd.s32 %s158, 1
      %s160 = scalar_select %p157, %s158, %s159
      %p163 = pneg %p157
      %p164 = scmp.eq.s32.totalorder %s17, 3
      %p165 = por %p163, %p164
      %p166 = scmp.ne.s32.totalorder %s158, %s161
      %p167 = scmp.eq.s32.totalorder %s17, 0
      %p168 = por %p166, %p167
      %p169 = scmp.ne.s32.totalorder %s158, %s161
      %p170 = scmp.eq.s32.totalorder %s22, 3
      %p171 = por %p169, %p170
      %p172 = scmp.ne.s32.totalorder %s161, %s162
      %p173 = scmp.eq.s32.totalorder %s22, 0
      %p174 = por %p172, %p173
      %p175 = scmp.ne.s32.totalorder %s161, %s162
      %p176 = scmp.eq.s32.totalorder %s23, 3
      %p177 = por %p175, %p176
      %p179 = scmp.ne.s32.totalorder %s162, %s178
      %p180 = scmp.eq.s32.totalorder %s23, 0
      %p181 = por %p179, %p180
      %s182 = ssub.s32 %s17, %s24
      %p183 = scmp.eq.s32.totalorder %s182, 0
      %s185 = sadd.s32 %s184, 1
      %s186 = scalar_select %p183, %s184, %s185
      %p189 = pneg %p183
      %p190 = scmp.eq.s32.totalorder %s17, 3
      %p191 = por %p189, %p190
      %p192 = scmp.ne.s32.totalorder %s184, %s187
      %p193 = scmp.eq.s32.totalorder %s17, 0
      %p194 = por %p192, %p193
      %p195 = scmp.ne.s32.totalorder %s184, %s187
      %p196 = scmp.eq.s32.totalorder %s22, 3
      %p197 = por %p195, %p196
      %p198 = scmp.ne.s32.totalorder %s187, %s188
      %p199 = scmp.eq.s32.totalorder %s22, 0
      %p200 = por %p198, %p199
      %p201 = scmp.ne.s32.totalorder %s187, %s188
      %p202 = scmp.eq.s32.totalorder %s23, 3
      %p203 = por %p201, %p202
      %p205 = scmp.ne.s32.totalorder %s188, %s204
      %p206 = scmp.eq.s32.totalorder %s23, 0
      %p207 = por %p205, %p206
      %p208 = scmp.le.s32.totalorder 1, %s17
      %p209 = scmp.lt.s32.totalorder %s17, 5
      %p210 = pnand %p208, %p209
      %p211 = pneg %p210
      // Predicated region
      $region9: #{tpu_custom_call.1} parent=5 // pred_check
        _
      $region10: #{tpu_custom_call.1} parent=5 // pred_check_branch
        %213 = sbr.rel (%p210) target = $region12
      $region11: #{tpu_custom_call.1} parent=5 // pred_region
        %s214 = ssub.s32 %s17, 1
        // Predicated region
        $region13: #{tpu_custom_call.1} parent=11 // pred_check
          %p215 = pneg %p64
        $region14: #{tpu_custom_call.1} parent=11 // pred_check_branch
          %217 = sbr.rel (%p215) target = $region16
        $region15: #{tpu_custom_call.1} parent=11 // pred_region
          _
        $region16: #{tpu_custom_call.1} parent=11 // pred_fallthru
          _
        // Predicated region
        $region17: #{tpu_custom_call.1} parent=11 // pred_check
          %p218 = pneg %p85
        $region18: #{tpu_custom_call.1} parent=11 // pred_check_branch
          %220 = sbr.rel (%p218) target = $region20
        $region19: #{tpu_custom_call.1} parent=11 // pred_region
          _
        $region20: #{tpu_custom_call.1} parent=11 // pred_fallthru
          _
        // Predicated region
        $region21: #{tpu_custom_call.1} parent=11 // pred_check
          %p221 = pneg %p106
        $region22: #{tpu_custom_call.1} parent=11 // pred_check_branch
          %223 = sbr.rel (%p221) target = $region24
        $region23: #{tpu_custom_call.1} parent=11 // pred_region
          _
        $region24: #{tpu_custom_call.1} parent=11 // pred_fallthru
          _
        // Predicated region
        $region25: #{tpu_custom_call.1} parent=11 // pred_check
          %p224 = pneg %p127
        $region26: #{tpu_custom_call.1} parent=11 // pred_check_branch
          %226 = sbr.rel (%p224) target = $region28
        $region27: #{tpu_custom_call.1} parent=11 // pred_region
          _
        $region28: #{tpu_custom_call.1} parent=11 // pred_fallthru
          _
        // Predicated region
        $region29: #{tpu_custom_call.1} parent=11 // pred_check
          %p227 = pneg %p148
        $region30: #{tpu_custom_call.1} parent=11 // pred_check_branch
          %229 = sbr.rel (%p227) target = $region32
        $region31: #{tpu_custom_call.1} parent=11 // pred_region
          _
        $region32: #{tpu_custom_call.1} parent=11 // pred_fallthru
          _
      $region12: #{tpu_custom_call.1} parent=5 // pred_fallthru
        _
      %p230 = scmp.lt.s32.totalorder %s17, 4
      // Predicated region
      $region33: #{tpu_custom_call.1} parent=5 // pred_check
        %p231 = pneg %p230
      $region34: #{tpu_custom_call.1} parent=5 // pred_check_branch
        %233 = sbr.rel (%p231) target = $region36
      $region35: #{tpu_custom_call.1} parent=5 // pred_region
        // Predicated region
        $region37: #{tpu_custom_call.1} parent=35 // pred_check
          %p234 = pneg %p37
        $region38: #{tpu_custom_call.1} parent=35 // pred_check_branch
          %236 = sbr.rel (%p234) target = $region40
        $region39: #{tpu_custom_call.1} parent=35 // pred_region
          %s237 = smul.u32 16, %s17
          %p238 = scmp.lt.s32.totalorder %s237, 63
          %s239 = scalar_select %p238, %s237, 63
          %s240 = smul.addr %s239, 4
          %s241 = scalar_lea.vmem %s0, %s240
          %s242 = smul.u32 16, %s17
        $region40: #{tpu_custom_call.1} parent=35 // pred_fallthru
          _
      $region36: #{tpu_custom_call.1} parent=5 // pred_fallthru
        _
      %p243 = scmp.le.s32.totalorder 1, %s17
      %p244 = scmp.lt.s32.totalorder %s17, 5
      %p245 = pnand %p243, %p244
      %p246 = pneg %p245
      // Predicated region
      $region41: #{tpu_custom_call.1} parent=5 // pred_check
        _
      $region42: #{tpu_custom_call.1} parent=5 // pred_check_branch
        %248 = sbr.rel (%p245) target = $region44
      $region43: #{tpu_custom_call.1} parent=5 // pred_region
        %s249 = ssub.s32 %s17, 1
        %s250 = smul.u32 16, %s22
        %p251 = scmp.lt.s32.totalorder %s250, 63
        %s252 = scalar_select %p251, %s250, 63
        %s253 = smul.addr %s252, 4
        %s254 = scalar_lea.vmem %s0, %s253
        %p255 = pneg %p43
        %p256 = pneg %p40
        %p257 = pneg %p64
        %p258 = pneg %p61
        %p259 = pneg %p85
        %p260 = pneg %p82
        %p261 = pneg %p106
        %p262 = pneg %p103
        %p263 = pneg %p127
        %p264 = pneg %p124
        %p265 = pneg %p148
        %p266 = pneg %p145
        %p267 = pneg %p174
        %p268 = pneg %p171
        %s269 = smul.u32 16, %s22
        %p270 = scmp.lt.s32.totalorder %s269, 63
        %s271 = scalar_select %p270, %s269, 63
        %s272 = smul.addr %s271, 8
        %s273 = scalar_lea.vmem %s6, %s272
        %p274 = pneg %p200
        %p275 = pneg %p197
        %s276 = sand.u32 %s187, 1
        %s277 = scalar_lea.sflag [#allocation3], %s276
        %s278 = sand.u32 %s187, 1
        %s279 = smul.addr %s278, 128
        %s280 = scalar_lea.vmem [#allocation2], %s279
        %s281 = smul.u32 16, %s22
        %p282 = scmp.lt.s32.totalorder %s281, 63
        %s283 = scalar_select %p282, %s281, 63
        %s284 = smul.addr %s283, 4
        %s285 = scalar_lea.vmem %s0, %s284
        %s286 = smul.u32 16, %s22
        %s287 = smul.u32 16, %s22
        %p288 = scmp.lt.s32.totalorder %s287, 63
        %s289 = scalar_select %p288, %s287, 63
        %s290 = smul.addr %s289, 8
        %s291 = scalar_lea.vmem %s6, %s290
        %s292 = smul.u32 16, %s22
        %s293 = smul.u32 16, %s22
        %v295 = vld [vmem:[%s285] sm:$0xf]
        %v296 = vld [vmem:[%s285 + $0x4] sm:$0xf]
        %v297 = vld [vmem:[%s285 + $0x8] sm:$0xf]
        %v298 = vld [vmem:[%s285 + $0xc] sm:$0xf]
        %v299 = vld [vmem:[%s285 + $0x10] sm:$0xf]
        %v300 = vld [vmem:[%s285 + $0x14] sm:$0xf]
        %v301 = vld [vmem:[%s285 + $0x18] sm:$0xf]
        %v302 = vld [vmem:[%s285 + $0x1c] sm:$0xf]
        %v303 = vld [vmem:[%s285 + $0x20] sm:$0xf]
        %v304 = vld [vmem:[%s285 + $0x24] sm:$0xf]
        %v305 = vld [vmem:[%s285 + $0x28] sm:$0xf]
        %v306 = vld [vmem:[%s285 + $0x2c] sm:$0xf]
        %v307 = vld [vmem:[%s285 + $0x30] sm:$0xf]
        %v308 = vld [vmem:[%s285 + $0x34] sm:$0xf]
        %v309 = vld [vmem:[%s285 + $0x38] sm:$0xf]
        %v310 = vld [vmem:[%s285 + $0x3c] sm:$0xf]
        %v311 = vld [vmem:[%s1] sm:$0xf]
        %v312 = vld [vmem:[%s1 + $0x4] sm:$0xf]
        %v313 = vld [vmem:[%s1 + $0x8] sm:$0xf]
        %v314 = vld [vmem:[%s1 + $0xc] sm:$0xf]
        %v315 = vld [vmem:[%s4] sm:$0x1]
        %v317 = vlaneseq
        %v318 = vshrl.u32 %v317, 7
        %v319 = vsub.s32 0, %v318
        %v320 = vrot.slane %v315, %v319
        %v338 = vunpack.c.l.b16 %v295
        %v339 = vunpack.c.l.b16 %v296
        %v340 = vunpack.c.l.b16 %v297
        %v341 = vunpack.c.l.b16 %v298
        %v342 = vunpack.c.l.b16 %v299
        %v343 = vunpack.c.l.b16 %v300
        %v344 = vunpack.c.l.b16 %v301
        %v345 = vunpack.c.l.b16 %v302
        %v346 = vunpack.c.l.b16 %v303
        %v347 = vunpack.c.l.b16 %v304
        %v348 = vunpack.c.l.b16 %v305
        %v349 = vunpack.c.l.b16 %v306
        %v350 = vunpack.c.l.b16 %v307
        %v351 = vunpack.c.l.b16 %v308
        %v352 = vunpack.c.l.b16 %v309
        %v353 = vunpack.c.l.b16 %v310
        %v354 = vpack.c.b16 %v339, %v338
        %v355 = vpack.c.b16 %v341, %v340
        %v356 = vpack.c.b16 %v343, %v342
        %v357 = vpack.c.b16 %v345, %v344
        %v358 = vpack.c.b16 %v347, %v346
        %v359 = vpack.c.b16 %v349, %v348
        %v360 = vpack.c.b16 %v351, %v350
        %v361 = vpack.c.b16 %v353, %v352
        %v366 = vunpack.c.l.b16 %v311
        %v367 = vunpack.c.l.b16 %v312
        %v368 = vunpack.c.l.b16 %v313
        %v369 = vunpack.c.l.b16 %v314
        %v370 = vpack.c.b16 %v367, %v366
        %v371 = vpack.c.b16 %v369, %v368
        %vm374 = vcmask 261120
        %v376 = vsel %vm374, %v354, 0
        %v379 = vsel %vm374, %v355, 0
        %v382 = vsel %vm374, %v356, 0
        %v385 = vsel %vm374, %v357, 0
        %v388 = vsel %vm374, %v358, 0
        %v391 = vsel %vm374, %v359, 0
        %v394 = vsel %vm374, %v360, 0
        %v397 = vsel %vm374, %v361, 0
        %399 = vmatprep.subr.bf16.mxu0 0
        %400 = vmatpush1.bf16.msra.mxu0 0
        %401 = vmatprep.subr.bf16.mxu0 0
        %402 = vmatpush1.bf16.msra.mxu0 0
        %403 = vmatprep.subr.bf16.mxu0 0
        %404 = vmatpush1.bf16.msra.mxu0 0
        %405 = vmatprep.subr.bf16.mxu0 0
        %406 = vmatpush1.bf16.msra.mxu0 0
        %407 = vmatprep.subr.bf16.mxu0 0
        %408 = vmatpush1.bf16.msra.mxu0 0
        %409 = vmatprep.subr.bf16.mxu0 0
        %410 = vmatpush1.bf16.msra.mxu0 0
        %411 = vmatprep.subr.bf16.mxu0 0
        %412 = vmatpush1.bf16.msra.mxu0 %v371
        %413 = vmatprep.subr.bf16.mxu0 0
        %414 = vmatpush1.bf16.msra.mxu0 %v370
        %415 = vmatprep.subr.bf16.mxu0 0
        %416 = vmatpush2.bf16.msra.mxu0 0
        %417 = vmatprep.subr.bf16.mxu0 0
        %418 = vmatpush2.bf16.msra.mxu0 0
        %419 = vmatprep.subr.bf16.mxu0 0
        %420 = vmatpush2.bf16.msra.mxu0 0
        %421 = vmatprep.subr.bf16.mxu0 0
        %422 = vmatpush2.bf16.msra.mxu0 0
        %423 = vmatprep.subr.bf16.mxu0 0
        %424 = vmatpush2.bf16.msra.mxu0 0
        %425 = vmatprep.subr.bf16.mxu0 0
        %426 = vmatpush2.bf16.msra.mxu0 0
        %427 = vmatprep.subr.bf16.mxu0 0
        %428 = vmatpush2.bf16.msra.mxu0 0
        %429 = vmatprep.subr.bf16.mxu0 0
        %430 = vmatpush2.bf16.msra.mxu0 0
        %431 = vmatprep.mubr.bf16.mxu0 0
        %432 = vmatmul.mubr.bf16.gmra.mxu0 %v376
        %v433 = vpop.f32.mrf.mxu0
        %v434 = vadd.f32 %v320, %v433
        %v435 = vpop.f32.mrf.mxu0
        %v436 = vpop.f32.mrf.mxu0
        %v437 = vadd.f32 %v320, %v436
        %v438 = vpop.f32.mrf.mxu0
        %439 = vmatprep.mubr.bf16.mxu0 0
        %440 = vmatmul.mubr.bf16.gmra.mxu0 %v379
        %v441 = vpop.f32.mrf.mxu0
        %v442 = vadd.f32 %v320, %v441
        %v443 = vpop.f32.mrf.mxu0
        %v444 = vpop.f32.mrf.mxu0
        %v445 = vadd.f32 %v320, %v444
        %v446 = vpop.f32.mrf.mxu0
        %447 = vmatprep.mubr.bf16.mxu0 0
        %448 = vmatmul.mubr.bf16.gmra.mxu0 %v382
        %v449 = vpop.f32.mrf.mxu0
        %v450 = vadd.f32 %v320, %v449
        %v451 = vpop.f32.mrf.mxu0
        %v452 = vpop.f32.mrf.mxu0
        %v453 = vadd.f32 %v320, %v452
        %v454 = vpop.f32.mrf.mxu0
        %455 = vmatprep.mubr.bf16.mxu0 0
        %456 = vmatmul.mubr.bf16.gmra.mxu0 %v385
        %v457 = vpop.f32.mrf.mxu0
        %v458 = vadd.f32 %v320, %v457
        %v459 = vpop.f32.mrf.mxu0
        %v460 = vpop.f32.mrf.mxu0
        %v461 = vadd.f32 %v320, %v460
        %v462 = vpop.f32.mrf.mxu0
        %463 = vmatprep.mubr.bf16.mxu0 0
        %464 = vmatmul.mubr.bf16.gmra.mxu0 %v388
        %v465 = vpop.f32.mrf.mxu0
        %v466 = vadd.f32 %v320, %v465
        %v467 = vpop.f32.mrf.mxu0
        %v468 = vpop.f32.mrf.mxu0
        %v469 = vadd.f32 %v320, %v468
        %v470 = vpop.f32.mrf.mxu0
        %471 = vmatprep.mubr.bf16.mxu0 0
        %472 = vmatmul.mubr.bf16.gmra.mxu0 %v391
        %v473 = vpop.f32.mrf.mxu0
        %v474 = vadd.f32 %v320, %v473
        %v475 = vpop.f32.mrf.mxu0
        %v476 = vpop.f32.mrf.mxu0
        %v477 = vadd.f32 %v320, %v476
        %v478 = vpop.f32.mrf.mxu0
        %479 = vmatprep.mubr.bf16.mxu0 0
        %480 = vmatmul.mubr.bf16.gmra.mxu0 %v394
        %v481 = vpop.f32.mrf.mxu0
        %v482 = vadd.f32 %v320, %v481
        %v483 = vpop.f32.mrf.mxu0
        %v484 = vpop.f32.mrf.mxu0
        %v485 = vadd.f32 %v320, %v484
        %v486 = vpop.f32.mrf.mxu0
        %487 = vmatprep.mubr.bf16.mxu0 0
        %488 = vmatmul.mubr.bf16.gmra.mxu0 %v397
        %v489 = vpop.f32.mrf.mxu0
        %v490 = vadd.f32 %v320, %v489
        %v491 = vpop.f32.mrf.mxu0
        %v492 = vpop.f32.mrf.mxu0
        %v493 = vadd.f32 %v320, %v492
        %v494 = vpop.f32.mrf.mxu0
        %495 = vdwg.mxu0
        %v496 = vmax.f32 %v434, 0.0
        %v497 = vmax.f32 %v437, 0.0
        %v498 = vmax.f32 %v442, 0.0
        %v499 = vmax.f32 %v445, 0.0
        %v500 = vmax.f32 %v450, 0.0
        %v501 = vmax.f32 %v453, 0.0
        %v502 = vmax.f32 %v458, 0.0
        %v503 = vmax.f32 %v461, 0.0
        %v504 = vmax.f32 %v466, 0.0
        %v505 = vmax.f32 %v469, 0.0
        %v506 = vmax.f32 %v474, 0.0
        %v507 = vmax.f32 %v477, 0.0
        %v508 = vmax.f32 %v482, 0.0
        %v509 = vmax.f32 %v485, 0.0
        %v510 = vmax.f32 %v490, 0.0
        %v511 = vmax.f32 %v493, 0.0
        %v512 = vmul.f32 %v496, 0.5
        %v513 = vmul.f32 %v497, 0.5
        %v514 = vmul.f32 %v498, 0.5
        %v515 = vmul.f32 %v499, 0.5
        %v516 = vmul.f32 %v500, 0.5
        %v517 = vmul.f32 %v501, 0.5
        %v518 = vmul.f32 %v502, 0.5
        %v519 = vmul.f32 %v503, 0.5
        %v520 = vmul.f32 %v504, 0.5
        %v521 = vmul.f32 %v505, 0.5
        %v522 = vmul.f32 %v506, 0.5
        %v523 = vmul.f32 %v507, 0.5
        %v524 = vmul.f32 %v508, 0.5
        %v525 = vmul.f32 %v509, 0.5
        %v526 = vmul.f32 %v510, 0.5
        %v527 = vmul.f32 %v511, 0.5
        %544 = vrot.lane.b32.xlu0 %v512, 64
        %v545 = vpop.permute.xlu0 %544
        %546 = vrot.lane.b32.xlu0 %v513, 64
        %v547 = vpop.permute.xlu0 %546
        %548 = vrot.lane.b32.xlu0 %v514, 64
        %v549 = vpop.permute.xlu0 %548
        %550 = vrot.lane.b32.xlu0 %v515, 64
        %v551 = vpop.permute.xlu0 %550
        %552 = vrot.lane.b32.xlu0 %v516, 64
        %v553 = vpop.permute.xlu0 %552
        %554 = vrot.lane.b32.xlu0 %v517, 64
        %v555 = vpop.permute.xlu0 %554
        %556 = vrot.lane.b32.xlu0 %v518, 64
        %v557 = vpop.permute.xlu0 %556
        %558 = vrot.lane.b32.xlu0 %v519, 64
        %v559 = vpop.permute.xlu0 %558
        %560 = vrot.lane.b32.xlu0 %v520, 64
        %v561 = vpop.permute.xlu0 %560
        %562 = vrot.lane.b32.xlu0 %v521, 64
        %v563 = vpop.permute.xlu0 %562
        %564 = vrot.lane.b32.xlu0 %v522, 64
        %v565 = vpop.permute.xlu0 %564
        %566 = vrot.lane.b32.xlu0 %v523, 64
        %v567 = vpop.permute.xlu0 %566
        %568 = vrot.lane.b32.xlu0 %v524, 64
        %v569 = vpop.permute.xlu0 %568
        %570 = vrot.lane.b32.xlu0 %v525, 64
        %v571 = vpop.permute.xlu0 %570
        %572 = vrot.lane.b32.xlu0 %v526, 64
        %v573 = vpop.permute.xlu0 %572
        %574 = vrot.lane.b32.xlu0 %v527, 64
        %v575 = vpop.permute.xlu0 %574
        %v592 = vadd.f32 %v512, %v545
        %v593 = vadd.f32 %v513, %v547
        %v594 = vadd.f32 %v514, %v549
        %v595 = vadd.f32 %v515, %v551
        %v596 = vadd.f32 %v516, %v553
        %v597 = vadd.f32 %v517, %v555
        %v598 = vadd.f32 %v518, %v557
        %v599 = vadd.f32 %v519, %v559
        %v600 = vadd.f32 %v520, %v561
        %v601 = vadd.f32 %v521, %v563
        %v602 = vadd.f32 %v522, %v565
        %v603 = vadd.f32 %v523, %v567
        %v604 = vadd.f32 %v524, %v569
        %v605 = vadd.f32 %v525, %v571
        %v606 = vadd.f32 %v526, %v573
        %v607 = vadd.f32 %v527, %v575
        %v608 = vld [vmem:[%s2 + $0x48] sm:$0xf]
        %v609 = vld [vmem:[%s2 + $0x4c] sm:$0xf]
        %v610 = vld [vmem:[%s2 + $0x50] sm:$0xf]
        %v611 = vld [vmem:[%s2 + $0x54] sm:$0xf]
        %v612 = vld [vmem:[%s2 + $0x58] sm:$0xf]
        %v613 = vld [vmem:[%s2 + $0x5c] sm:$0xf]
        %v614 = vld [vmem:[%s2 + $0x60] sm:$0xf]
        %v615 = vld [vmem:[%s2 + $0x64] sm:$0xf]
        %v616 = vpack.c.bf16 %v593, %v592
        %v617 = vpack.c.bf16 %v595, %v594
        %v618 = vpack.c.bf16 %v597, %v596
        %v619 = vpack.c.bf16 %v599, %v598
        %v620 = vpack.c.bf16 %v601, %v600
        %v621 = vpack.c.bf16 %v603, %v602
        %v622 = vpack.c.bf16 %v605, %v604
        %v623 = vpack.c.bf16 %v607, %v606
        %632 = vrot.lane.b32.xlu0 %v616, 64
        %v633 = vpop.permute.xlu0 %632
        %634 = vrot.lane.b32.xlu0 %v617, 64
        %v635 = vpop.permute.xlu0 %634
        %636 = vrot.lane.b32.xlu0 %v618, 64
        %v637 = vpop.permute.xlu0 %636
        %638 = vrot.lane.b32.xlu0 %v619, 64
        %v639 = vpop.permute.xlu0 %638
        %640 = vrot.lane.b32.xlu0 %v620, 64
        %v641 = vpop.permute.xlu0 %640
        %642 = vrot.lane.b32.xlu0 %v621, 64
        %v643 = vpop.permute.xlu0 %642
        %644 = vrot.lane.b32.xlu0 %v622, 64
        %v645 = vpop.permute.xlu0 %644
        %646 = vrot.lane.b32.xlu0 %v623, 64
        %v647 = vpop.permute.xlu0 %646
        %v656 = vunpack.c.l.b16 %v608
        %v657 = vunpack.c.l.b16 %v609
        %v658 = vunpack.c.l.b16 %v610
        %v659 = vunpack.c.l.b16 %v611
        %v660 = vunpack.c.l.b16 %v612
        %v661 = vunpack.c.l.b16 %v613
        %v662 = vunpack.c.l.b16 %v614
        %v663 = vunpack.c.l.b16 %v615
        %v664 = vpack.c.b16 %v657, %v656
        %v665 = vpack.c.b16 %v659, %v658
        %v666 = vpack.c.b16 %v661, %v660
        %v667 = vpack.c.b16 %v663, %v662
        %vm672 = vcmask 523264
        %v674 = vsel %vm672, %v633, 0
        %v677 = vsel %vm672, %v635, 0
        %v680 = vsel %vm672, %v637, 0
        %v683 = vsel %vm672, %v639, 0
        %v686 = vsel %vm672, %v641, 0
        %v689 = vsel %vm672, %v643, 0
        %v692 = vsel %vm672, %v645, 0
        %v695 = vsel %vm672, %v647, 0
        %697 = vmatprep.subr.bf16.mxu0 0
        %698 = vmatpush1.bf16.msra.mxu0 0
        %699 = vmatprep.subr.bf16.mxu0 0
        %700 = vmatpush1.bf16.msra.mxu0 0
        %701 = vmatprep.subr.bf16.mxu0 0
        %702 = vmatpush1.bf16.msra.mxu0 0
        %703 = vmatprep.subr.bf16.mxu0 0
        %704 = vmatpush1.bf16.msra.mxu0 0
        %705 = vmatprep.subr.bf16.mxu0 0
        %706 = vmatpush1.bf16.msra.mxu0 %v667
        %707 = vmatprep.subr.bf16.mxu0 0
        %708 = vmatpush1.bf16.msra.mxu0 %v666
        %709 = vmatprep.subr.bf16.mxu0 0
        %710 = vmatpush1.bf16.msra.mxu0 %v665
        %711 = vmatprep.subr.bf16.mxu0 0
        %712 = vmatpush1.bf16.msra.mxu0 %v664
        %713 = vmatprep.subr.bf16.mxu0 0
        %714 = vmatpush2.bf16.msra.mxu0 0
        %715 = vmatprep.subr.bf16.mxu0 0
        %716 = vmatpush2.bf16.msra.mxu0 0
        %717 = vmatprep.subr.bf16.mxu0 0
        %718 = vmatpush2.bf16.msra.mxu0 0
        %719 = vmatprep.subr.bf16.mxu0 0
        %720 = vmatpush2.bf16.msra.mxu0 0
        %721 = vmatprep.subr.bf16.mxu0 0
        %722 = vmatpush2.bf16.msra.mxu0 0
        %723 = vmatprep.subr.bf16.mxu0 0
        %724 = vmatpush2.bf16.msra.mxu0 0
        %725 = vmatprep.subr.bf16.mxu0 0
        %726 = vmatpush2.bf16.msra.mxu0 0
        %727 = vmatprep.subr.bf16.mxu0 0
        %728 = vmatpush2.bf16.msra.mxu0 0
        %729 = vmatprep.mubr.bf16.mxu0 0
        %730 = vmatmul.mubr.bf16.gmra.mxu0 %v674
        %v731 = vpop.f32.mrf.mxu0
        %v732 = vadd.f32 0.0, %v731
        %v733 = vpop.f32.mrf.mxu0
        %v734 = vpop.f32.mrf.mxu0
        %v735 = vadd.f32 0.0, %v734
        %v736 = vpop.f32.mrf.mxu0
        %737 = vmatprep.mubr.bf16.mxu0 0
        %738 = vmatmul.mubr.bf16.gmra.mxu0 %v677
        %v739 = vpop.f32.mrf.mxu0
        %v740 = vadd.f32 0.0, %v739
        %v741 = vpop.f32.mrf.mxu0
        %v742 = vpop.f32.mrf.mxu0
        %v743 = vadd.f32 0.0, %v742
        %v744 = vpop.f32.mrf.mxu0
        %745 = vmatprep.mubr.bf16.mxu0 0
        %746 = vmatmul.mubr.bf16.gmra.mxu0 %v680
        %v747 = vpop.f32.mrf.mxu0
        %v748 = vadd.f32 0.0, %v747
        %v749 = vpop.f32.mrf.mxu0
        %v750 = vpop.f32.mrf.mxu0
        %v751 = vadd.f32 0.0, %v750
        %v752 = vpop.f32.mrf.mxu0
        %753 = vmatprep.mubr.bf16.mxu0 0
        %754 = vmatmul.mubr.bf16.gmra.mxu0 %v683
        %v755 = vpop.f32.mrf.mxu0
        %v756 = vadd.f32 0.0, %v755
        %v757 = vpop.f32.mrf.mxu0
        %v758 = vpop.f32.mrf.mxu0
        %v759 = vadd.f32 0.0, %v758
        %v760 = vpop.f32.mrf.mxu0
        %761 = vmatprep.mubr.bf16.mxu0 0
        %762 = vmatmul.mubr.bf16.gmra.mxu0 %v686
        %v763 = vpop.f32.mrf.mxu0
        %v764 = vadd.f32 0.0, %v763
        %v765 = vpop.f32.mrf.mxu0
        %v766 = vpop.f32.mrf.mxu0
        %v767 = vadd.f32 0.0, %v766
        %v768 = vpop.f32.mrf.mxu0
        %769 = vmatprep.mubr.bf16.mxu0 0
        %770 = vmatmul.mubr.bf16.gmra.mxu0 %v689
        %v771 = vpop.f32.mrf.mxu0
        %v772 = vadd.f32 0.0, %v771
        %v773 = vpop.f32.mrf.mxu0
        %v774 = vpop.f32.mrf.mxu0
        %v775 = vadd.f32 0.0, %v774
        %v776 = vpop.f32.mrf.mxu0
        %777 = vmatprep.mubr.bf16.mxu0 0
        %778 = vmatmul.mubr.bf16.gmra.mxu0 %v692
        %v779 = vpop.f32.mrf.mxu0
        %v780 = vadd.f32 0.0, %v779
        %v781 = vpop.f32.mrf.mxu0
        %v782 = vpop.f32.mrf.mxu0
        %v783 = vadd.f32 0.0, %v782
        %v784 = vpop.f32.mrf.mxu0
        %785 = vmatprep.mubr.bf16.mxu0 0
        %786 = vmatmul.mubr.bf16.gmra.mxu0 %v695
        %v787 = vpop.f32.mrf.mxu0
        %v788 = vadd.f32 0.0, %v787
        %v789 = vpop.f32.mrf.mxu0
        %v790 = vpop.f32.mrf.mxu0
        %v791 = vadd.f32 0.0, %v790
        %v792 = vpop.f32.mrf.mxu0
        %793 = vdwg.mxu0
        %v794 = vmax.f32 %v732, 0.0
        %v795 = vmax.f32 %v735, 0.0
        %v796 = vmax.f32 %v740, 0.0
        %v797 = vmax.f32 %v743, 0.0
        %v798 = vmax.f32 %v748, 0.0
        %v799 = vmax.f32 %v751, 0.0
        %v800 = vmax.f32 %v756, 0.0
        %v801 = vmax.f32 %v759, 0.0
        %v802 = vmax.f32 %v764, 0.0
        %v803 = vmax.f32 %v767, 0.0
        %v804 = vmax.f32 %v772, 0.0
        %v805 = vmax.f32 %v775, 0.0
        %v806 = vmax.f32 %v780, 0.0
        %v807 = vmax.f32 %v783, 0.0
        %v808 = vmax.f32 %v788, 0.0
        %v809 = vmax.f32 %v791, 0.0
        %v810 = vld [vmem:[%s2] sm:$0xf]
        %v811 = vld [vmem:[%s2 + $0x4] sm:$0xf]
        %v812 = vld [vmem:[%s2 + $0x8] sm:$0xf]
        %v813 = vld [vmem:[%s2 + $0xc] sm:$0xf]
        %v814 = vld [vmem:[%s2 + $0x10] sm:$0xf]
        %v815 = vld [vmem:[%s2 + $0x14] sm:$0xf]
        %v816 = vld [vmem:[%s2 + $0x18] sm:$0xf]
        %v817 = vld [vmem:[%s2 + $0x1c] sm:$0xf]
        %v818 = vpack.c.bf16 %v497, %v496
        %v819 = vpack.c.bf16 %v499, %v498
        %v820 = vpack.c.bf16 %v501, %v500
        %v821 = vpack.c.bf16 %v503, %v502
        %v822 = vpack.c.bf16 %v505, %v504
        %v823 = vpack.c.bf16 %v507, %v506
        %v824 = vpack.c.bf16 %v509, %v508
        %v825 = vpack.c.bf16 %v511, %v510
        %v826 = vld [vmem:[%s4 + $0x1] sm:$0x1]
        %v828 = vlaneseq
        %v829 = vshrl.u32 %v828, 7
        %v830 = vsub.s32 0, %v829
        %v831 = vrot.slane %v826, %v830
        %v841 = vunpack.c.l.b16 %v810
        %v842 = vunpack.c.l.b16 %v811
        %v843 = vunpack.c.l.b16 %v812
        %v844 = vunpack.c.l.b16 %v813
        %v845 = vunpack.c.l.b16 %v814
        %v846 = vunpack.c.l.b16 %v815
        %v847 = vunpack.c.l.b16 %v816
        %v848 = vunpack.c.l.b16 %v817
        %v849 = vpack.c.b16 %v842, %v841
        %v850 = vpack.c.b16 %v844, %v843
        %v851 = vpack.c.b16 %v846, %v845
        %v852 = vpack.c.b16 %v848, %v847
        %v858 = vsel %vm672, %v818, 0
        %v861 = vsel %vm672, %v819, 0
        %v864 = vsel %vm672, %v820, 0
        %v867 = vsel %vm672, %v821, 0
        %v870 = vsel %vm672, %v822, 0
        %v873 = vsel %vm672, %v823, 0
        %v876 = vsel %vm672, %v824, 0
        %v879 = vsel %vm672, %v825, 0
        %881 = vmatprep.subr.bf16.mxu0 0
        %882 = vmatpush1.bf16.msra.mxu0 0
        %883 = vmatprep.subr.bf16.mxu0 0
        %884 = vmatpush1.bf16.msra.mxu0 0
        %885 = vmatprep.subr.bf16.mxu0 0
        %886 = vmatpush1.bf16.msra.mxu0 0
        %887 = vmatprep.subr.bf16.mxu0 0
        %888 = vmatpush1.bf16.msra.mxu0 0
        %889 = vmatprep.subr.bf16.mxu0 0
        %890 = vmatpush1.bf16.msra.mxu0 %v852
        %891 = vmatprep.subr.bf16.mxu0 0
        %892 = vmatpush1.bf16.msra.mxu0 %v851
        %893 = vmatprep.subr.bf16.mxu0 0
        %894 = vmatpush1.bf16.msra.mxu0 %v850
        %895 = vmatprep.subr.bf16.mxu0 0
        %896 = vmatpush1.bf16.msra.mxu0 %v849
        %897 = vmatprep.subr.bf16.mxu0 0
        %898 = vmatpush2.bf16.msra.mxu0 0
        %899 = vmatprep.subr.bf16.mxu0 0
        %900 = vmatpush2.bf16.msra.mxu0 0
        %901 = vmatprep.subr.bf16.mxu0 0
        %902 = vmatpush2.bf16.msra.mxu0 0
        %903 = vmatprep.subr.bf16.mxu0 0
        %904 = vmatpush2.bf16.msra.mxu0 0
        %905 = vmatprep.subr.bf16.mxu0 0
        %906 = vmatpush2.bf16.msra.mxu0 0
        %907 = vmatprep.subr.bf16.mxu0 0
        %908 = vmatpush2.bf16.msra.mxu0 0
        %909 = vmatprep.subr.bf16.mxu0 0
        %910 = vmatpush2.bf16.msra.mxu0 0
        %911 = vmatprep.subr.bf16.mxu0 0
        %912 = vmatpush2.bf16.msra.mxu0 0
        %913 = vmatprep.mubr.bf16.mxu0 0
        %914 = vmatmul.mubr.bf16.gmra.mxu0 %v858
        %v915 = vpop.f32.mrf.mxu0
        %v916 = vadd.f32 %v831, %v915
        %v917 = vpop.f32.mrf.mxu0
        %v918 = vpop.f32.mrf.mxu0
        %v919 = vadd.f32 %v831, %v918
        %v920 = vpop.f32.mrf.mxu0
        %921 = vmatprep.mubr.bf16.mxu0 0
        %922 = vmatmul.mubr.bf16.gmra.mxu0 %v861
        %v923 = vpop.f32.mrf.mxu0
        %v924 = vadd.f32 %v831, %v923
        %v925 = vpop.f32.mrf.mxu0
        %v926 = vpop.f32.mrf.mxu0
        %v927 = vadd.f32 %v831, %v926
        %v928 = vpop.f32.mrf.mxu0
        %929 = vmatprep.mubr.bf16.mxu0 0
        %930 = vmatmul.mubr.bf16.gmra.mxu0 %v864
        %v931 = vpop.f32.mrf.mxu0
        %v932 = vadd.f32 %v831, %v931
        %v933 = vpop.f32.mrf.mxu0
        %v934 = vpop.f32.mrf.mxu0
        %v935 = vadd.f32 %v831, %v934
        %v936 = vpop.f32.mrf.mxu0
        %937 = vmatprep.mubr.bf16.mxu0 0
        %938 = vmatmul.mubr.bf16.gmra.mxu0 %v867
        %v939 = vpop.f32.mrf.mxu0
        %v940 = vadd.f32 %v831, %v939
        %v941 = vpop.f32.mrf.mxu0
        %v942 = vpop.f32.mrf.mxu0
        %v943 = vadd.f32 %v831, %v942
        %v944 = vpop.f32.mrf.mxu0
        %945 = vmatprep.mubr.bf16.mxu0 0
        %946 = vmatmul.mubr.bf16.gmra.mxu0 %v870
        %v947 = vpop.f32.mrf.mxu0
        %v948 = vadd.f32 %v831, %v947
        %v949 = vpop.f32.mrf.mxu0
        %v950 = vpop.f32.mrf.mxu0
        %v951 = vadd.f32 %v831, %v950
        %v952 = vpop.f32.mrf.mxu0
        %953 = vmatprep.mubr.bf16.mxu0 0
        %954 = vmatmul.mubr.bf16.gmra.mxu0 %v873
        %v955 = vpop.f32.mrf.mxu0
        %v956 = vadd.f32 %v831, %v955
        %v957 = vpop.f32.mrf.mxu0
        %v958 = vpop.f32.mrf.mxu0
        %v959 = vadd.f32 %v831, %v958
        %v960 = vpop.f32.mrf.mxu0
        %961 = vmatprep.mubr.bf16.mxu0 0
        %962 = vmatmul.mubr.bf16.gmra.mxu0 %v876
        %v963 = vpop.f32.mrf.mxu0
        %v964 = vadd.f32 %v831, %v963
        %v965 = vpop.f32.mrf.mxu0
        %v966 = vpop.f32.mrf.mxu0
        %v967 = vadd.f32 %v831, %v966
        %v968 = vpop.f32.mrf.mxu0
        %969 = vmatprep.mubr.bf16.mxu0 0
        %970 = vmatmul.mubr.bf16.gmra.mxu0 %v879
        %v971 = vpop.f32.mrf.mxu0
        %v972 = vadd.f32 %v831, %v971
        %v973 = vpop.f32.mrf.mxu0
        %v974 = vpop.f32.mrf.mxu0
        %v975 = vadd.f32 %v831, %v974
        %v976 = vpop.f32.mrf.mxu0
        %977 = vdwg.mxu0
        %v978 = vmax.f32 %v916, 0.0
        %v979 = vmax.f32 %v919, 0.0
        %v980 = vmax.f32 %v924, 0.0
        %v981 = vmax.f32 %v927, 0.0
        %v982 = vmax.f32 %v932, 0.0
        %v983 = vmax.f32 %v935, 0.0
        %v984 = vmax.f32 %v940, 0.0
        %v985 = vmax.f32 %v943, 0.0
        %v986 = vmax.f32 %v948, 0.0
        %v987 = vmax.f32 %v951, 0.0
        %v988 = vmax.f32 %v956, 0.0
        %v989 = vmax.f32 %v959, 0.0
        %v990 = vmax.f32 %v964, 0.0
        %v991 = vmax.f32 %v967, 0.0
        %v992 = vmax.f32 %v972, 0.0
        %v993 = vmax.f32 %v975, 0.0
        %v994 = vmul.f32 %v794, 0.5
        %v995 = vmul.f32 %v795, 0.5
        %v996 = vmul.f32 %v796, 0.5
        %v997 = vmul.f32 %v797, 0.5
        %v998 = vmul.f32 %v798, 0.5
        %v999 = vmul.f32 %v799, 0.5
        %v1000 = vmul.f32 %v800, 0.5
        %v1001 = vmul.f32 %v801, 0.5
        %v1002 = vmul.f32 %v802, 0.5
        %v1003 = vmul.f32 %v803, 0.5
        %v1004 = vmul.f32 %v804, 0.5
        %v1005 = vmul.f32 %v805, 0.5
        %v1006 = vmul.f32 %v806, 0.5
        %v1007 = vmul.f32 %v807, 0.5
        %v1008 = vmul.f32 %v808, 0.5
        %v1009 = vmul.f32 %v809, 0.5
        %v1010 = vmul.f32 %v978, 0.5
        %v1011 = vmul.f32 %v979, 0.5
        %v1012 = vmul.f32 %v980, 0.5
        %v1013 = vmul.f32 %v981, 0.5
        %v1014 = vmul.f32 %v982, 0.5
        %v1015 = vmul.f32 %v983, 0.5
        %v1016 = vmul.f32 %v984, 0.5
        %v1017 = vmul.f32 %v985, 0.5
        %v1018 = vmul.f32 %v986, 0.5
        %v1019 = vmul.f32 %v987, 0.5
        %v1020 = vmul.f32 %v988, 0.5
        %v1021 = vmul.f32 %v989, 0.5
        %v1022 = vmul.f32 %v990, 0.5
        %v1023 = vmul.f32 %v991, 0.5
        %v1024 = vmul.f32 %v992, 0.5
        %v1025 = vmul.f32 %v993, 0.5
        %v1026 = vadd.f32 %v994, %v1010
        %v1027 = vadd.f32 %v995, %v1011
        %v1028 = vadd.f32 %v996, %v1012
        %v1029 = vadd.f32 %v997, %v1013
        %v1030 = vadd.f32 %v998, %v1014
        %v1031 = vadd.f32 %v999, %v1015
        %v1032 = vadd.f32 %v1000, %v1016
        %v1033 = vadd.f32 %v1001, %v1017
        %v1034 = vadd.f32 %v1002, %v1018
        %v1035 = vadd.f32 %v1003, %v1019
        %v1036 = vadd.f32 %v1004, %v1020
        %v1037 = vadd.f32 %v1005, %v1021
        %v1038 = vadd.f32 %v1006, %v1022
        %v1039 = vadd.f32 %v1007, %v1023
        %v1040 = vadd.f32 %v1008, %v1024
        %v1041 = vadd.f32 %v1009, %v1025
        %v1042 = vld [vmem:[%s2 + $0x68] sm:$0xf]
        %v1043 = vld [vmem:[%s2 + $0x6c] sm:$0xf]
        %v1044 = vld [vmem:[%s2 + $0x70] sm:$0xf]
        %v1045 = vld [vmem:[%s2 + $0x74] sm:$0xf]
        %v1046 = vpack.c.bf16 %v1027, %v1026
        %v1047 = vpack.c.bf16 %v1029, %v1028
        %v1048 = vpack.c.bf16 %v1031, %v1030
        %v1049 = vpack.c.bf16 %v1033, %v1032
        %v1050 = vpack.c.bf16 %v1035, %v1034
        %v1051 = vpack.c.bf16 %v1037, %v1036
        %v1052 = vpack.c.bf16 %v1039, %v1038
        %v1053 = vpack.c.bf16 %v1041, %v1040
        %v1058 = vunpack.c.l.b16 %v1042
        %v1059 = vunpack.c.l.b16 %v1043
        %v1060 = vunpack.c.l.b16 %v1044
        %v1061 = vunpack.c.l.b16 %v1045
        %v1062 = vpack.c.b16 %v1059, %v1058
        %v1063 = vpack.c.b16 %v1061, %v1060
        %v1067 = vsel %vm374, %v1046, 0
        %v1070 = vsel %vm374, %v1047, 0
        %v1073 = vsel %vm374, %v1048, 0
        %v1076 = vsel %vm374, %v1049, 0
        %v1079 = vsel %vm374, %v1050, 0
        %v1082 = vsel %vm374, %v1051, 0
        %v1085 = vsel %vm374, %v1052, 0
        %v1088 = vsel %vm374, %v1053, 0
        %1090 = vmatprep.subr.bf16.mxu0 0
        %1091 = vmatpush1.bf16.msra.mxu0 0
        %1092 = vmatprep.subr.bf16.mxu0 0
        %1093 = vmatpush1.bf16.msra.mxu0 0
        %1094 = vmatprep.subr.bf16.mxu0 0
        %1095 = vmatpush1.bf16.msra.mxu0 0
        %1096 = vmatprep.subr.bf16.mxu0 0
        %1097 = vmatpush1.bf16.msra.mxu0 0
        %1098 = vmatprep.subr.bf16.mxu0 0
        %1099 = vmatpush1.bf16.msra.mxu0 0
        %1100 = vmatprep.subr.bf16.mxu0 0
        %1101 = vmatpush1.bf16.msra.mxu0 0
        %1102 = vmatprep.subr.bf16.mxu0 0
        %1103 = vmatpush1.bf16.msra.mxu0 %v1063
        %1104 = vmatprep.subr.bf16.mxu0 0
        %1105 = vmatpush1.bf16.msra.mxu0 %v1062
        %1106 = vmatprep.subr.bf16.mxu0 0
        %1107 = vmatpush2.bf16.msra.mxu0 0
        %1108 = vmatprep.subr.bf16.mxu0 0
        %1109 = vmatpush2.bf16.msra.mxu0 0
        %1110 = vmatprep.subr.bf16.mxu0 0
        %1111 = vmatpush2.bf16.msra.mxu0 0
        %1112 = vmatprep.subr.bf16.mxu0 0
        %1113 = vmatpush2.bf16.msra.mxu0 0
        %1114 = vmatprep.subr.bf16.mxu0 0
        %1115 = vmatpush2.bf16.msra.mxu0 0
        %1116 = vmatprep.subr.bf16.mxu0 0
        %1117 = vmatpush2.bf16.msra.mxu0 0
        %1118 = vmatprep.subr.bf16.mxu0 0
        %1119 = vmatpush2.bf16.msra.mxu0 0
        %1120 = vmatprep.subr.bf16.mxu0 0
        %1121 = vmatpush2.bf16.msra.mxu0 0
        %1122 = vmatprep.mubr.bf16.mxu0 0
        %1123 = vmatmul.mubr.bf16.gmra.mxu0 %v1067
        %v1124 = vpop.f32.mrf.mxu0
        %v1125 = vadd.f32 0.0, %v1124
        %v1126 = vpop.f32.mrf.mxu0
        %v1127 = vpop.f32.mrf.mxu0
        %v1128 = vadd.f32 0.0, %v1127
        %v1129 = vpop.f32.mrf.mxu0
        %1130 = vmatprep.mubr.bf16.mxu0 0
        %1131 = vmatmul.mubr.bf16.gmra.mxu0 %v1070
        %v1132 = vpop.f32.mrf.mxu0
        %v1133 = vadd.f32 0.0, %v1132
        %v1134 = vpop.f32.mrf.mxu0
        %v1135 = vpop.f32.mrf.mxu0
        %v1136 = vadd.f32 0.0, %v1135
        %v1137 = vpop.f32.mrf.mxu0
        %1138 = vmatprep.mubr.bf16.mxu0 0
        %1139 = vmatmul.mubr.bf16.gmra.mxu0 %v1073
        %v1140 = vpop.f32.mrf.mxu0
        %v1141 = vadd.f32 0.0, %v1140
        %v1142 = vpop.f32.mrf.mxu0
        %v1143 = vpop.f32.mrf.mxu0
        %v1144 = vadd.f32 0.0, %v1143
        %v1145 = vpop.f32.mrf.mxu0
        %1146 = vmatprep.mubr.bf16.mxu0 0
        %1147 = vmatmul.mubr.bf16.gmra.mxu0 %v1076
        %v1148 = vpop.f32.mrf.mxu0
        %v1149 = vadd.f32 0.0, %v1148
        %v1150 = vpop.f32.mrf.mxu0
        %v1151 = vpop.f32.mrf.mxu0
        %v1152 = vadd.f32 0.0, %v1151
        %v1153 = vpop.f32.mrf.mxu0
        %1154 = vmatprep.mubr.bf16.mxu0 0
        %1155 = vmatmul.mubr.bf16.gmra.mxu0 %v1079
        %v1156 = vpop.f32.mrf.mxu0
        %v1157 = vadd.f32 0.0, %v1156
        %v1158 = vpop.f32.mrf.mxu0
        %v1159 = vpop.f32.mrf.mxu0
        %v1160 = vadd.f32 0.0, %v1159
        %v1161 = vpop.f32.mrf.mxu0
        %1162 = vmatprep.mubr.bf16.mxu0 0
        %1163 = vmatmul.mubr.bf16.gmra.mxu0 %v1082
        %v1164 = vpop.f32.mrf.mxu0
        %v1165 = vadd.f32 0.0, %v1164
        %v1166 = vpop.f32.mrf.mxu0
        %v1167 = vpop.f32.mrf.mxu0
        %v1168 = vadd.f32 0.0, %v1167
        %v1169 = vpop.f32.mrf.mxu0
        %1170 = vmatprep.mubr.bf16.mxu0 0
        %1171 = vmatmul.mubr.bf16.gmra.mxu0 %v1085
        %v1172 = vpop.f32.mrf.mxu0
        %v1173 = vadd.f32 0.0, %v1172
        %v1174 = vpop.f32.mrf.mxu0
        %v1175 = vpop.f32.mrf.mxu0
        %v1176 = vadd.f32 0.0, %v1175
        %v1177 = vpop.f32.mrf.mxu0
        %1178 = vmatprep.mubr.bf16.mxu0 0
        %1179 = vmatmul.mubr.bf16.gmra.mxu0 %v1088
        %v1180 = vpop.f32.mrf.mxu0
        %v1181 = vadd.f32 0.0, %v1180
        %v1182 = vpop.f32.mrf.mxu0
        %v1183 = vpop.f32.mrf.mxu0
        %v1184 = vadd.f32 0.0, %v1183
        %v1185 = vpop.f32.mrf.mxu0
        %1186 = vdwg.mxu0
        %v1187 = vmax.f32 %v1125, 0.0
        %v1188 = vmax.f32 %v1128, 0.0
        %v1189 = vmax.f32 %v1133, 0.0
        %v1190 = vmax.f32 %v1136, 0.0
        %v1191 = vmax.f32 %v1141, 0.0
        %v1192 = vmax.f32 %v1144, 0.0
        %v1193 = vmax.f32 %v1149, 0.0
        %v1194 = vmax.f32 %v1152, 0.0
        %v1195 = vmax.f32 %v1157, 0.0
        %v1196 = vmax.f32 %v1160, 0.0
        %v1197 = vmax.f32 %v1165, 0.0
        %v1198 = vmax.f32 %v1168, 0.0
        %v1199 = vmax.f32 %v1173, 0.0
        %v1200 = vmax.f32 %v1176, 0.0
        %v1201 = vmax.f32 %v1181, 0.0
        %v1202 = vmax.f32 %v1184, 0.0
        %v1203 = vld [vmem:[%s2 + $0x20] sm:$0xf]
        %v1204 = vld [vmem:[%s2 + $0x24] sm:$0xf]
        %v1205 = vld [vmem:[%s2 + $0x28] sm:$0xf]
        %v1206 = vld [vmem:[%s2 + $0x2c] sm:$0xf]
        %v1207 = vpack.c.bf16 %v979, %v978
        %v1208 = vpack.c.bf16 %v981, %v980
        %v1209 = vpack.c.bf16 %v983, %v982
        %v1210 = vpack.c.bf16 %v985, %v984
        %v1211 = vpack.c.bf16 %v987, %v986
        %v1212 = vpack.c.bf16 %v989, %v988
        %v1213 = vpack.c.bf16 %v991, %v990
        %v1214 = vpack.c.bf16 %v993, %v992
        %v1215 = vld [vmem:[%s4 + $0x2] sm:$0x1]
        %v1217 = vlaneseq
        %v1218 = vshrl.u32 %v1217, 7
        %v1219 = vsub.s32 0, %v1218
        %v1220 = vrot.slane %v1215, %v1219
        %v1226 = vunpack.c.l.b16 %v1203
        %v1227 = vunpack.c.l.b16 %v1204
        %v1228 = vunpack.c.l.b16 %v1205
        %v1229 = vunpack.c.l.b16 %v1206
        %v1230 = vpack.c.b16 %v1227, %v1226
        %v1231 = vpack.c.b16 %v1229, %v1228
        %v1235 = vsel %vm374, %v1207, 0
        %v1238 = vsel %vm374, %v1208, 0
        %v1241 = vsel %vm374, %v1209, 0
        %v1244 = vsel %vm374, %v1210, 0
        %v1247 = vsel %vm374, %v1211, 0
        %v1250 = vsel %vm374, %v1212, 0
        %v1253 = vsel %vm374, %v1213, 0
        %v1256 = vsel %vm374, %v1214, 0
        %1258 = vmatprep.subr.bf16.mxu0 0
        %1259 = vmatpush1.bf16.msra.mxu0 0
        %1260 = vmatprep.subr.bf16.mxu0 0
        %1261 = vmatpush1.bf16.msra.mxu0 0
        %1262 = vmatprep.subr.bf16.mxu0 0
        %1263 = vmatpush1.bf16.msra.mxu0 0
        %1264 = vmatprep.subr.bf16.mxu0 0
        %1265 = vmatpush1.bf16.msra.mxu0 0
        %1266 = vmatprep.subr.bf16.mxu0 0
        %1267 = vmatpush1.bf16.msra.mxu0 0
        %1268 = vmatprep.subr.bf16.mxu0 0
        %1269 = vmatpush1.bf16.msra.mxu0 0
        %1270 = vmatprep.subr.bf16.mxu0 0
        %1271 = vmatpush1.bf16.msra.mxu0 %v1231
        %1272 = vmatprep.subr.bf16.mxu0 0
        %1273 = vmatpush1.bf16.msra.mxu0 %v1230
        %1274 = vmatprep.subr.bf16.mxu0 0
        %1275 = vmatpush2.bf16.msra.mxu0 0
        %1276 = vmatprep.subr.bf16.mxu0 0
        %1277 = vmatpush2.bf16.msra.mxu0 0
        %1278 = vmatprep.subr.bf16.mxu0 0
        %1279 = vmatpush2.bf16.msra.mxu0 0
        %1280 = vmatprep.subr.bf16.mxu0 0
        %1281 = vmatpush2.bf16.msra.mxu0 0
        %1282 = vmatprep.subr.bf16.mxu0 0
        %1283 = vmatpush2.bf16.msra.mxu0 0
        %1284 = vmatprep.subr.bf16.mxu0 0
        %1285 = vmatpush2.bf16.msra.mxu0 0
        %1286 = vmatprep.subr.bf16.mxu0 0
        %1287 = vmatpush2.bf16.msra.mxu0 0
        %1288 = vmatprep.subr.bf16.mxu0 0
        %1289 = vmatpush2.bf16.msra.mxu0 0
        %1290 = vmatprep.mubr.bf16.mxu0 0
        %1291 = vmatmul.mubr.bf16.gmra.mxu0 %v1235
        %v1292 = vpop.f32.mrf.mxu0
        %v1293 = vadd.f32 %v1220, %v1292
        %v1294 = vpop.f32.mrf.mxu0
        %v1295 = vpop.f32.mrf.mxu0
        %v1296 = vadd.f32 %v1220, %v1295
        %v1297 = vpop.f32.mrf.mxu0
        %1298 = vmatprep.mubr.bf16.mxu0 0
        %1299 = vmatmul.mubr.bf16.gmra.mxu0 %v1238
        %v1300 = vpop.f32.mrf.mxu0
        %v1301 = vadd.f32 %v1220, %v1300
        %v1302 = vpop.f32.mrf.mxu0
        %v1303 = vpop.f32.mrf.mxu0
        %v1304 = vadd.f32 %v1220, %v1303
        %v1305 = vpop.f32.mrf.mxu0
        %1306 = vmatprep.mubr.bf16.mxu0 0
        %1307 = vmatmul.mubr.bf16.gmra.mxu0 %v1241
        %v1308 = vpop.f32.mrf.mxu0
        %v1309 = vadd.f32 %v1220, %v1308
        %v1310 = vpop.f32.mrf.mxu0
        %v1311 = vpop.f32.mrf.mxu0
        %v1312 = vadd.f32 %v1220, %v1311
        %v1313 = vpop.f32.mrf.mxu0
        %1314 = vmatprep.mubr.bf16.mxu0 0
        %1315 = vmatmul.mubr.bf16.gmra.mxu0 %v1244
        %v1316 = vpop.f32.mrf.mxu0
        %v1317 = vadd.f32 %v1220, %v1316
        %v1318 = vpop.f32.mrf.mxu0
        %v1319 = vpop.f32.mrf.mxu0
        %v1320 = vadd.f32 %v1220, %v1319
        %v1321 = vpop.f32.mrf.mxu0
        %1322 = vmatprep.mubr.bf16.mxu0 0
        %1323 = vmatmul.mubr.bf16.gmra.mxu0 %v1247
        %v1324 = vpop.f32.mrf.mxu0
        %v1325 = vadd.f32 %v1220, %v1324
        %v1326 = vpop.f32.mrf.mxu0
        %v1327 = vpop.f32.mrf.mxu0
        %v1328 = vadd.f32 %v1220, %v1327
        %v1329 = vpop.f32.mrf.mxu0
        %1330 = vmatprep.mubr.bf16.mxu0 0
        %1331 = vmatmul.mubr.bf16.gmra.mxu0 %v1250
        %v1332 = vpop.f32.mrf.mxu0
        %v1333 = vadd.f32 %v1220, %v1332
        %v1334 = vpop.f32.mrf.mxu0
        %v1335 = vpop.f32.mrf.mxu0
        %v1336 = vadd.f32 %v1220, %v1335
        %v1337 = vpop.f32.mrf.mxu0
        %1338 = vmatprep.mubr.bf16.mxu0 0
        %1339 = vmatmul.mubr.bf16.gmra.mxu0 %v1253
        %v1340 = vpop.f32.mrf.mxu0
        %v1341 = vadd.f32 %v1220, %v1340
        %v1342 = vpop.f32.mrf.mxu0
        %v1343 = vpop.f32.mrf.mxu0
        %v1344 = vadd.f32 %v1220, %v1343
        %v1345 = vpop.f32.mrf.mxu0
        %1346 = vmatprep.mubr.bf16.mxu0 0
        %1347 = vmatmul.mubr.bf16.gmra.mxu0 %v1256
        %v1348 = vpop.f32.mrf.mxu0
        %v1349 = vadd.f32 %v1220, %v1348
        %v1350 = vpop.f32.mrf.mxu0
        %v1351 = vpop.f32.mrf.mxu0
        %v1352 = vadd.f32 %v1220, %v1351
        %v1353 = vpop.f32.mrf.mxu0
        %1354 = vdwg.mxu0
        %v1355 = vmul.f32 %v1187, 0.5
        %v1356 = vmul.f32 %v1188, 0.5
        %v1357 = vmul.f32 %v1189, 0.5
        %v1358 = vmul.f32 %v1190, 0.5
        %v1359 = vmul.f32 %v1191, 0.5
        %v1360 = vmul.f32 %v1192, 0.5
        %v1361 = vmul.f32 %v1193, 0.5
        %v1362 = vmul.f32 %v1194, 0.5
        %v1363 = vmul.f32 %v1195, 0.5
        %v1364 = vmul.f32 %v1196, 0.5
        %v1365 = vmul.f32 %v1197, 0.5
        %v1366 = vmul.f32 %v1198, 0.5
        %v1367 = vmul.f32 %v1199, 0.5
        %v1368 = vmul.f32 %v1200, 0.5
        %v1369 = vmul.f32 %v1201, 0.5
        %v1370 = vmul.f32 %v1202, 0.5
        %v1371 = vmul.f32 %v1293, 0.5
        %v1372 = vmul.f32 %v1296, 0.5
        %v1373 = vmul.f32 %v1301, 0.5
        %v1374 = vmul.f32 %v1304, 0.5
        %v1375 = vmul.f32 %v1309, 0.5
        %v1376 = vmul.f32 %v1312, 0.5
        %v1377 = vmul.f32 %v1317, 0.5
        %v1378 = vmul.f32 %v1320, 0.5
        %v1379 = vmul.f32 %v1325, 0.5
        %v1380 = vmul.f32 %v1328, 0.5
        %v1381 = vmul.f32 %v1333, 0.5
        %v1382 = vmul.f32 %v1336, 0.5
        %v1383 = vmul.f32 %v1341, 0.5
        %v1384 = vmul.f32 %v1344, 0.5
        %v1385 = vmul.f32 %v1349, 0.5
        %v1386 = vmul.f32 %v1352, 0.5
        %v1387 = vadd.f32 %v1355, %v1371
        %v1388 = vadd.f32 %v1356, %v1372
        %v1389 = vadd.f32 %v1357, %v1373
        %v1390 = vadd.f32 %v1358, %v1374
        %v1391 = vadd.f32 %v1359, %v1375
        %v1392 = vadd.f32 %v1360, %v1376
        %v1393 = vadd.f32 %v1361, %v1377
        %v1394 = vadd.f32 %v1362, %v1378
        %v1395 = vadd.f32 %v1363, %v1379
        %v1396 = vadd.f32 %v1364, %v1380
        %v1397 = vadd.f32 %v1365, %v1381
        %v1398 = vadd.f32 %v1366, %v1382
        %v1399 = vadd.f32 %v1367, %v1383
        %v1400 = vadd.f32 %v1368, %v1384
        %v1401 = vadd.f32 %v1369, %v1385
        %v1402 = vadd.f32 %v1370, %v1386
        %v1403 = vld [vmem:[%s2 + $0x78] sm:$0xf]
        %v1404 = vld [vmem:[%s2 + $0x7c] sm:$0xf]
        %v1405 = vpack.c.bf16 %v1388, %v1387
        %v1406 = vpack.c.bf16 %v1390, %v1389
        %v1407 = vpack.c.bf16 %v1392, %v1391
        %v1408 = vpack.c.bf16 %v1394, %v1393
        %v1409 = vpack.c.bf16 %v1396, %v1395
        %v1410 = vpack.c.bf16 %v1398, %v1397
        %v1411 = vpack.c.bf16 %v1400, %v1399
        %v1412 = vpack.c.bf16 %v1402, %v1401
        %v1415 = vunpack.c.l.b16 %v1403
        %v1416 = vunpack.c.l.b16 %v1404
        %v1417 = vpack.c.b16 %v1416, %v1415
        %vm1419 = vcmask 130048
        %v1421 = vsel %vm1419, %v1405, 0
        %v1424 = vsel %vm1419, %v1406, 0
        %v1427 = vsel %vm1419, %v1407, 0
        %v1430 = vsel %vm1419, %v1408, 0
        %v1433 = vsel %vm1419, %v1409, 0
        %v1436 = vsel %vm1419, %v1410, 0
        %v1439 = vsel %vm1419, %v1411, 0
        %v1442 = vsel %vm1419, %v1412, 0
        %1444 = vmatprep.subr.bf16.mxu0 0
        %1445 = vmatpush1.bf16.msra.mxu0 0
        %1446 = vmatprep.subr.bf16.mxu0 0
        %1447 = vmatpush1.bf16.msra.mxu0 0
        %1448 = vmatprep.subr.bf16.mxu0 0
        %1449 = vmatpush1.bf16.msra.mxu0 0
        %1450 = vmatprep.subr.bf16.mxu0 0
        %1451 = vmatpush1.bf16.msra.mxu0 0
        %1452 = vmatprep.subr.bf16.mxu0 0
        %1453 = vmatpush1.bf16.msra.mxu0 0
        %1454 = vmatprep.subr.bf16.mxu0 0
        %1455 = vmatpush1.bf16.msra.mxu0 0
        %1456 = vmatprep.subr.bf16.mxu0 0
        %1457 = vmatpush1.bf16.msra.mxu0 0
        %1458 = vmatprep.subr.bf16.mxu0 0
        %1459 = vmatpush1.bf16.msra.mxu0 %v1417
        %1460 = vmatprep.subr.bf16.mxu0 0
        %1461 = vmatpush2.bf16.msra.mxu0 0
        %1462 = vmatprep.subr.bf16.mxu0 0
        %1463 = vmatpush2.bf16.msra.mxu0 0
        %1464 = vmatprep.subr.bf16.mxu0 0
        %1465 = vmatpush2.bf16.msra.mxu0 0
        %1466 = vmatprep.subr.bf16.mxu0 0
        %1467 = vmatpush2.bf16.msra.mxu0 0
        %1468 = vmatprep.subr.bf16.mxu0 0
        %1469 = vmatpush2.bf16.msra.mxu0 0
        %1470 = vmatprep.subr.bf16.mxu0 0
        %1471 = vmatpush2.bf16.msra.mxu0 0
        %1472 = vmatprep.subr.bf16.mxu0 0
        %1473 = vmatpush2.bf16.msra.mxu0 0
        %1474 = vmatprep.subr.bf16.mxu0 0
        %1475 = vmatpush2.bf16.msra.mxu0 0
        %1476 = vmatprep.mubr.bf16.mxu0 0
        %1477 = vmatmul.mubr.bf16.gmra.mxu0 %v1421
        %v1478 = vpop.f32.mrf.mxu0
        %v1479 = vadd.f32 0.0, %v1478
        %v1480 = vpop.f32.mrf.mxu0
        %v1481 = vpop.f32.mrf.mxu0
        %v1482 = vadd.f32 0.0, %v1481
        %v1483 = vpop.f32.mrf.mxu0
        %1484 = vmatprep.mubr.bf16.mxu0 0
        %1485 = vmatmul.mubr.bf16.gmra.mxu0 %v1424
        %v1486 = vpop.f32.mrf.mxu0
        %v1487 = vadd.f32 0.0, %v1486
        %v1488 = vpop.f32.mrf.mxu0
        %v1489 = vpop.f32.mrf.mxu0
        %v1490 = vadd.f32 0.0, %v1489
        %v1491 = vpop.f32.mrf.mxu0
        %1492 = vmatprep.mubr.bf16.mxu0 0
        %1493 = vmatmul.mubr.bf16.gmra.mxu0 %v1427
        %v1494 = vpop.f32.mrf.mxu0
        %v1495 = vadd.f32 0.0, %v1494
        %v1496 = vpop.f32.mrf.mxu0
        %v1497 = vpop.f32.mrf.mxu0
        %v1498 = vadd.f32 0.0, %v1497
        %v1499 = vpop.f32.mrf.mxu0
        %1500 = vmatprep.mubr.bf16.mxu0 0
        %1501 = vmatmul.mubr.bf16.gmra.mxu0 %v1430
        %v1502 = vpop.f32.mrf.mxu0
        %v1503 = vadd.f32 0.0, %v1502
        %v1504 = vpop.f32.mrf.mxu0
        %v1505 = vpop.f32.mrf.mxu0
        %v1506 = vadd.f32 0.0, %v1505
        %v1507 = vpop.f32.mrf.mxu0
        %1508 = vmatprep.mubr.bf16.mxu0 0
        %1509 = vmatmul.mubr.bf16.gmra.mxu0 %v1433
        %v1510 = vpop.f32.mrf.mxu0
        %v1511 = vadd.f32 0.0, %v1510
        %v1512 = vpop.f32.mrf.mxu0
        %v1513 = vpop.f32.mrf.mxu0
        %v1514 = vadd.f32 0.0, %v1513
        %v1515 = vpop.f32.mrf.mxu0
        %1516 = vmatprep.mubr.bf16.mxu0 0
        %1517 = vmatmul.mubr.bf16.gmra.mxu0 %v1436
        %v1518 = vpop.f32.mrf.mxu0
        %v1519 = vadd.f32 0.0, %v1518
        %v1520 = vpop.f32.mrf.mxu0
        %v1521 = vpop.f32.mrf.mxu0
        %v1522 = vadd.f32 0.0, %v1521
        %v1523 = vpop.f32.mrf.mxu0
        %1524 = vmatprep.mubr.bf16.mxu0 0
        %1525 = vmatmul.mubr.bf16.gmra.mxu0 %v1439
        %v1526 = vpop.f32.mrf.mxu0
        %v1527 = vadd.f32 0.0, %v1526
        %v1528 = vpop.f32.mrf.mxu0
        %v1529 = vpop.f32.mrf.mxu0
        %v1530 = vadd.f32 0.0, %v1529
        %v1531 = vpop.f32.mrf.mxu0
        %1532 = vmatprep.mubr.bf16.mxu0 0
        %1533 = vmatmul.mubr.bf16.gmra.mxu0 %v1442
        %v1534 = vpop.f32.mrf.mxu0
        %v1535 = vadd.f32 0.0, %v1534
        %v1536 = vpop.f32.mrf.mxu0
        %v1537 = vpop.f32.mrf.mxu0
        %v1538 = vadd.f32 0.0, %v1537
        %v1539 = vpop.f32.mrf.mxu0
        %1540 = vdwg.mxu0
        %vm1541 = vcmask 31744
        %v1542 = vsel %vm1541, %v1479, -inf
        %1543 = vmax.xlane.f32.xlu0 %v1542
        %v1544 = vpop.xlane.xlu0 %1543
        %v1545 = vsel %vm1541, %v1482, -inf
        %1546 = vmax.xlane.f32.xlu0 %v1545
        %v1547 = vpop.xlane.xlu0 %1546
        %v1548 = vsel %vm1541, %v1487, -inf
        %1549 = vmax.xlane.f32.xlu0 %v1548
        %v1550 = vpop.xlane.xlu0 %1549
        %v1551 = vsel %vm1541, %v1490, -inf
        %1552 = vmax.xlane.f32.xlu0 %v1551
        %v1553 = vpop.xlane.xlu0 %1552
        %v1554 = vsel %vm1541, %v1495, -inf
        %1555 = vmax.xlane.f32.xlu0 %v1554
        %v1556 = vpop.xlane.xlu0 %1555
        %v1557 = vsel %vm1541, %v1498, -inf
        %1558 = vmax.xlane.f32.xlu0 %v1557
        %v1559 = vpop.xlane.xlu0 %1558
        %v1560 = vsel %vm1541, %v1503, -inf
        %1561 = vmax.xlane.f32.xlu0 %v1560
        %v1562 = vpop.xlane.xlu0 %1561
        %v1563 = vsel %vm1541, %v1506, -inf
        %1564 = vmax.xlane.f32.xlu0 %v1563
        %v1565 = vpop.xlane.xlu0 %1564
        %v1566 = vsel %vm1541, %v1511, -inf
        %1567 = vmax.xlane.f32.xlu0 %v1566
        %v1568 = vpop.xlane.xlu0 %1567
        %v1569 = vsel %vm1541, %v1514, -inf
        %1570 = vmax.xlane.f32.xlu0 %v1569
        %v1571 = vpop.xlane.xlu0 %1570
        %v1572 = vsel %vm1541, %v1519, -inf
        %1573 = vmax.xlane.f32.xlu0 %v1572
        %v1574 = vpop.xlane.xlu0 %1573
        %v1575 = vsel %vm1541, %v1522, -inf
        %1576 = vmax.xlane.f32.xlu0 %v1575
        %v1577 = vpop.xlane.xlu0 %1576
        %v1578 = vsel %vm1541, %v1527, -inf
        %1579 = vmax.xlane.f32.xlu0 %v1578
        %v1580 = vpop.xlane.xlu0 %1579
        %v1581 = vsel %vm1541, %v1530, -inf
        %1582 = vmax.xlane.f32.xlu0 %v1581
        %v1583 = vpop.xlane.xlu0 %1582
        %v1584 = vsel %vm1541, %v1535, -inf
        %1585 = vmax.xlane.f32.xlu0 %v1584
        %v1586 = vpop.xlane.xlu0 %1585
        %v1587 = vsel %vm1541, %v1538, -inf
        %1588 = vmax.xlane.f32.xlu0 %v1587
        %v1589 = vpop.xlane.xlu0 %1588
        %v1590 = vsub.f32 %v1479, %v1544
        %v1591 = vsub.f32 %v1482, %v1547
        %v1592 = vsub.f32 %v1487, %v1550
        %v1593 = vsub.f32 %v1490, %v1553
        %v1594 = vsub.f32 %v1495, %v1556
        %v1595 = vsub.f32 %v1498, %v1559
        %v1596 = vsub.f32 %v1503, %v1562
        %v1597 = vsub.f32 %v1506, %v1565
        %v1598 = vsub.f32 %v1511, %v1568
        %v1599 = vsub.f32 %v1514, %v1571
        %v1600 = vsub.f32 %v1519, %v1574
        %v1601 = vsub.f32 %v1522, %v1577
        %v1602 = vsub.f32 %v1527, %v1580
        %v1603 = vsub.f32 %v1530, %v1583
        %v1604 = vsub.f32 %v1535, %v1586
        %v1605 = vsub.f32 %v1538, %v1589
        %v1606 = vmul.f32 %v1590, 1.442695
        %v1607 = vpow.pop %v1606
        %v1608 = vmul.f32 %v1591, 1.442695
        %v1609 = vpow.pop %v1608
        %v1610 = vmul.f32 %v1592, 1.442695
        %v1611 = vpow.pop %v1610
        %v1612 = vmul.f32 %v1593, 1.442695
        %v1613 = vpow.pop %v1612
        %v1614 = vmul.f32 %v1594, 1.442695
        %v1615 = vpow.pop %v1614
        %v1616 = vmul.f32 %v1595, 1.442695
        %v1617 = vpow.pop %v1616
        %v1618 = vmul.f32 %v1596, 1.442695
        %v1619 = vpow.pop %v1618
        %v1620 = vmul.f32 %v1597, 1.442695
        %v1621 = vpow.pop %v1620
        %v1622 = vmul.f32 %v1598, 1.442695
        %v1623 = vpow.pop %v1622
        %v1624 = vmul.f32 %v1599, 1.442695
        %v1625 = vpow.pop %v1624
        %v1626 = vmul.f32 %v1600, 1.442695
        %v1627 = vpow.pop %v1626
        %v1628 = vmul.f32 %v1601, 1.442695
        %v1629 = vpow.pop %v1628
        %v1630 = vmul.f32 %v1602, 1.442695
        %v1631 = vpow.pop %v1630
        %v1632 = vmul.f32 %v1603, 1.442695
        %v1633 = vpow.pop %v1632
        %v1634 = vmul.f32 %v1604, 1.442695
        %v1635 = vpow.pop %v1634
        %v1636 = vmul.f32 %v1605, 1.442695
        %v1637 = vpow.pop %v1636
        %v1638 = vsel %vm1541, %v1607, 0.0
        %1639 = vadd.xlane.f32.xlu0 %v1638
        %v1640 = vpop.xlane.xlu0 %1639
        %v1641 = vsel %vm1541, %v1609, 0.0
        %1642 = vadd.xlane.f32.xlu0 %v1641
        %v1643 = vpop.xlane.xlu0 %1642
        %v1644 = vsel %vm1541, %v1611, 0.0
        %1645 = vadd.xlane.f32.xlu0 %v1644
        %v1646 = vpop.xlane.xlu0 %1645
        %v1647 = vsel %vm1541, %v1613, 0.0
        %1648 = vadd.xlane.f32.xlu0 %v1647
        %v1649 = vpop.xlane.xlu0 %1648
        %v1650 = vsel %vm1541, %v1615, 0.0
        %1651 = vadd.xlane.f32.xlu0 %v1650
        %v1652 = vpop.xlane.xlu0 %1651
        %v1653 = vsel %vm1541, %v1617, 0.0
        %1654 = vadd.xlane.f32.xlu0 %v1653
        %v1655 = vpop.xlane.xlu0 %1654
        %v1656 = vsel %vm1541, %v1619, 0.0
        %1657 = vadd.xlane.f32.xlu0 %v1656
        %v1658 = vpop.xlane.xlu0 %1657
        %v1659 = vsel %vm1541, %v1621, 0.0
        %1660 = vadd.xlane.f32.xlu0 %v1659
        %v1661 = vpop.xlane.xlu0 %1660
        %v1662 = vsel %vm1541, %v1623, 0.0
        %1663 = vadd.xlane.f32.xlu0 %v1662
        %v1664 = vpop.xlane.xlu0 %1663
        %v1665 = vsel %vm1541, %v1625, 0.0
        %1666 = vadd.xlane.f32.xlu0 %v1665
        %v1667 = vpop.xlane.xlu0 %1666
        %v1668 = vsel %vm1541, %v1627, 0.0
        %1669 = vadd.xlane.f32.xlu0 %v1668
        %v1670 = vpop.xlane.xlu0 %1669
        %v1671 = vsel %vm1541, %v1629, 0.0
        %1672 = vadd.xlane.f32.xlu0 %v1671
        %v1673 = vpop.xlane.xlu0 %1672
        %v1674 = vsel %vm1541, %v1631, 0.0
        %1675 = vadd.xlane.f32.xlu0 %v1674
        %v1676 = vpop.xlane.xlu0 %1675
        %v1677 = vsel %vm1541, %v1633, 0.0
        %1678 = vadd.xlane.f32.xlu0 %v1677
        %v1679 = vpop.xlane.xlu0 %1678
        %v1680 = vsel %vm1541, %v1635, 0.0
        %1681 = vadd.xlane.f32.xlu0 %v1680
        %v1682 = vpop.xlane.xlu0 %1681
        %v1683 = vsel %vm1541, %v1637, 0.0
        %1684 = vadd.xlane.f32.xlu0 %v1683
        %v1685 = vpop.xlane.xlu0 %1684
        %v1686 = vrcp.pop %v1640
        %v1687 = vmul.f32 %v1607, %v1686
        %v1688 = vrcp.pop %v1643
        %v1689 = vmul.f32 %v1609, %v1688
        %v1690 = vrcp.pop %v1646
        %v1691 = vmul.f32 %v1611, %v1690
        %v1692 = vrcp.pop %v1649
        %v1693 = vmul.f32 %v1613, %v1692
        %v1694 = vrcp.pop %v1652
        %v1695 = vmul.f32 %v1615, %v1694
        %v1696 = vrcp.pop %v1655
        %v1697 = vmul.f32 %v1617, %v1696
        %v1698 = vrcp.pop %v1658
        %v1699 = vmul.f32 %v1619, %v1698
        %v1700 = vrcp.pop %v1661
        %v1701 = vmul.f32 %v1621, %v1700
        %v1702 = vrcp.pop %v1664
        %v1703 = vmul.f32 %v1623, %v1702
        %v1704 = vrcp.pop %v1667
        %v1705 = vmul.f32 %v1625, %v1704
        %v1706 = vrcp.pop %v1670
        %v1707 = vmul.f32 %v1627, %v1706
        %v1708 = vrcp.pop %v1673
        %v1709 = vmul.f32 %v1629, %v1708
        %v1710 = vrcp.pop %v1676
        %v1711 = vmul.f32 %v1631, %v1710
        %v1712 = vrcp.pop %v1679
        %v1713 = vmul.f32 %v1633, %v1712
        %v1714 = vrcp.pop %v1682
        %v1715 = vmul.f32 %v1635, %v1714
        %v1716 = vrcp.pop %v1685
        %v1717 = vmul.f32 %v1637, %v1716
        %v1718 = vld [vmem:[%s2 + $0x30] sm:$0xf]
        %v1719 = vld [vmem:[%s2 + $0x34] sm:$0xf]
        %v1720 = vpack.c.bf16 %v1296, %v1293
        %v1721 = vpack.c.bf16 %v1304, %v1301
        %v1722 = vpack.c.bf16 %v1312, %v1309
        %v1723 = vpack.c.bf16 %v1320, %v1317
        %v1724 = vpack.c.bf16 %v1328, %v1325
        %v1725 = vpack.c.bf16 %v1336, %v1333
        %v1726 = vpack.c.bf16 %v1344, %v1341
        %v1727 = vpack.c.bf16 %v1352, %v1349
        %v1728 = vld [vmem:[%s4 + $0x3] sm:$0x1]
        %v1730 = vlaneseq
        %v1731 = vshrl.u32 %v1730, 7
        %v1732 = vsub.s32 0, %v1731
        %v1733 = vrot.slane %v1728, %v1732
        %v1737 = vunpack.c.l.b16 %v1718
        %v1738 = vunpack.c.l.b16 %v1719
        %v1739 = vpack.c.b16 %v1738, %v1737
        %v1742 = vsel %vm1419, %v1720, 0
        %v1745 = vsel %vm1419, %v1721, 0
        %v1748 = vsel %vm1419, %v1722, 0
        %v1751 = vsel %vm1419, %v1723, 0
        %v1754 = vsel %vm1419, %v1724, 0
        %v1757 = vsel %vm1419, %v1725, 0
        %v1760 = vsel %vm1419, %v1726, 0
        %v1763 = vsel %vm1419, %v1727, 0
        %1765 = vmatprep.subr.bf16.mxu0 0
        %1766 = vmatpush1.bf16.msra.mxu0 0
        %1767 = vmatprep.subr.bf16.mxu0 0
        %1768 = vmatpush1.bf16.msra.mxu0 0
        %1769 = vmatprep.subr.bf16.mxu0 0
        %1770 = vmatpush1.bf16.msra.mxu0 0
        %1771 = vmatprep.subr.bf16.mxu0 0
        %1772 = vmatpush1.bf16.msra.mxu0 0
        %1773 = vmatprep.subr.bf16.mxu0 0
        %1774 = vmatpush1.bf16.msra.mxu0 0
        %1775 = vmatprep.subr.bf16.mxu0 0
        %1776 = vmatpush1.bf16.msra.mxu0 0
        %1777 = vmatprep.subr.bf16.mxu0 0
        %1778 = vmatpush1.bf16.msra.mxu0 0
        %1779 = vmatprep.subr.bf16.mxu0 0
        %1780 = vmatpush1.bf16.msra.mxu0 %v1739
        %1781 = vmatprep.subr.bf16.mxu0 0
        %1782 = vmatpush2.bf16.msra.mxu0 0
        %1783 = vmatprep.subr.bf16.mxu0 0
        %1784 = vmatpush2.bf16.msra.mxu0 0
        %1785 = vmatprep.subr.bf16.mxu0 0
        %1786 = vmatpush2.bf16.msra.mxu0 0
        %1787 = vmatprep.subr.bf16.mxu0 0
        %1788 = vmatpush2.bf16.msra.mxu0 0
        %1789 = vmatprep.subr.bf16.mxu0 0
        %1790 = vmatpush2.bf16.msra.mxu0 0
        %1791 = vmatprep.subr.bf16.mxu0 0
        %1792 = vmatpush2.bf16.msra.mxu0 0
        %1793 = vmatprep.subr.bf16.mxu0 0
        %1794 = vmatpush2.bf16.msra.mxu0 0
        %1795 = vmatprep.subr.bf16.mxu0 0
        %1796 = vmatpush2.bf16.msra.mxu0 0
        %1797 = vmatprep.mubr.bf16.mxu0 0
        %1798 = vmatmul.mubr.bf16.gmra.mxu0 %v1742
        %v1799 = vpop.f32.mrf.mxu0
        %v1800 = vadd.f32 %v1733, %v1799
        %v1801 = vpop.f32.mrf.mxu0
        %v1802 = vpop.f32.mrf.mxu0
        %v1803 = vadd.f32 %v1733, %v1802
        %v1804 = vpop.f32.mrf.mxu0
        %1805 = vmatprep.mubr.bf16.mxu0 0
        %1806 = vmatmul.mubr.bf16.gmra.mxu0 %v1745
        %v1807 = vpop.f32.mrf.mxu0
        %v1808 = vadd.f32 %v1733, %v1807
        %v1809 = vpop.f32.mrf.mxu0
        %v1810 = vpop.f32.mrf.mxu0
        %v1811 = vadd.f32 %v1733, %v1810
        %v1812 = vpop.f32.mrf.mxu0
        %1813 = vmatprep.mubr.bf16.mxu0 0
        %1814 = vmatmul.mubr.bf16.gmra.mxu0 %v1748
        %v1815 = vpop.f32.mrf.mxu0
        %v1816 = vadd.f32 %v1733, %v1815
        %v1817 = vpop.f32.mrf.mxu0
        %v1818 = vpop.f32.mrf.mxu0
        %v1819 = vadd.f32 %v1733, %v1818
        %v1820 = vpop.f32.mrf.mxu0
        %1821 = vmatprep.mubr.bf16.mxu0 0
        %1822 = vmatmul.mubr.bf16.gmra.mxu0 %v1751
        %v1823 = vpop.f32.mrf.mxu0
        %v1824 = vadd.f32 %v1733, %v1823
        %v1825 = vpop.f32.mrf.mxu0
        %v1826 = vpop.f32.mrf.mxu0
        %v1827 = vadd.f32 %v1733, %v1826
        %v1828 = vpop.f32.mrf.mxu0
        %1829 = vmatprep.mubr.bf16.mxu0 0
        %1830 = vmatmul.mubr.bf16.gmra.mxu0 %v1754
        %v1831 = vpop.f32.mrf.mxu0
        %v1832 = vadd.f32 %v1733, %v1831
        %v1833 = vpop.f32.mrf.mxu0
        %v1834 = vpop.f32.mrf.mxu0
        %v1835 = vadd.f32 %v1733, %v1834
        %v1836 = vpop.f32.mrf.mxu0
        %1837 = vmatprep.mubr.bf16.mxu0 0
        %1838 = vmatmul.mubr.bf16.gmra.mxu0 %v1757
        %v1839 = vpop.f32.mrf.mxu0
        %v1840 = vadd.f32 %v1733, %v1839
        %v1841 = vpop.f32.mrf.mxu0
        %v1842 = vpop.f32.mrf.mxu0
        %v1843 = vadd.f32 %v1733, %v1842
        %v1844 = vpop.f32.mrf.mxu0
        %1845 = vmatprep.mubr.bf16.mxu0 0
        %1846 = vmatmul.mubr.bf16.gmra.mxu0 %v1760
        %v1847 = vpop.f32.mrf.mxu0
        %v1848 = vadd.f32 %v1733, %v1847
        %v1849 = vpop.f32.mrf.mxu0
        %v1850 = vpop.f32.mrf.mxu0
        %v1851 = vadd.f32 %v1733, %v1850
        %v1852 = vpop.f32.mrf.mxu0
        %1853 = vmatprep.mubr.bf16.mxu0 0
        %1854 = vmatmul.mubr.bf16.gmra.mxu0 %v1763
        %v1855 = vpop.f32.mrf.mxu0
        %v1856 = vadd.f32 %v1733, %v1855
        %v1857 = vpop.f32.mrf.mxu0
        %v1858 = vpop.f32.mrf.mxu0
        %v1859 = vadd.f32 %v1733, %v1858
        %v1860 = vpop.f32.mrf.mxu0
        %1861 = vdwg.mxu0
        %v1862 = vmax.f32 %v1800, 0.0
        %v1863 = vmax.f32 %v1803, 0.0
        %v1864 = vmax.f32 %v1808, 0.0
        %v1865 = vmax.f32 %v1811, 0.0
        %v1866 = vmax.f32 %v1816, 0.0
        %v1867 = vmax.f32 %v1819, 0.0
        %v1868 = vmax.f32 %v1824, 0.0
        %v1869 = vmax.f32 %v1827, 0.0
        %v1870 = vmax.f32 %v1832, 0.0
        %v1871 = vmax.f32 %v1835, 0.0
        %v1872 = vmax.f32 %v1840, 0.0
        %v1873 = vmax.f32 %v1843, 0.0
        %v1874 = vmax.f32 %v1848, 0.0
        %v1875 = vmax.f32 %v1851, 0.0
        %v1876 = vmax.f32 %v1856, 0.0
        %v1877 = vmax.f32 %v1859, 0.0
        %v1878 = vld [vmem:[%s2 + $0x38] sm:$0xf]
        %v1879 = vld [vmem:[%s2 + $0x3c] sm:$0xf]
        %v1880 = vld [vmem:[%s2 + $0x40] sm:$0xf]
        %v1881 = vld [vmem:[%s2 + $0x44] sm:$0xf]
        %v1882 = vpack.c.bf16 %v1863, %v1862
        %v1883 = vpack.c.bf16 %v1865, %v1864
        %v1884 = vpack.c.bf16 %v1867, %v1866
        %v1885 = vpack.c.bf16 %v1869, %v1868
        %v1886 = vpack.c.bf16 %v1871, %v1870
        %v1887 = vpack.c.bf16 %v1873, %v1872
        %v1888 = vpack.c.bf16 %v1875, %v1874
        %v1889 = vpack.c.bf16 %v1877, %v1876
        %v1890 = vld [vmem:[%s4 + $0x4] sm:$0x1]
        %v1892 = vlaneseq
        %v1893 = vshrl.u32 %v1892, 7
        %v1894 = vsub.s32 0, %v1893
        %v1895 = vrot.slane %v1890, %v1894
        %v1901 = vunpack.c.l.b16 %v1878
        %v1902 = vunpack.c.l.b16 %v1879
        %v1903 = vunpack.c.l.b16 %v1880
        %v1904 = vunpack.c.l.b16 %v1881
        %v1905 = vpack.c.b16 %v1902, %v1901
        %v1906 = vpack.c.b16 %v1904, %v1903
        %v1910 = vsel %vm374, %v1882, 0
        %v1913 = vsel %vm374, %v1883, 0
        %v1916 = vsel %vm374, %v1884, 0
        %v1919 = vsel %vm374, %v1885, 0
        %v1922 = vsel %vm374, %v1886, 0
        %v1925 = vsel %vm374, %v1887, 0
        %v1928 = vsel %vm374, %v1888, 0
        %v1931 = vsel %vm374, %v1889, 0
        %1933 = vmatprep.subr.bf16.mxu0 0
        %1934 = vmatpush1.bf16.msra.mxu0 0
        %1935 = vmatprep.subr.bf16.mxu0 0
        %1936 = vmatpush1.bf16.msra.mxu0 0
        %1937 = vmatprep.subr.bf16.mxu0 0
        %1938 = vmatpush1.bf16.msra.mxu0 0
        %1939 = vmatprep.subr.bf16.mxu0 0
        %1940 = vmatpush1.bf16.msra.mxu0 0
        %1941 = vmatprep.subr.bf16.mxu0 0
        %1942 = vmatpush1.bf16.msra.mxu0 0
        %1943 = vmatprep.subr.bf16.mxu0 0
        %1944 = vmatpush1.bf16.msra.mxu0 0
        %1945 = vmatprep.subr.bf16.mxu0 0
        %1946 = vmatpush1.bf16.msra.mxu0 %v1906
        %1947 = vmatprep.subr.bf16.mxu0 0
        %1948 = vmatpush1.bf16.msra.mxu0 %v1905
        %1949 = vmatprep.subr.bf16.mxu0 0
        %1950 = vmatpush2.bf16.msra.mxu0 0
        %1951 = vmatprep.subr.bf16.mxu0 0
        %1952 = vmatpush2.bf16.msra.mxu0 0
        %1953 = vmatprep.subr.bf16.mxu0 0
        %1954 = vmatpush2.bf16.msra.mxu0 0
        %1955 = vmatprep.subr.bf16.mxu0 0
        %1956 = vmatpush2.bf16.msra.mxu0 0
        %1957 = vmatprep.subr.bf16.mxu0 0
        %1958 = vmatpush2.bf16.msra.mxu0 0
        %1959 = vmatprep.subr.bf16.mxu0 0
        %1960 = vmatpush2.bf16.msra.mxu0 0
        %1961 = vmatprep.subr.bf16.mxu0 0
        %1962 = vmatpush2.bf16.msra.mxu0 0
        %1963 = vmatprep.subr.bf16.mxu0 0
        %1964 = vmatpush2.bf16.msra.mxu0 0
        %1965 = vmatprep.mubr.bf16.mxu0 0
        %1966 = vmatmul.mubr.bf16.gmra.mxu0 %v1910
        %v1967 = vpop.f32.mrf.mxu0
        %v1968 = vadd.f32 %v1895, %v1967
        %v1969 = vpop.f32.mrf.mxu0
        %v1970 = vpop.f32.mrf.mxu0
        %v1971 = vadd.f32 %v1895, %v1970
        %v1972 = vpop.f32.mrf.mxu0
        %1973 = vmatprep.mubr.bf16.mxu0 0
        %1974 = vmatmul.mubr.bf16.gmra.mxu0 %v1913
        %v1975 = vpop.f32.mrf.mxu0
        %v1976 = vadd.f32 %v1895, %v1975
        %v1977 = vpop.f32.mrf.mxu0
        %v1978 = vpop.f32.mrf.mxu0
        %v1979 = vadd.f32 %v1895, %v1978
        %v1980 = vpop.f32.mrf.mxu0
        %1981 = vmatprep.mubr.bf16.mxu0 0
        %1982 = vmatmul.mubr.bf16.gmra.mxu0 %v1916
        %v1983 = vpop.f32.mrf.mxu0
        %v1984 = vadd.f32 %v1895, %v1983
        %v1985 = vpop.f32.mrf.mxu0
        %v1986 = vpop.f32.mrf.mxu0
        %v1987 = vadd.f32 %v1895, %v1986
        %v1988 = vpop.f32.mrf.mxu0
        %1989 = vmatprep.mubr.bf16.mxu0 0
        %1990 = vmatmul.mubr.bf16.gmra.mxu0 %v1919
        %v1991 = vpop.f32.mrf.mxu0
        %v1992 = vadd.f32 %v1895, %v1991
        %v1993 = vpop.f32.mrf.mxu0
        %v1994 = vpop.f32.mrf.mxu0
        %v1995 = vadd.f32 %v1895, %v1994
        %v1996 = vpop.f32.mrf.mxu0
        %1997 = vmatprep.mubr.bf16.mxu0 0
        %1998 = vmatmul.mubr.bf16.gmra.mxu0 %v1922
        %v1999 = vpop.f32.mrf.mxu0
        %v2000 = vadd.f32 %v1895, %v1999
        %v2001 = vpop.f32.mrf.mxu0
        %v2002 = vpop.f32.mrf.mxu0
        %v2003 = vadd.f32 %v1895, %v2002
        %v2004 = vpop.f32.mrf.mxu0
        %2005 = vmatprep.mubr.bf16.mxu0 0
        %2006 = vmatmul.mubr.bf16.gmra.mxu0 %v1925
        %v2007 = vpop.f32.mrf.mxu0
        %v2008 = vadd.f32 %v1895, %v2007
        %v2009 = vpop.f32.mrf.mxu0
        %v2010 = vpop.f32.mrf.mxu0
        %v2011 = vadd.f32 %v1895, %v2010
        %v2012 = vpop.f32.mrf.mxu0
        %2013 = vmatprep.mubr.bf16.mxu0 0
        %2014 = vmatmul.mubr.bf16.gmra.mxu0 %v1928
        %v2015 = vpop.f32.mrf.mxu0
        %v2016 = vadd.f32 %v1895, %v2015
        %v2017 = vpop.f32.mrf.mxu0
        %v2018 = vpop.f32.mrf.mxu0
        %v2019 = vadd.f32 %v1895, %v2018
        %v2020 = vpop.f32.mrf.mxu0
        %2021 = vmatprep.mubr.bf16.mxu0 0
        %2022 = vmatmul.mubr.bf16.gmra.mxu0 %v1931
        %v2023 = vpop.f32.mrf.mxu0
        %v2024 = vadd.f32 %v1895, %v2023
        %v2025 = vpop.f32.mrf.mxu0
        %v2026 = vpop.f32.mrf.mxu0
        %v2027 = vadd.f32 %v1895, %v2026
        %v2028 = vpop.f32.mrf.mxu0
        %2029 = vdwg.mxu0
        %v2030 = vmax.f32 %v1968, 0.0
        %v2031 = vmax.f32 %v1971, 0.0
        %v2032 = vmax.f32 %v1976, 0.0
        %v2033 = vmax.f32 %v1979, 0.0
        %v2034 = vmax.f32 %v1984, 0.0
        %v2035 = vmax.f32 %v1987, 0.0
        %v2036 = vmax.f32 %v1992, 0.0
        %v2037 = vmax.f32 %v1995, 0.0
        %v2038 = vmax.f32 %v2000, 0.0
        %v2039 = vmax.f32 %v2003, 0.0
        %v2040 = vmax.f32 %v2008, 0.0
        %v2041 = vmax.f32 %v2011, 0.0
        %v2042 = vmax.f32 %v2016, 0.0
        %v2043 = vmax.f32 %v2019, 0.0
        %v2044 = vmax.f32 %v2024, 0.0
        %v2045 = vmax.f32 %v2027, 0.0
        %v2046 = vld [vmem:[%s3] sm:$0xf]
        %v2047 = vld [vmem:[%s3 + $0x4] sm:$0xf]
        %v2048 = vld [vmem:[%s3 + $0x8] sm:$0xf]
        %v2049 = vld [vmem:[%s3 + $0xc] sm:$0xf]
        %v2050 = vld [vmem:[%s3 + $0x10] sm:$0xf]
        %v2051 = vld [vmem:[%s3 + $0x14] sm:$0xf]
        %v2052 = vld [vmem:[%s3 + $0x18] sm:$0xf]
        %v2053 = vld [vmem:[%s3 + $0x1c] sm:$0xf]
        %v2054 = vpack.c.bf16 %v2031, %v2030
        %v2055 = vpack.c.bf16 %v2033, %v2032
        %v2056 = vpack.c.bf16 %v2035, %v2034
        %v2057 = vpack.c.bf16 %v2037, %v2036
        %v2058 = vpack.c.bf16 %v2039, %v2038
        %v2059 = vpack.c.bf16 %v2041, %v2040
        %v2060 = vpack.c.bf16 %v2043, %v2042
        %v2061 = vpack.c.bf16 %v2045, %v2044
        %v2062 = vld [vmem:[%s4 + $0x5] sm:$0x1]
        %v2064 = vlaneseq
        %v2065 = vshrl.u32 %v2064, 7
        %v2066 = vsub.s32 0, %v2065
        %v2067 = vrot.slane %v2062, %v2066
        %v2077 = vunpack.c.l.b16 %v2046
        %v2078 = vunpack.c.l.b16 %v2047
        %v2079 = vunpack.c.l.b16 %v2048
        %v2080 = vunpack.c.l.b16 %v2049
        %v2081 = vunpack.c.l.b16 %v2050
        %v2082 = vunpack.c.l.b16 %v2051
        %v2083 = vunpack.c.l.b16 %v2052
        %v2084 = vunpack.c.l.b16 %v2053
        %v2085 = vpack.c.b16 %v2078, %v2077
        %v2086 = vpack.c.b16 %v2080, %v2079
        %v2087 = vpack.c.b16 %v2082, %v2081
        %v2088 = vpack.c.b16 %v2084, %v2083
        %v2094 = vsel %vm672, %v2054, 0
        %v2097 = vsel %vm672, %v2055, 0
        %v2100 = vsel %vm672, %v2056, 0
        %v2103 = vsel %vm672, %v2057, 0
        %v2106 = vsel %vm672, %v2058, 0
        %v2109 = vsel %vm672, %v2059, 0
        %v2112 = vsel %vm672, %v2060, 0
        %v2115 = vsel %vm672, %v2061, 0
        %2117 = vmatprep.subr.bf16.mxu0 0
        %2118 = vmatpush1.bf16.msra.mxu0 0
        %2119 = vmatprep.subr.bf16.mxu0 0
        %2120 = vmatpush1.bf16.msra.mxu0 0
        %2121 = vmatprep.subr.bf16.mxu0 0
        %2122 = vmatpush1.bf16.msra.mxu0 0
        %2123 = vmatprep.subr.bf16.mxu0 0
        %2124 = vmatpush1.bf16.msra.mxu0 0
        %2125 = vmatprep.subr.bf16.mxu0 0
        %2126 = vmatpush1.bf16.msra.mxu0 %v2088
        %2127 = vmatprep.subr.bf16.mxu0 0
        %2128 = vmatpush1.bf16.msra.mxu0 %v2087
        %2129 = vmatprep.subr.bf16.mxu0 0
        %2130 = vmatpush1.bf16.msra.mxu0 %v2086
        %2131 = vmatprep.subr.bf16.mxu0 0
        %2132 = vmatpush1.bf16.msra.mxu0 %v2085
        %2133 = vmatprep.subr.bf16.mxu0 0
        %2134 = vmatpush2.bf16.msra.mxu0 0
        %2135 = vmatprep.subr.bf16.mxu0 0
        %2136 = vmatpush2.bf16.msra.mxu0 0
        %2137 = vmatprep.subr.bf16.mxu0 0
        %2138 = vmatpush2.bf16.msra.mxu0 0
        %2139 = vmatprep.subr.bf16.mxu0 0
        %2140 = vmatpush2.bf16.msra.mxu0 0
        %2141 = vmatprep.subr.bf16.mxu0 0
        %2142 = vmatpush2.bf16.msra.mxu0 0
        %2143 = vmatprep.subr.bf16.mxu0 0
        %2144 = vmatpush2.bf16.msra.mxu0 0
        %2145 = vmatprep.subr.bf16.mxu0 0
        %2146 = vmatpush2.bf16.msra.mxu0 0
        %2147 = vmatprep.subr.bf16.mxu0 0
        %2148 = vmatpush2.bf16.msra.mxu0 0
        %2149 = vmatprep.mubr.bf16.mxu0 0
        %2150 = vmatmul.mubr.bf16.gmra.mxu0 %v2094
        %v2151 = vpop.f32.mrf.mxu0
        %v2152 = vadd.f32 %v2067, %v2151
        %v2153 = vpop.f32.mrf.mxu0
        %v2154 = vpop.f32.mrf.mxu0
        %v2155 = vadd.f32 %v2067, %v2154
        %v2156 = vpop.f32.mrf.mxu0
        %2157 = vmatprep.mubr.bf16.mxu0 0
        %2158 = vmatmul.mubr.bf16.gmra.mxu0 %v2097
        %v2159 = vpop.f32.mrf.mxu0
        %v2160 = vadd.f32 %v2067, %v2159
        %v2161 = vpop.f32.mrf.mxu0
        %v2162 = vpop.f32.mrf.mxu0
        %v2163 = vadd.f32 %v2067, %v2162
        %v2164 = vpop.f32.mrf.mxu0
        %2165 = vmatprep.mubr.bf16.mxu0 0
        %2166 = vmatmul.mubr.bf16.gmra.mxu0 %v2100
        %v2167 = vpop.f32.mrf.mxu0
        %v2168 = vadd.f32 %v2067, %v2167
        %v2169 = vpop.f32.mrf.mxu0
        %v2170 = vpop.f32.mrf.mxu0
        %v2171 = vadd.f32 %v2067, %v2170
        %v2172 = vpop.f32.mrf.mxu0
        %2173 = vmatprep.mubr.bf16.mxu0 0
        %2174 = vmatmul.mubr.bf16.gmra.mxu0 %v2103
        %v2175 = vpop.f32.mrf.mxu0
        %v2176 = vadd.f32 %v2067, %v2175
        %v2177 = vpop.f32.mrf.mxu0
        %v2178 = vpop.f32.mrf.mxu0
        %v2179 = vadd.f32 %v2067, %v2178
        %v2180 = vpop.f32.mrf.mxu0
        %2181 = vmatprep.mubr.bf16.mxu0 0
        %2182 = vmatmul.mubr.bf16.gmra.mxu0 %v2106
        %v2183 = vpop.f32.mrf.mxu0
        %v2184 = vadd.f32 %v2067, %v2183
        %v2185 = vpop.f32.mrf.mxu0
        %v2186 = vpop.f32.mrf.mxu0
        %v2187 = vadd.f32 %v2067, %v2186
        %v2188 = vpop.f32.mrf.mxu0
        %2189 = vmatprep.mubr.bf16.mxu0 0
        %2190 = vmatmul.mubr.bf16.gmra.mxu0 %v2109
        %v2191 = vpop.f32.mrf.mxu0
        %v2192 = vadd.f32 %v2067, %v2191
        %v2193 = vpop.f32.mrf.mxu0
        %v2194 = vpop.f32.mrf.mxu0
        %v2195 = vadd.f32 %v2067, %v2194
        %v2196 = vpop.f32.mrf.mxu0
        %2197 = vmatprep.mubr.bf16.mxu0 0
        %2198 = vmatmul.mubr.bf16.gmra.mxu0 %v2112
        %v2199 = vpop.f32.mrf.mxu0
        %v2200 = vadd.f32 %v2067, %v2199
        %v2201 = vpop.f32.mrf.mxu0
        %v2202 = vpop.f32.mrf.mxu0
        %v2203 = vadd.f32 %v2067, %v2202
        %v2204 = vpop.f32.mrf.mxu0
        %2205 = vmatprep.mubr.bf16.mxu0 0
        %2206 = vmatmul.mubr.bf16.gmra.mxu0 %v2115
        %v2207 = vpop.f32.mrf.mxu0
        %v2208 = vadd.f32 %v2067, %v2207
        %v2209 = vpop.f32.mrf.mxu0
        %v2210 = vpop.f32.mrf.mxu0
        %v2211 = vadd.f32 %v2067, %v2210
        %v2212 = vpop.f32.mrf.mxu0
        %2213 = vdwg.mxu0
        %2214 = vst.msk [vmem:[%s291] sm:$0xff] %vm374, %v2152
        %2215 = vst.msk [vmem:[%s291 + $0x8] sm:$0xff] %vm374, %v2155
        %2216 = vst.msk [vmem:[%s291 + $0x10] sm:$0xff] %vm374, %v2160
        %2217 = vst.msk [vmem:[%s291 + $0x18] sm:$0xff] %vm374, %v2163
        %2218 = vst.msk [vmem:[%s291 + $0x20] sm:$0xff] %vm374, %v2168
        %2219 = vst.msk [vmem:[%s291 + $0x28] sm:$0xff] %vm374, %v2171
        %2220 = vst.msk [vmem:[%s291 + $0x30] sm:$0xff] %vm374, %v2176
        %2221 = vst.msk [vmem:[%s291 + $0x38] sm:$0xff] %vm374, %v2179
        %2222 = vst.msk [vmem:[%s291 + $0x40] sm:$0xff] %vm374, %v2184
        %2223 = vst.msk [vmem:[%s291 + $0x48] sm:$0xff] %vm374, %v2187
        %2224 = vst.msk [vmem:[%s291 + $0x50] sm:$0xff] %vm374, %v2192
        %2225 = vst.msk [vmem:[%s291 + $0x58] sm:$0xff] %vm374, %v2195
        %2226 = vst.msk [vmem:[%s291 + $0x60] sm:$0xff] %vm374, %v2200
        %2227 = vst.msk [vmem:[%s291 + $0x68] sm:$0xff] %vm374, %v2203
        %2228 = vst.msk [vmem:[%s291 + $0x70] sm:$0xff] %vm374, %v2208
        %2229 = vst.msk [vmem:[%s291 + $0x78] sm:$0xff] %vm374, %v2211
        %v2230 = vld [vmem:[%s5] sm:$0xff]
        %v2231 = vld [vmem:[%s5 + $0x8] sm:$0xff]
        %v2233 = vsel %vm1419, %v1293, 0
        %v2236 = vsel %vm1419, %v1296, 0
        %v2239 = vsel %vm1419, %v1301, 0
        %v2242 = vsel %vm1419, %v1304, 0
        %v2245 = vsel %vm1419, %v1309, 0
        %v2248 = vsel %vm1419, %v1312, 0
        %v2251 = vsel %vm1419, %v1317, 0
        %v2254 = vsel %vm1419, %v1320, 0
        %v2257 = vsel %vm1419, %v1325, 0
        %v2260 = vsel %vm1419, %v1328, 0
        %v2263 = vsel %vm1419, %v1333, 0
        %v2266 = vsel %vm1419, %v1336, 0
        %v2269 = vsel %vm1419, %v1341, 0
        %v2272 = vsel %vm1419, %v1344, 0
        %v2275 = vsel %vm1419, %v1349, 0
        %v2278 = vsel %vm1419, %v1352, 0
        %2280 = vmatprep.subr.mxu0 0.0
        %2281 = vmatpush1.msra.mxu0 0.0
        %2282 = vmatprep.subr.mxu0 0.0
        %2283 = vmatpush1.msra.mxu0 0.0
        %2284 = vmatprep.subr.mxu0 0.0
        %2285 = vmatpush1.msra.mxu0 0.0
        %2286 = vmatprep.subr.mxu0 0.0
        %2287 = vmatpush1.msra.mxu0 0.0
        %2288 = vmatprep.subr.mxu0 0.0
        %2289 = vmatpush1.msra.mxu0 0.0
        %2290 = vmatprep.subr.mxu0 0.0
        %2291 = vmatpush1.msra.mxu0 0.0
        %2292 = vmatprep.subr.mxu0 0.0
        %2293 = vmatpush1.msra.mxu0 0.0
        %2294 = vmatprep.subr.mxu0 0.0
        %2295 = vmatpush1.msra.mxu0 0.0
        %2296 = vmatprep.subr.mxu0 0.0
        %2297 = vmatpush1.msra.mxu0 0.0
        %2298 = vmatprep.subr.mxu0 0.0
        %2299 = vmatpush1.msra.mxu0 0.0
        %2300 = vmatprep.subr.mxu0 0.0
        %2301 = vmatpush1.msra.mxu0 0.0
        %2302 = vmatprep.subr.mxu0 0.0
        %2303 = vmatpush1.msra.mxu0 0.0
        %2304 = vmatprep.subr.mxu0 0.0
        %2305 = vmatpush1.msra.mxu0 0.0
        %2306 = vmatprep.subr.mxu0 0.0
        %2307 = vmatpush1.msra.mxu0 0.0
        %2308 = vmatprep.subr.mxu0 0.0
        %2309 = vmatpush1.msra.mxu0 %v2231
        %2310 = vmatprep.subr.mxu0 0.0
        %2311 = vmatpush1.msra.mxu0 %v2230
        %2312 = vmatprep.subr.mxu0 0.0
        %2313 = vmatpush2.msra.mxu0 0.0
        %2314 = vmatprep.subr.mxu0 0.0
        %2315 = vmatpush2.msra.mxu0 0.0
        %2316 = vmatprep.subr.mxu0 0.0
        %2317 = vmatpush2.msra.mxu0 0.0
        %2318 = vmatprep.subr.mxu0 0.0
        %2319 = vmatpush2.msra.mxu0 0.0
        %2320 = vmatprep.subr.mxu0 0.0
        %2321 = vmatpush2.msra.mxu0 0.0
        %2322 = vmatprep.subr.mxu0 0.0
        %2323 = vmatpush2.msra.mxu0 0.0
        %2324 = vmatprep.subr.mxu0 0.0
        %2325 = vmatpush2.msra.mxu0 0.0
        %2326 = vmatprep.subr.mxu0 0.0
        %2327 = vmatpush2.msra.mxu0 0.0
        %2328 = vmatprep.subr.mxu0 0.0
        %2329 = vmatpush2.msra.mxu0 0.0
        %2330 = vmatprep.subr.mxu0 0.0
        %2331 = vmatpush2.msra.mxu0 0.0
        %2332 = vmatprep.subr.mxu0 0.0
        %2333 = vmatpush2.msra.mxu0 0.0
        %2334 = vmatprep.subr.mxu0 0.0
        %2335 = vmatpush2.msra.mxu0 0.0
        %2336 = vmatprep.subr.mxu0 0.0
        %2337 = vmatpush2.msra.mxu0 0.0
        %2338 = vmatprep.subr.mxu0 0.0
        %2339 = vmatpush2.msra.mxu0 0.0
        %2340 = vmatprep.subr.mxu0 0.0
        %2341 = vmatpush2.msra.mxu0 0.0
        %2342 = vmatprep.subr.mxu0 0.0
        %2343 = vmatpush2.msra.mxu0 0.0
        %2344 = vmatprep.mubr.f32.mxu0 0.0
        %2345 = vmatmul.mubr.f32.gmra.mxu0 %v2233
        %v2346 = vpop.f32.mrf.mxu0
        %v2347 = vadd.f32 0.0, %v2346
        %v2348 = vpop.f32.mrf.mxu0
        %2349 = vmatprep.mubr.f32.mxu0 0.0
        %2350 = vmatmul.mubr.f32.gmra.mxu0 %v2236
        %v2351 = vpop.f32.mrf.mxu0
        %v2352 = vadd.f32 0.0, %v2351
        %v2353 = vpop.f32.mrf.mxu0
        %2354 = vmatprep.mubr.f32.mxu0 0.0
        %2355 = vmatmul.mubr.f32.gmra.mxu0 %v2239
        %v2356 = vpop.f32.mrf.mxu0
        %v2357 = vadd.f32 0.0, %v2356
        %v2358 = vpop.f32.mrf.mxu0
        %2359 = vmatprep.mubr.f32.mxu0 0.0
        %2360 = vmatmul.mubr.f32.gmra.mxu0 %v2242
        %v2361 = vpop.f32.mrf.mxu0
        %v2362 = vadd.f32 0.0, %v2361
        %v2363 = vpop.f32.mrf.mxu0
        %2364 = vmatprep.mubr.f32.mxu0 0.0
        %2365 = vmatmul.mubr.f32.gmra.mxu0 %v2245
        %v2366 = vpop.f32.mrf.mxu0
        %v2367 = vadd.f32 0.0, %v2366
        %v2368 = vpop.f32.mrf.mxu0
        %2369 = vmatprep.mubr.f32.mxu0 0.0
        %2370 = vmatmul.mubr.f32.gmra.mxu0 %v2248
        %v2371 = vpop.f32.mrf.mxu0
        %v2372 = vadd.f32 0.0, %v2371
        %v2373 = vpop.f32.mrf.mxu0
        %2374 = vmatprep.mubr.f32.mxu0 0.0
        %2375 = vmatmul.mubr.f32.gmra.mxu0 %v2251
        %v2376 = vpop.f32.mrf.mxu0
        %v2377 = vadd.f32 0.0, %v2376
        %v2378 = vpop.f32.mrf.mxu0
        %2379 = vmatprep.mubr.f32.mxu0 0.0
        %2380 = vmatmul.mubr.f32.gmra.mxu0 %v2254
        %v2381 = vpop.f32.mrf.mxu0
        %v2382 = vadd.f32 0.0, %v2381
        %v2383 = vpop.f32.mrf.mxu0
        %2384 = vmatprep.mubr.f32.mxu0 0.0
        %2385 = vmatmul.mubr.f32.gmra.mxu0 %v2257
        %v2386 = vpop.f32.mrf.mxu0
        %v2387 = vadd.f32 0.0, %v2386
        %v2388 = vpop.f32.mrf.mxu0
        %2389 = vmatprep.mubr.f32.mxu0 0.0
        %2390 = vmatmul.mubr.f32.gmra.mxu0 %v2260
        %v2391 = vpop.f32.mrf.mxu0
        %v2392 = vadd.f32 0.0, %v2391
        %v2393 = vpop.f32.mrf.mxu0
        %2394 = vmatprep.mubr.f32.mxu0 0.0
        %2395 = vmatmul.mubr.f32.gmra.mxu0 %v2263
        %v2396 = vpop.f32.mrf.mxu0
        %v2397 = vadd.f32 0.0, %v2396
        %v2398 = vpop.f32.mrf.mxu0
        %2399 = vmatprep.mubr.f32.mxu0 0.0
        %2400 = vmatmul.mubr.f32.gmra.mxu0 %v2266
        %v2401 = vpop.f32.mrf.mxu0
        %v2402 = vadd.f32 0.0, %v2401
        %v2403 = vpop.f32.mrf.mxu0
        %2404 = vmatprep.mubr.f32.mxu0 0.0
        %2405 = vmatmul.mubr.f32.gmra.mxu0 %v2269
        %v2406 = vpop.f32.mrf.mxu0
        %v2407 = vadd.f32 0.0, %v2406
        %v2408 = vpop.f32.mrf.mxu0
        %2409 = vmatprep.mubr.f32.mxu0 0.0
        %2410 = vmatmul.mubr.f32.gmra.mxu0 %v2272
        %v2411 = vpop.f32.mrf.mxu0
        %v2412 = vadd.f32 0.0, %v2411
        %v2413 = vpop.f32.mrf.mxu0
        %2414 = vmatprep.mubr.f32.mxu0 0.0
        %2415 = vmatmul.mubr.f32.gmra.mxu0 %v2275
        %v2416 = vpop.f32.mrf.mxu0
        %v2417 = vadd.f32 0.0, %v2416
        %v2418 = vpop.f32.mrf.mxu0
        %2419 = vmatprep.mubr.f32.mxu0 0.0
        %2420 = vmatmul.mubr.f32.gmra.mxu0 %v2278
        %v2421 = vpop.f32.mrf.mxu0
        %v2422 = vadd.f32 0.0, %v2421
        %v2423 = vpop.f32.mrf.mxu0
        %2424 = vdwg.mxu0
        %v2425 = vmul.f32 %v1293, %v1293
        %v2426 = vmul.f32 %v1296, %v1296
        %v2427 = vmul.f32 %v1301, %v1301
        %v2428 = vmul.f32 %v1304, %v1304
        %v2429 = vmul.f32 %v1309, %v1309
        %v2430 = vmul.f32 %v1312, %v1312
        %v2431 = vmul.f32 %v1317, %v1317
        %v2432 = vmul.f32 %v1320, %v1320
        %v2433 = vmul.f32 %v1325, %v1325
        %v2434 = vmul.f32 %v1328, %v1328
        %v2435 = vmul.f32 %v1333, %v1333
        %v2436 = vmul.f32 %v1336, %v1336
        %v2437 = vmul.f32 %v1341, %v1341
        %v2438 = vmul.f32 %v1344, %v1344
        %v2439 = vmul.f32 %v1349, %v1349
        %v2440 = vmul.f32 %v1352, %v1352
        %v2441 = vsel %vm1419, %v2425, 0.0
        %2442 = vadd.xlane.f32.xlu0 %v2441
        %v2443 = vpop.xlane.xlu0 %2442
        %v2444 = vsel %vm1419, %v2426, 0.0
        %2445 = vadd.xlane.f32.xlu0 %v2444
        %v2446 = vpop.xlane.xlu0 %2445
        %v2447 = vsel %vm1419, %v2427, 0.0
        %2448 = vadd.xlane.f32.xlu0 %v2447
        %v2449 = vpop.xlane.xlu0 %2448
        %v2450 = vsel %vm1419, %v2428, 0.0
        %2451 = vadd.xlane.f32.xlu0 %v2450
        %v2452 = vpop.xlane.xlu0 %2451
        %v2453 = vsel %vm1419, %v2429, 0.0
        %2454 = vadd.xlane.f32.xlu0 %v2453
        %v2455 = vpop.xlane.xlu0 %2454
        %v2456 = vsel %vm1419, %v2430, 0.0
        %2457 = vadd.xlane.f32.xlu0 %v2456
        %v2458 = vpop.xlane.xlu0 %2457
        %v2459 = vsel %vm1419, %v2431, 0.0
        %2460 = vadd.xlane.f32.xlu0 %v2459
        %v2461 = vpop.xlane.xlu0 %2460
        %v2462 = vsel %vm1419, %v2432, 0.0
        %2463 = vadd.xlane.f32.xlu0 %v2462
        %v2464 = vpop.xlane.xlu0 %2463
        %v2465 = vsel %vm1419, %v2433, 0.0
        %2466 = vadd.xlane.f32.xlu0 %v2465
        %v2467 = vpop.xlane.xlu0 %2466
        %v2468 = vsel %vm1419, %v2434, 0.0
        %2469 = vadd.xlane.f32.xlu0 %v2468
        %v2470 = vpop.xlane.xlu0 %2469
        %v2471 = vsel %vm1419, %v2435, 0.0
        %2472 = vadd.xlane.f32.xlu0 %v2471
        %v2473 = vpop.xlane.xlu0 %2472
        %v2474 = vsel %vm1419, %v2436, 0.0
        %2475 = vadd.xlane.f32.xlu0 %v2474
        %v2476 = vpop.xlane.xlu0 %2475
        %v2477 = vsel %vm1419, %v2437, 0.0
        %2478 = vadd.xlane.f32.xlu0 %v2477
        %v2479 = vpop.xlane.xlu0 %2478
        %v2480 = vsel %vm1419, %v2438, 0.0
        %2481 = vadd.xlane.f32.xlu0 %v2480
        %v2482 = vpop.xlane.xlu0 %2481
        %v2483 = vsel %vm1419, %v2439, 0.0
        %2484 = vadd.xlane.f32.xlu0 %v2483
        %v2485 = vpop.xlane.xlu0 %2484
        %v2486 = vsel %vm1419, %v2440, 0.0
        %2487 = vadd.xlane.f32.xlu0 %v2486
        %v2488 = vpop.xlane.xlu0 %2487
        %v2489 = vmul.f32 %v2230, %v2230
        %v2490 = vmul.f32 %v2231, %v2231
        %v2491 = vsel %vm1541, %v2489, 0.0
        %v2492 = vsel %vm1541, %v2490, 0.0
        %v2493 = vadd.f32 %v2491, %v2492
        %v2494 = vrot.slane %v2493, 4
        %v2495 = vadd.f32 %v2493, %v2494
        %v2496 = vrot.slane %v2495, 2
        %v2497 = vadd.f32 %v2495, %v2496
        %v2498 = vrot.slane %v2497, 1
        %v2499 = vadd.f32 %v2497, %v2498
        %v2500 = vadd.f32 %v2443, %v2499
        %v2501 = vadd.f32 %v2446, %v2499
        %v2502 = vadd.f32 %v2449, %v2499
        %v2503 = vadd.f32 %v2452, %v2499
        %v2504 = vadd.f32 %v2455, %v2499
        %v2505 = vadd.f32 %v2458, %v2499
        %v2506 = vadd.f32 %v2461, %v2499
        %v2507 = vadd.f32 %v2464, %v2499
        %v2508 = vadd.f32 %v2467, %v2499
        %v2509 = vadd.f32 %v2470, %v2499
        %v2510 = vadd.f32 %v2473, %v2499
        %v2511 = vadd.f32 %v2476, %v2499
        %v2512 = vadd.f32 %v2479, %v2499
        %v2513 = vadd.f32 %v2482, %v2499
        %v2514 = vadd.f32 %v2485, %v2499
        %v2515 = vadd.f32 %v2488, %v2499
        %v2516 = vmul.f32 %v2347, 2.0
        %v2517 = vmul.f32 %v2352, 2.0
        %v2518 = vmul.f32 %v2357, 2.0
        %v2519 = vmul.f32 %v2362, 2.0
        %v2520 = vmul.f32 %v2367, 2.0
        %v2521 = vmul.f32 %v2372, 2.0
        %v2522 = vmul.f32 %v2377, 2.0
        %v2523 = vmul.f32 %v2382, 2.0
        %v2524 = vmul.f32 %v2387, 2.0
        %v2525 = vmul.f32 %v2392, 2.0
        %v2526 = vmul.f32 %v2397, 2.0
        %v2527 = vmul.f32 %v2402, 2.0
        %v2528 = vmul.f32 %v2407, 2.0
        %v2529 = vmul.f32 %v2412, 2.0
        %v2530 = vmul.f32 %v2417, 2.0
        %v2531 = vmul.f32 %v2422, 2.0
        %v2532 = vsub.f32 %v2500, %v2516
        %v2533 = vsub.f32 %v2501, %v2517
        %v2534 = vsub.f32 %v2502, %v2518
        %v2535 = vsub.f32 %v2503, %v2519
        %v2536 = vsub.f32 %v2504, %v2520
        %v2537 = vsub.f32 %v2505, %v2521
        %v2538 = vsub.f32 %v2506, %v2522
        %v2539 = vsub.f32 %v2507, %v2523
        %v2540 = vsub.f32 %v2508, %v2524
        %v2541 = vsub.f32 %v2509, %v2525
        %v2542 = vsub.f32 %v2510, %v2526
        %v2543 = vsub.f32 %v2511, %v2527
        %v2544 = vsub.f32 %v2512, %v2528
        %v2545 = vsub.f32 %v2513, %v2529
        %v2546 = vsub.f32 %v2514, %v2530
        %v2547 = vsub.f32 %v2515, %v2531
        %v2548 = vmax.f32 %v2532, 0.0
        %v2549 = vmax.f32 %v2533, 0.0
        %v2550 = vmax.f32 %v2534, 0.0
        %v2551 = vmax.f32 %v2535, 0.0
        %v2552 = vmax.f32 %v2536, 0.0
        %v2553 = vmax.f32 %v2537, 0.0
        %v2554 = vmax.f32 %v2538, 0.0
        %v2555 = vmax.f32 %v2539, 0.0
        %v2556 = vmax.f32 %v2540, 0.0
        %v2557 = vmax.f32 %v2541, 0.0
        %v2558 = vmax.f32 %v2542, 0.0
        %v2559 = vmax.f32 %v2543, 0.0
        %v2560 = vmax.f32 %v2544, 0.0
        %v2561 = vmax.f32 %v2545, 0.0
        %v2562 = vmax.f32 %v2546, 0.0
        %v2563 = vmax.f32 %v2547, 0.0
        %v2564 = vadd.f32 %v2548, 1.0
        %v2565 = vadd.f32 %v2549, 1.0
        %v2566 = vadd.f32 %v2550, 1.0
        %v2567 = vadd.f32 %v2551, 1.0
        %v2568 = vadd.f32 %v2552, 1.0
        %v2569 = vadd.f32 %v2553, 1.0
        %v2570 = vadd.f32 %v2554, 1.0
        %v2571 = vadd.f32 %v2555, 1.0
        %v2572 = vadd.f32 %v2556, 1.0
        %v2573 = vadd.f32 %v2557, 1.0
        %v2574 = vadd.f32 %v2558, 1.0
        %v2575 = vadd.f32 %v2559, 1.0
        %v2576 = vadd.f32 %v2560, 1.0
        %v2577 = vadd.f32 %v2561, 1.0
        %v2578 = vadd.f32 %v2562, 1.0
        %v2579 = vadd.f32 %v2563, 1.0
        %v2580 = vrcp.pop %v2564
        %v2581 = vmul.f32 1.0, %v2580
        %v2582 = vrcp.pop %v2565
        %v2583 = vmul.f32 1.0, %v2582
        %v2584 = vrcp.pop %v2566
        %v2585 = vmul.f32 1.0, %v2584
        %v2586 = vrcp.pop %v2567
        %v2587 = vmul.f32 1.0, %v2586
        %v2588 = vrcp.pop %v2568
        %v2589 = vmul.f32 1.0, %v2588
        %v2590 = vrcp.pop %v2569
        %v2591 = vmul.f32 1.0, %v2590
        %v2592 = vrcp.pop %v2570
        %v2593 = vmul.f32 1.0, %v2592
        %v2594 = vrcp.pop %v2571
        %v2595 = vmul.f32 1.0, %v2594
        %v2596 = vrcp.pop %v2572
        %v2597 = vmul.f32 1.0, %v2596
        %v2598 = vrcp.pop %v2573
        %v2599 = vmul.f32 1.0, %v2598
        %v2600 = vrcp.pop %v2574
        %v2601 = vmul.f32 1.0, %v2600
        %v2602 = vrcp.pop %v2575
        %v2603 = vmul.f32 1.0, %v2602
        %v2604 = vrcp.pop %v2576
        %v2605 = vmul.f32 1.0, %v2604
        %v2606 = vrcp.pop %v2577
        %v2607 = vmul.f32 1.0, %v2606
        %v2608 = vrcp.pop %v2578
        %v2609 = vmul.f32 1.0, %v2608
        %v2610 = vrcp.pop %v2579
        %v2611 = vmul.f32 1.0, %v2610
        %v2612 = vsel %vm1541, %v2581, 0.0
        %2613 = vadd.xlane.f32.xlu0 %v2612
        %v2614 = vpop.xlane.xlu0 %2613
        %v2615 = vsel %vm1541, %v2583, 0.0
        %2616 = vadd.xlane.f32.xlu0 %v2615
        %v2617 = vpop.xlane.xlu0 %2616
        %v2618 = vsel %vm1541, %v2585, 0.0
        %2619 = vadd.xlane.f32.xlu0 %v2618
        %v2620 = vpop.xlane.xlu0 %2619
        %v2621 = vsel %vm1541, %v2587, 0.0
        %2622 = vadd.xlane.f32.xlu0 %v2621
        %v2623 = vpop.xlane.xlu0 %2622
        %v2624 = vsel %vm1541, %v2589, 0.0
        %2625 = vadd.xlane.f32.xlu0 %v2624
        %v2626 = vpop.xlane.xlu0 %2625
        %v2627 = vsel %vm1541, %v2591, 0.0
        %2628 = vadd.xlane.f32.xlu0 %v2627
        %v2629 = vpop.xlane.xlu0 %2628
        %v2630 = vsel %vm1541, %v2593, 0.0
        %2631 = vadd.xlane.f32.xlu0 %v2630
        %v2632 = vpop.xlane.xlu0 %2631
        %v2633 = vsel %vm1541, %v2595, 0.0
        %2634 = vadd.xlane.f32.xlu0 %v2633
        %v2635 = vpop.xlane.xlu0 %2634
        %v2636 = vsel %vm1541, %v2597, 0.0
        %2637 = vadd.xlane.f32.xlu0 %v2636
        %v2638 = vpop.xlane.xlu0 %2637
        %v2639 = vsel %vm1541, %v2599, 0.0
        %2640 = vadd.xlane.f32.xlu0 %v2639
        %v2641 = vpop.xlane.xlu0 %2640
        %v2642 = vsel %vm1541, %v2601, 0.0
        %2643 = vadd.xlane.f32.xlu0 %v2642
        %v2644 = vpop.xlane.xlu0 %2643
        %v2645 = vsel %vm1541, %v2603, 0.0
        %2646 = vadd.xlane.f32.xlu0 %v2645
        %v2647 = vpop.xlane.xlu0 %2646
        %v2648 = vsel %vm1541, %v2605, 0.0
        %2649 = vadd.xlane.f32.xlu0 %v2648
        %v2650 = vpop.xlane.xlu0 %2649
        %v2651 = vsel %vm1541, %v2607, 0.0
        %2652 = vadd.xlane.f32.xlu0 %v2651
        %v2653 = vpop.xlane.xlu0 %2652
        %v2654 = vsel %vm1541, %v2609, 0.0
        %2655 = vadd.xlane.f32.xlu0 %v2654
        %v2656 = vpop.xlane.xlu0 %2655
        %v2657 = vsel %vm1541, %v2611, 0.0
        %2658 = vadd.xlane.f32.xlu0 %v2657
        %v2659 = vpop.xlane.xlu0 %2658
        %v2660 = vrcp.pop %v2614
        %v2661 = vmul.f32 %v2581, %v2660
        %v2662 = vrcp.pop %v2617
        %v2663 = vmul.f32 %v2583, %v2662
        %v2664 = vrcp.pop %v2620
        %v2665 = vmul.f32 %v2585, %v2664
        %v2666 = vrcp.pop %v2623
        %v2667 = vmul.f32 %v2587, %v2666
        %v2668 = vrcp.pop %v2626
        %v2669 = vmul.f32 %v2589, %v2668
        %v2670 = vrcp.pop %v2629
        %v2671 = vmul.f32 %v2591, %v2670
        %v2672 = vrcp.pop %v2632
        %v2673 = vmul.f32 %v2593, %v2672
        %v2674 = vrcp.pop %v2635
        %v2675 = vmul.f32 %v2595, %v2674
        %v2676 = vrcp.pop %v2638
        %v2677 = vmul.f32 %v2597, %v2676
        %v2678 = vrcp.pop %v2641
        %v2679 = vmul.f32 %v2599, %v2678
        %v2680 = vrcp.pop %v2644
        %v2681 = vmul.f32 %v2601, %v2680
        %v2682 = vrcp.pop %v2647
        %v2683 = vmul.f32 %v2603, %v2682
        %v2684 = vrcp.pop %v2650
        %v2685 = vmul.f32 %v2605, %v2684
        %v2686 = vrcp.pop %v2653
        %v2687 = vmul.f32 %v2607, %v2686
        %v2688 = vrcp.pop %v2656
        %v2689 = vmul.f32 %v2609, %v2688
        %v2690 = vrcp.pop %v2659
        %v2691 = vmul.f32 %v2611, %v2690
        %2692 = vst.msk [vmem:[%s280] sm:$0xff] %vm1541, %v2661
        %2693 = vst.msk [vmem:[%s280 + $0x8] sm:$0xff] %vm1541, %v2663
        %2694 = vst.msk [vmem:[%s280 + $0x10] sm:$0xff] %vm1541, %v2665
        %2695 = vst.msk [vmem:[%s280 + $0x18] sm:$0xff] %vm1541, %v2667
        %2696 = vst.msk [vmem:[%s280 + $0x20] sm:$0xff] %vm1541, %v2669
        %2697 = vst.msk [vmem:[%s280 + $0x28] sm:$0xff] %vm1541, %v2671
        %2698 = vst.msk [vmem:[%s280 + $0x30] sm:$0xff] %vm1541, %v2673
        %2699 = vst.msk [vmem:[%s280 + $0x38] sm:$0xff] %vm1541, %v2675
        %2700 = vst.msk [vmem:[%s280 + $0x40] sm:$0xff] %vm1541, %v2677
        %2701 = vst.msk [vmem:[%s280 + $0x48] sm:$0xff] %vm1541, %v2679
        %2702 = vst.msk [vmem:[%s280 + $0x50] sm:$0xff] %vm1541, %v2681
        %2703 = vst.msk [vmem:[%s280 + $0x58] sm:$0xff] %vm1541, %v2683
        %2704 = vst.msk [vmem:[%s280 + $0x60] sm:$0xff] %vm1541, %v2685
        %2705 = vst.msk [vmem:[%s280 + $0x68] sm:$0xff] %vm1541, %v2687
        %2706 = vst.msk [vmem:[%s280 + $0x70] sm:$0xff] %vm1541, %v2689
        %2707 = vst.msk [vmem:[%s280 + $0x78] sm:$0xff] %vm1541, %v2691
        %2724 = vrot.lane.b32.xlu0 %v1687, 4
        %v2725 = vpop.permute.xlu0 %2724
        %2726 = vrot.lane.b32.xlu0 %v1689, 4
        %v2727 = vpop.permute.xlu0 %2726
        %2728 = vrot.lane.b32.xlu0 %v1691, 4
        %v2729 = vpop.permute.xlu0 %2728
        %2730 = vrot.lane.b32.xlu0 %v1693, 4
        %v2731 = vpop.permute.xlu0 %2730
        %2732 = vrot.lane.b32.xlu0 %v1695, 4
        %v2733 = vpop.permute.xlu0 %2732
        %2734 = vrot.lane.b32.xlu0 %v1697, 4
        %v2735 = vpop.permute.xlu0 %2734
        %2736 = vrot.lane.b32.xlu0 %v1699, 4
        %v2737 = vpop.permute.xlu0 %2736
        %2738 = vrot.lane.b32.xlu0 %v1701, 4
        %v2739 = vpop.permute.xlu0 %2738
        %2740 = vrot.lane.b32.xlu0 %v1703, 4
        %v2741 = vpop.permute.xlu0 %2740
        %2742 = vrot.lane.b32.xlu0 %v1705, 4
        %v2743 = vpop.permute.xlu0 %2742
        %2744 = vrot.lane.b32.xlu0 %v1707, 4
        %v2745 = vpop.permute.xlu0 %2744
        %2746 = vrot.lane.b32.xlu0 %v1709, 4
        %v2747 = vpop.permute.xlu0 %2746
        %2748 = vrot.lane.b32.xlu0 %v1711, 4
        %v2749 = vpop.permute.xlu0 %2748
        %2750 = vrot.lane.b32.xlu0 %v1713, 4
        %v2751 = vpop.permute.xlu0 %2750
        %2752 = vrot.lane.b32.xlu0 %v1715, 4
        %v2753 = vpop.permute.xlu0 %2752
        %2754 = vrot.lane.b32.xlu0 %v1717, 4
        %v2755 = vpop.permute.xlu0 %2754
        %vm2772 = vcmask 64544
        %2773 = vst.msk [vmem:[%s280] sm:$0xff] %vm2772, %v2725
        %2774 = vst.msk [vmem:[%s280 + $0x8] sm:$0xff] %vm2772, %v2727
        %2775 = vst.msk [vmem:[%s280 + $0x10] sm:$0xff] %vm2772, %v2729
        %2776 = vst.msk [vmem:[%s280 + $0x18] sm:$0xff] %vm2772, %v2731
        %2777 = vst.msk [vmem:[%s280 + $0x20] sm:$0xff] %vm2772, %v2733
        %2778 = vst.msk [vmem:[%s280 + $0x28] sm:$0xff] %vm2772, %v2735
        %2779 = vst.msk [vmem:[%s280 + $0x30] sm:$0xff] %vm2772, %v2737
        %2780 = vst.msk [vmem:[%s280 + $0x38] sm:$0xff] %vm2772, %v2739
        %2781 = vst.msk [vmem:[%s280 + $0x40] sm:$0xff] %vm2772, %v2741
        %2782 = vst.msk [vmem:[%s280 + $0x48] sm:$0xff] %vm2772, %v2743
        %2783 = vst.msk [vmem:[%s280 + $0x50] sm:$0xff] %vm2772, %v2745
        %2784 = vst.msk [vmem:[%s280 + $0x58] sm:$0xff] %vm2772, %v2747
        %2785 = vst.msk [vmem:[%s280 + $0x60] sm:$0xff] %vm2772, %v2749
        %2786 = vst.msk [vmem:[%s280 + $0x68] sm:$0xff] %vm2772, %v2751
        %2787 = vst.msk [vmem:[%s280 + $0x70] sm:$0xff] %vm2772, %v2753
        %2788 = vst.msk [vmem:[%s280 + $0x78] sm:$0xff] %vm2772, %v2755
        %2789 = vrot.lane.b32.xlu0 %v1293, 8
        %v2790 = vpop.permute.xlu0 %2789
        %2791 = vrot.lane.b32.xlu0 %v1296, 8
        %v2792 = vpop.permute.xlu0 %2791
        %2793 = vrot.lane.b32.xlu0 %v1301, 8
        %v2794 = vpop.permute.xlu0 %2793
        %2795 = vrot.lane.b32.xlu0 %v1304, 8
        %v2796 = vpop.permute.xlu0 %2795
        %2797 = vrot.lane.b32.xlu0 %v1309, 8
        %v2798 = vpop.permute.xlu0 %2797
        %2799 = vrot.lane.b32.xlu0 %v1312, 8
        %v2800 = vpop.permute.xlu0 %2799
        %2801 = vrot.lane.b32.xlu0 %v1317, 8
        %v2802 = vpop.permute.xlu0 %2801
        %2803 = vrot.lane.b32.xlu0 %v1320, 8
        %v2804 = vpop.permute.xlu0 %2803
        %2805 = vrot.lane.b32.xlu0 %v1325, 8
        %v2806 = vpop.permute.xlu0 %2805
        %2807 = vrot.lane.b32.xlu0 %v1328, 8
        %v2808 = vpop.permute.xlu0 %2807
        %2809 = vrot.lane.b32.xlu0 %v1333, 8
        %v2810 = vpop.permute.xlu0 %2809
        %2811 = vrot.lane.b32.xlu0 %v1336, 8
        %v2812 = vpop.permute.xlu0 %2811
        %2813 = vrot.lane.b32.xlu0 %v1341, 8
        %v2814 = vpop.permute.xlu0 %2813
        %2815 = vrot.lane.b32.xlu0 %v1344, 8
        %v2816 = vpop.permute.xlu0 %2815
        %2817 = vrot.lane.b32.xlu0 %v1349, 8
        %v2818 = vpop.permute.xlu0 %2817
        %2819 = vrot.lane.b32.xlu0 %v1352, 8
        %v2820 = vpop.permute.xlu0 %2819
        %vm2837 = vcmask 195648
        %2838 = vst.msk [vmem:[%s280] sm:$0xff] %vm2837, %v2790
        %2839 = vst.msk [vmem:[%s280 + $0x8] sm:$0xff] %vm2837, %v2792
        %2840 = vst.msk [vmem:[%s280 + $0x10] sm:$0xff] %vm2837, %v2794
        %2841 = vst.msk [vmem:[%s280 + $0x18] sm:$0xff] %vm2837, %v2796
        %2842 = vst.msk [vmem:[%s280 + $0x20] sm:$0xff] %vm2837, %v2798
        %2843 = vst.msk [vmem:[%s280 + $0x28] sm:$0xff] %vm2837, %v2800
        %2844 = vst.msk [vmem:[%s280 + $0x30] sm:$0xff] %vm2837, %v2802
        %2845 = vst.msk [vmem:[%s280 + $0x38] sm:$0xff] %vm2837, %v2804
        %2846 = vst.msk [vmem:[%s280 + $0x40] sm:$0xff] %vm2837, %v2806
        %2847 = vst.msk [vmem:[%s280 + $0x48] sm:$0xff] %vm2837, %v2808
        %2848 = vst.msk [vmem:[%s280 + $0x50] sm:$0xff] %vm2837, %v2810
        %2849 = vst.msk [vmem:[%s280 + $0x58] sm:$0xff] %vm2837, %v2812
        %2850 = vst.msk [vmem:[%s280 + $0x60] sm:$0xff] %vm2837, %v2814
        %2851 = vst.msk [vmem:[%s280 + $0x68] sm:$0xff] %vm2837, %v2816
        %2852 = vst.msk [vmem:[%s280 + $0x70] sm:$0xff] %vm2837, %v2818
        %2853 = vst.msk [vmem:[%s280 + $0x78] sm:$0xff] %vm2837, %v2820
        %vm2854 = vcmask 1047744
        %2855 = vst.msk [vmem:[%s280] sm:$0xff] %vm2854, 0.0
        %2856 = vst.msk [vmem:[%s280 + $0x8] sm:$0xff] %vm2854, 0.0
        %2857 = vst.msk [vmem:[%s280 + $0x10] sm:$0xff] %vm2854, 0.0
        %2858 = vst.msk [vmem:[%s280 + $0x18] sm:$0xff] %vm2854, 0.0
        %2859 = vst.msk [vmem:[%s280 + $0x20] sm:$0xff] %vm2854, 0.0
        %2860 = vst.msk [vmem:[%s280 + $0x28] sm:$0xff] %vm2854, 0.0
        %2861 = vst.msk [vmem:[%s280 + $0x30] sm:$0xff] %vm2854, 0.0
        %2862 = vst.msk [vmem:[%s280 + $0x38] sm:$0xff] %vm2854, 0.0
        %2863 = vst.msk [vmem:[%s280 + $0x40] sm:$0xff] %vm2854, 0.0
        %2864 = vst.msk [vmem:[%s280 + $0x48] sm:$0xff] %vm2854, 0.0
        %2865 = vst.msk [vmem:[%s280 + $0x50] sm:$0xff] %vm2854, 0.0
        %2866 = vst.msk [vmem:[%s280 + $0x58] sm:$0xff] %vm2854, 0.0
        %2867 = vst.msk [vmem:[%s280 + $0x60] sm:$0xff] %vm2854, 0.0
        %2868 = vst.msk [vmem:[%s280 + $0x68] sm:$0xff] %vm2854, 0.0
        %2869 = vst.msk [vmem:[%s280 + $0x70] sm:$0xff] %vm2854, 0.0
        %2870 = vst.msk [vmem:[%s280 + $0x78] sm:$0xff] %vm2854, 0.0
        %s2871 = smul.u32 16, %s22
        %p2872 = scmp.lt.s32.totalorder %s2871, 63
        %s2873 = scalar_select %p2872, %s2871, 63
        %s2874 = smul.addr %s2873, 8
        %s2875 = scalar_lea.vmem %s6, %s2874
        %s2876 = sand.u32 %s187, 1
        %s2877 = scalar_lea.sflag [#allocation3], %s2876
        %s2878 = sand.u32 %s187, 1
        %s2879 = smul.addr %s2878, 128
        %s2880 = scalar_lea.vmem [#allocation2], %s2879
        // Predicated region
        $region45: #{tpu_custom_call.1} parent=43 // pred_check
          %p2881 = pneg %p171
        $region46: #{tpu_custom_call.1} parent=43 // pred_check_branch
          %2883 = sbr.rel (%p2881) target = $region48
        $region47: #{tpu_custom_call.1} parent=43 // pred_region
          %s2884 = smul.u32 16, %s22
        $region48: #{tpu_custom_call.1} parent=43 // pred_fallthru
          _
        // Predicated region
        $region49: #{tpu_custom_call.1} parent=43 // pred_check
          %p2885 = pneg %p197
        $region50: #{tpu_custom_call.1} parent=43 // pred_check_branch
          %2887 = sbr.rel (%p2885) target = $region52
        $region51: #{tpu_custom_call.1} parent=43 // pred_region
          %s2888 = smul.u32 16, %s22
          %s2890 = ssub.s32 2048, 2048
          %2891 = vsyncadd %s2877, %s2890
          %s2892 = smul.addr %s2888, 128
          %s2893 = scalar_lea.hbm %s7, %s2892
          %s2894 = sshll.u32 %s2880, 4
          %s2895 = int_to_ptr.vmem [resolvable:$true] %s2894
          %2900 = dma.vmem_to_hbm [thread:$0]  %s2895, 2048, %s2893, %s2877, 128, 128, 8
        $region52: #{tpu_custom_call.1} parent=43 // pred_fallthru
          _
      $region44: #{tpu_custom_call.1} parent=5 // pred_fallthru
        _
      %p2901 = scmp.le.s32.totalorder 2, %s17
      // Predicated region
      $region53: #{tpu_custom_call.1} parent=5 // pred_check
        %p2902 = pneg %p2901
      $region54: #{tpu_custom_call.1} parent=5 // pred_check_branch
        %2904 = sbr.rel (%p2902) target = $region56
      $region55: #{tpu_custom_call.1} parent=5 // pred_region
        %s2905 = ssub.s32 %s17, 2
        // Predicated region
        $region57: #{tpu_custom_call.1} parent=55 // pred_check
          %p2906 = pneg %p177
        $region58: #{tpu_custom_call.1} parent=55 // pred_check_branch
          %2908 = sbr.rel (%p2906) target = $region60
        $region59: #{tpu_custom_call.1} parent=55 // pred_region
          %s2909 = smul.u32 16, %s23
          %p2910 = scmp.lt.s32.totalorder %s2909, 63
          %s2911 = scalar_select %p2910, %s2909, 63
          %s2912 = smul.addr %s2911, 8
          %s2913 = scalar_lea.vmem %s6, %s2912
        $region60: #{tpu_custom_call.1} parent=55 // pred_fallthru
          _
        // Predicated region
        $region61: #{tpu_custom_call.1} parent=55 // pred_check
          %p2914 = pneg %p203
        $region62: #{tpu_custom_call.1} parent=55 // pred_check_branch
          %2916 = sbr.rel (%p2914) target = $region64
        $region63: #{tpu_custom_call.1} parent=55 // pred_region
          %s2917 = sand.u32 %s188, 1
          %s2918 = scalar_lea.sflag [#allocation3], %s2917
          %s2919 = sand.u32 %s188, 1
          %s2920 = smul.addr %s2919, 128
          %s2921 = scalar_lea.vmem [#allocation2], %s2920
          %2922 = dma.done %s2918, 2048
        $region64: #{tpu_custom_call.1} parent=55 // pred_fallthru
          _
      $region56: #{tpu_custom_call.1} parent=5 // pred_fallthru
        _
    $region6: #{tpu_custom_call.1} parent=1 // loop_footer
      %s21 = sadd.s32 1, %s17
    $region7: #{tpu_custom_call.1} parent=1 // loop_footer_branch
      %16 = sbr.rel target = $region3
    $region8: #{tpu_custom_call.1} parent=1 // loop_exit
      _
    %2923 = vsyncpa [#allocation3], 1
    %s2924 = scalar_lea.sflag [#allocation3], 1
    %2925 = vsyncpa %s2924, 1

</llo_original>
